<compile_context>
chip_gen: v6e
topology: v6e:2x2x1
jax: 0.10.0
libtpu: 0.0.40
codegen_flags: <defaults>
</compile_context>

<pallas_src>
import functools

import jax
import jax.numpy as jnp
from jax.experimental import pallas as pl
from jax.experimental.pallas import tpu as pltpu

EPS = 1e-5  # nn.InstanceNorm3d default eps

# Scoped-VMEM sizing: 32 MiB is the default scoped limit on v6e/v7x and well under every
# generation's physical VMEM (v7x: 64 MiB).  We set it explicitly (v5e defaults to 16 MiB)
# and budget blocks against ~75% of it, counting double-buffering and sublane padding.
VMEM_LIMIT_BYTES = 32 * 1024 * 1024
VMEM_BUDGET_BYTES = 24 * 1024 * 1024
MAX_TILE_LANES = 65536  # ~2 MiB per (8, tS) f32 buffer; per-step overhead (~0.35us) amortized


def _pad8(n):
    return ((n + 7) // 8) * 8


def _pad128(n):
    return ((n + 127) // 128) * 128


# ------------------------------ in-kernel helpers -------------------------------

def _vpu_mix(w_r, xr, w_i, xi):
    """(Cout, S) = w_r @ xr + w_i @ xi as an unrolled broadcast-FMA on the VPU.

    w_r: (Cout, Cin), xr: (Cin, S); likewise for the imaginary half.  Cin/Cout are tiny
    (~4-8), so a padded MXU matmul would use <1% of the systolic array; elementwise
    broadcast multiply-accumulate keeps the channel mix on the VPU in f32.
    """
    acc = w_r[:, 0:1] * xr[0:1, :]
    for k in range(1, xr.shape[0]):
        acc = acc + w_r[:, k:k + 1] * xr[k:k + 1, :]
    for k in range(xi.shape[0]):
        acc = acc + w_i[:, k:k + 1] * xi[k:k + 1, :]
    return acc


# ------------------------------- Pallas kernels ----------------------------------

def _ffc_fused_kernel(xr_ref, xi_ref, wr_ref, wi_ref, gamma_ref, beta_ref, yr_ref, yi_ref):
    """Fused conv1x1 + InstanceNorm3d(affine) + ReLU for one batch, whole slab in VMEM.

    Blocks: xr/xi (1, C, S); wr/wi (2C, C); gamma/beta (2C, 1); outputs (1, C, S).
    Stats are computed per output channel with a centered two-pass over the VMEM-resident
    conv output (no E[y^2]-E[y]^2 cancellation).  Real/imag output halves are independent
    channel groups, so each half is produced and written separately.
    """
    C = xr_ref.shape[1]
    xr = xr_ref[0]                       # (C, S)
    xi = xi_ref[0]
    wr = wr_ref[...]                     # (2C, C)
    wi = wi_ref[...]
    gamma = gamma_ref[...]               # (2C, 1)
    beta = beta_ref[...]
    inv_s = 1.0 / xr.shape[-1]

    def half(w_r, w_i, g, b, out_ref):
        y = _vpu_mix(w_r, xr, w_i, xi)                              # (C, S) f32
        mean = jnp.sum(y, axis=-1, keepdims=True) * inv_s           # (C, 1)
        yc = y - mean
        var = jnp.sum(yc * yc, axis=-1, keepdims=True) * inv_s      # biased var
        scale = g * jax.lax.rsqrt(var + EPS)                        # EUP rsqrt
        out_ref[0] = jnp.maximum(yc * scale + b, 0.0)

    half(wr[:C], wi[:C], gamma[:C], beta[:C], yr_ref)
    half(wr[C:], wi[C:], gamma[C:], beta[C:], yi_ref)


def _stats_kernel(xr_ref, xi_ref, csr_ref, csi_ref, grr_ref, gri_ref, gii_ref):
    """Pass 1 (tiled fallback): accumulate per-channel column sums and the Gram blocks
    of [xr; xi] over the S axis.  Resident (b, 0, 0) accumulator outputs -- the S grid
    axis MUST stay 'arbitrary' (sequential) or the accumulation silently corrupts."""
    @pl.when(pl.program_id(1) == 0)
    def _():
        csr_ref[...] = jnp.zeros_like(csr_ref)
        csi_ref[...] = jnp.zeros_like(csi_ref)
        grr_ref[...] = jnp.zeros_like(grr_ref)
        gri_ref[...] = jnp.zeros_like(gri_ref)
        gii_ref[...] = jnp.zeros_like(gii_ref)

    xr = xr_ref[0]                       # (C, tS)
    xi = xi_ref[0]
    csr_ref[0] += jnp.sum(xr, axis=-1, keepdims=True)
    csi_ref[0] += jnp.sum(xi, axis=-1, keepdims=True)

    def dot_t(a, b):  # a @ b^T, contraction over the big lane axis -> MXU-friendly
        return jax.lax.dot_general(a, b, (((1,), (1,)), ((), ())),
                                   preferred_element_type=jnp.float32)

    grr_ref[0] += dot_t(xr, xr)
    gri_ref[0] += dot_t(xr, xi)
    gii_ref[0] += dot_t(xi, xi)


def _apply_kernel(xr_ref, xi_ref, wbr_ref, wbi_ref, shift_ref, yr_ref, yi_ref):
    """Pass 2 (tiled fallback): out = relu(W_b @ [xr; xi] + shift), norm scale folded
    into the per-batch weight W_b, shift = beta - mean*scale.  Single HBM write."""
    C = xr_ref.shape[1]
    xr = xr_ref[0]
    xi = xi_ref[0]
    wbr = wbr_ref[0]                     # (2C, C)
    wbi = wbi_ref[0]
    shift = shift_ref[0]                 # (2C, 1)
    yr = _vpu_mix(wbr[:C], xr, wbi[:C], xi) + shift[:C]
    yi = _vpu_mix(wbr[C:], xr, wbi[C:], xi) + shift[C:]
    yr_ref[0] = jnp.maximum(yr, 0.0)
    yi_ref[0] = jnp.maximum(yi, 0.0)


# ------------------------------- pallas_call wrappers -----------------------------

def _fused_vmem_bytes(C, S):
    """Rough live-VMEM bytes for the fused path: 4 I/O blocks x 2 buffers + intermediates,
    counting sublane padding to 8 and lane padding to 128."""
    sp = _pad128(S)
    io_block = _pad8(C) * sp * 4
    return (4 * 2) * io_block + 4 * io_block


def _choose_tile(S, C):
    """Largest lane-dense (multiple-of-128) divisor of S that fits the VMEM budget."""
    bytes_per_lane = 12 * _pad8(C) * 4   # 4 I/O blocks x 2 buffers + ~4 intermediates
    cap = min(MAX_TILE_LANES, (VMEM_BUDGET_BYTES // bytes_per_lane) // 128 * 128)
    if cap < 128:
        return None
    t = min(cap, (S // 128) * 128)
    while t >= 128:
        if S % t == 0:
            return t
        t -= 128
    return None


def pallas_ffc_fused(xr, xi, wr, wi, gamma, beta):
    """xr/xi: (B, C, S) f32; wr/wi: (2C, C); gamma/beta: (2C, 1) -> (yr, yi) (B, C, S)."""
    B, C, S = xr.shape
    Cr = 2 * C
    cost = pl.CostEstimate(
        flops=int(B * S * Cr * (4 * C + 8)),
        transcendentals=int(B * Cr),
        bytes_accessed=int(4 * (4 * B * C * S + 4 * Cr * C + 2 * Cr)))
    io_spec = pl.BlockSpec((1, C, S), lambda b: (b, 0, 0))
    w_spec = pl.BlockSpec((Cr, C), lambda b: (0, 0))
    v_spec = pl.BlockSpec((Cr, 1), lambda b: (0, 0))
    return pl.pallas_call(
        _ffc_fused_kernel,
        out_shape=(jax.ShapeDtypeStruct((B, C, S), jnp.float32),
                   jax.ShapeDtypeStruct((B, C, S), jnp.float32)),
        grid=(B,),
        in_specs=[io_spec, io_spec, w_spec, w_spec, v_spec, v_spec],
        out_specs=(io_spec, io_spec),
        compiler_params=pltpu.CompilerParams(
            dimension_semantics=("parallel",),
            vmem_limit_bytes=VMEM_LIMIT_BYTES),
        cost_estimate=cost,
    )(xr, xi, wr, wi, gamma, beta)


def pallas_stats(xr, xi, tS):
    """Column sums + Gram blocks of [xr; xi] per batch (resident accumulators)."""
    B, C, S = xr.shape
    cost = pl.CostEstimate(
        flops=int(B * S * (6 * C * C + 4 * C)),
        transcendentals=0,
        bytes_accessed=int(4 * (2 * B * C * S + B * (2 * C + 3 * C * C))))
    in_spec = pl.BlockSpec((1, C, tS), lambda b, s: (b, 0, s))
    cs_spec = pl.BlockSpec((1, C, 1), lambda b, s: (b, 0, 0))
    g_spec = pl.BlockSpec((1, C, C), lambda b, s: (b, 0, 0))
    return pl.pallas_call(
        _stats_kernel,
        out_shape=(jax.ShapeDtypeStruct((B, C, 1), jnp.float32),
                   jax.ShapeDtypeStruct((B, C, 1), jnp.float32),
                   jax.ShapeDtypeStruct((B, C, C), jnp.float32),
                   jax.ShapeDtypeStruct((B, C, C), jnp.float32),
                   jax.ShapeDtypeStruct((B, C, C), jnp.float32)),
        grid=(B, S // tS),
        in_specs=[in_spec, in_spec],
        out_specs=(cs_spec, cs_spec, g_spec, g_spec, g_spec),
        # S axis must stay 'arbitrary' (sequential): resident accumulator outputs.
        compiler_params=pltpu.CompilerParams(
            dimension_semantics=("parallel", "arbitrary"),
            vmem_limit_bytes=VMEM_LIMIT_BYTES),
        cost_estimate=cost,
    )(xr, xi)


def pallas_apply(xr, xi, wbr, wbi, shift, tS):
    """out = relu(W_b @ [xr; xi] + shift), emitted as separate real/imag halves."""
    B, C, S = xr.shape
    Cr = 2 * C
    cost = pl.CostEstimate(
        flops=int(B * S * Cr * (4 * C + 2)),
        transcendentals=0,
        bytes_accessed=int(4 * (4 * B * C * S + B * Cr * (2 * C + 1))))
    in_spec = pl.BlockSpec((1, C, tS), lambda b, s: (b, 0, s))
    wb_spec = pl.BlockSpec((1, Cr, C), lambda b, s: (b, 0, 0))
    sh_spec = pl.BlockSpec((1, Cr, 1), lambda b, s: (b, 0, 0))
    return pl.pallas_call(
        _apply_kernel,
        out_shape=(jax.ShapeDtypeStruct((B, C, S), jnp.float32),
                   jax.ShapeDtypeStruct((B, C, S), jnp.float32)),
        grid=(B, S // tS),
        in_specs=[in_spec, in_spec, wb_spec, wb_spec, sh_spec],
        out_specs=(in_spec, in_spec),
        compiler_params=pltpu.CompilerParams(
            dimension_semantics=("parallel", "parallel"),
            vmem_limit_bytes=VMEM_LIMIT_BYTES),
        cost_estimate=cost,
    )(xr, xi, wbr, wbi, shift)


def _xla_conv_norm_relu(xr, xi, w, gamma, beta):
    """Plain-XLA fallback (only when no lane-dense tiling of S exists and the slab is
    too big for VMEM)."""
    C = xr.shape[1]
    u = jnp.concatenate([xr, xi], axis=1)
    y = jnp.einsum('oc,bcs->bos', w, u)
    mean = jnp.mean(y, axis=-1, keepdims=True)
    var = jnp.mean((y - mean) ** 2, axis=-1, keepdims=True)
    y = (y - mean) * jax.lax.rsqrt(var + EPS) * gamma[None, :, None] + beta[None, :, None]
    y = jnp.maximum(y, 0.0)
    return y[:, :C], y[:, C:]


# ------------------------- per-layer forward (FFC3d in ResFFC3d) ------------------

def ffc3d_layer(x, w, gamma, beta, *, force_tiled=False):
    """x: complex64 (B, C, D, H, W); w: (2C, 2C) f32 conv weight; gamma/beta: (2C,)."""
    B, C, D, H, W = x.shape
    Cr, S = 2 * C, D * H * W

    X = jnp.fft.fftn(x, axes=(-3, -2, -1), norm="ortho")
    X = jnp.fft.fftshift(X, axes=(-3, -2, -1))
    # Real / imag planes go straight into the kernels -- no (B, 2C, S) concat copy.
    xr = X.real.reshape(B, C, S).astype(jnp.float32)
    xi = X.imag.reshape(B, C, S).astype(jnp.float32)
    wr, wi = w[:, :C], w[:, C:]

    if (not force_tiled) and _fused_vmem_bytes(C, S) <= VMEM_BUDGET_BYTES:
        # Primary: single fused pass, 1 read + 1 write of the activation.
        yr, yi = pallas_ffc_fused(xr, xi, wr, wi,
                                  gamma.reshape(Cr, 1), beta.reshape(Cr, 1))
    else:
        tS = _choose_tile(S, C)
        if tS is None:
            # TODO(synk): no multiple-of-128 divisor of S and slab exceeds VMEM budget;
            # fall back to XLA for this layer rather than emitting an un-budgeted block.
            yr, yi = _xla_conv_norm_relu(xr, xi, w, gamma, beta)
        else:
            # Pass 1: column sums + Gram blocks (conv output never materialized in HBM).
            csr, csi, grr, gri, gii = pallas_stats(xr, xi, tS)
            mean = (jnp.einsum('oc,bcx->bo', wr, csr)
                    + jnp.einsum('oc,bcx->bo', wi, csi)) / S                 # (B, Cr)
            # NOTE: E[y^2] - mean^2 from the Gram is cancellation-prone for extreme
            # dynamic range; the fused path above uses centered stats instead.
            sumsq = (jnp.einsum('oj,bjk,ok->bo', wr, grr, wr)
                     + 2.0 * jnp.einsum('oj,bjk,ok->bo', wr, gri, wi)
                     + jnp.einsum('oj,bjk,ok->bo', wi, gii, wi)) / S
            var = jnp.maximum(sumsq - mean * mean, 0.0)                      # biased var
            scale = gamma[None, :] * jax.lax.rsqrt(var + EPS)                # (B, Cr)
            shift = (beta[None, :] - mean * scale)[:, :, None]               # (B, Cr, 1)
            wb = scale[:, :, None] * w[None, :, :]                           # (B, Cr, Cr)
            # Pass 2: fused conv + norm + ReLU apply, single HBM write.
            yr, yi = pallas_apply(xr, xi, wb[:, :, :C], wb[:, :, C:], shift, tS)

    Z = jax.lax.complex(yr.reshape(B, C, D, H, W), yi.reshape(B, C, D, H, W))
    Z = jnp.fft.ifftshift(Z, axes=(-3, -2, -1))
    z = jnp.fft.ifftn(Z, axes=(-3, -2, -1), norm="ortho")
    return x + z                                                             # residual


@functools.partial(jax.jit, static_argnames=("force_tiled",))
def resblock_ffc3d_forward(x, params, force_tiled=False):
    for (w, gamma, beta) in params:
        x = ffc3d_layer(x, w, gamma, beta, force_tiled=force_tiled)
    return x


# ------------------------- pure-JAX reference for verification --------------------

def reference_forward(x, params):
    C = x.shape[1]
    for (w, gamma, beta) in params:
        X = jnp.fft.fftn(x, axes=(-3, -2, -1), norm="ortho")
        X = jnp.fft.fftshift(X, axes=(-3, -2, -1))
        u = jnp.concatenate([X.real, X.imag], axis=1)
        v = jnp.einsum("oc,bcdhw->bodhw", w, u, precision=jax.lax.Precision.HIGHEST)
        mean = jnp.mean(v, axis=(2, 3, 4), keepdims=True)
        var = jnp.mean((v - mean) ** 2, axis=(2, 3, 4), keepdims=True)
        vn = (v - mean) * jax.lax.rsqrt(var + EPS)
        vn = vn * gamma.reshape(1, -1, 1, 1, 1) + beta.reshape(1, -1, 1, 1, 1)
        vn = jnp.maximum(vn, 0.0)
        Z = jax.lax.complex(vn[:, :C], vn[:, C:])
        Z = jnp.fft.ifftshift(Z, axes=(-3, -2, -1))
        z = jnp.fft.ifftn(Z, axes=(-3, -2, -1), norm="ortho")
        x = x + z
    return x


if __name__ == "__main__":
    key = jax.random.PRNGKey(0)
    B, plane, D, H, W = 2, 4, 16, 16, 16
    n_layers = 2
    Cr = 2 * plane

    kxr, kxi, *pkeys = jax.random.split(key, 2 + 3 * n_layers)
    x = jax.lax.complex(
        jax.random.normal(kxr, (B, plane, D, H, W), jnp.float32),
        jax.random.normal(kxi, (B, plane, D, H, W), jnp.float32))

    # per-layer params: Conv3d(2*plane, 2*plane, 1, bias=False) + InstanceNorm3d affine
    bound = 1.0 / (Cr ** 0.5)
    params = []
    for l in range(n_layers):
        kw, kg, kb = pkeys[3 * l], pkeys[3 * l + 1], pkeys[3 * l + 2]
        w = jax.random.uniform(kw, (Cr, Cr), jnp.float32, -bound, bound)
        gamma = 1.0 + 0.1 * jax.random.normal(kg, (Cr,), jnp.float32)
        beta = 0.1 * jax.random.normal(kb, (Cr,), jnp.float32)
        params.append((w, gamma, beta))

    ref = reference_forward(x, params)

    # Primary (fused single-pass) path.
    out = jax.block_until_ready(resblock_ffc3d_forward(x, params))
    assert out.shape == (B, plane, D, H, W), out.shape
    assert out.dtype == jnp.complex64, out.dtype
    err_fused = float(jnp.max(jnp.abs(out - ref)))
    assert err_fused < 1e-3, f"fused path mismatch vs reference: {err_fused}"

    # Tiled two-pass fallback path (forced, to validate the large-volume code path).
    out_t = jax.block_until_ready(resblock_ffc3d_forward(x, params, force_tiled=True))
    err_tiled = float(jnp.max(jnp.abs(out_t - ref)))
    assert err_tiled < 1e-3, f"tiled path mismatch vs reference: {err_tiled}"

    print("KERNEL_OK")
</pallas_src>

<mosaic_0001>
module attributes {stable_mosaic.version = 11 : i64} {
  func.func @_ffc_fused_kernel(%arg0: i32, %arg1: memref<1x4x4096xf32, #tpu.memory_space<vmem>>, %arg2: memref<1x4x4096xf32, #tpu.memory_space<vmem>>, %arg3: memref<8x4xf32, #tpu.memory_space<vmem>>, %arg4: memref<8x4xf32, #tpu.memory_space<vmem>>, %arg5: memref<8x1xf32, #tpu.memory_space<vmem>>, %arg6: memref<8x1xf32, #tpu.memory_space<vmem>>, %arg7: memref<1x4x4096xf32, #tpu.memory_space<vmem>>, %arg8: memref<1x4x4096xf32, #tpu.memory_space<vmem>>) attributes {dimension_semantics = [#tpu.dimension_semantics<parallel>], iteration_bounds = array<i64: 2>, scalar_prefetch = 0 : i64, scratch_operands = 0 : i64, tpu.core_type = #tpu.core_type<tc>, window_params = [{transform_indices = @transform_0, window_bounds = array<i64: 1, 4, 4096>}, {transform_indices = @transform_1, window_bounds = array<i64: 1, 4, 4096>}, {pipeline_mode = #tpu.pipeline_mode<synchronous>, transform_indices = @transform_2, window_bounds = array<i64: 8, 4>}, {pipeline_mode = #tpu.pipeline_mode<synchronous>, transform_indices = @transform_3, window_bounds = array<i64: 8, 4>}, {pipeline_mode = #tpu.pipeline_mode<synchronous>, transform_indices = @transform_4, window_bounds = array<i64: 8, 1>}, {pipeline_mode = #tpu.pipeline_mode<synchronous>, transform_indices = @transform_5, window_bounds = array<i64: 8, 1>}, {transform_indices = @transform_6, window_bounds = array<i64: 1, 4, 4096>}, {transform_indices = @transform_7, window_bounds = array<i64: 1, 4, 4096>}]} {
    %c0 = arith.constant 0 : index
    %c0_0 = arith.constant 0 : index
    %c0_1 = arith.constant 0 : index
    %0 = vector.load %arg1[%c0, %c0_0, %c0_1] : memref<1x4x4096xf32, #tpu.memory_space<vmem>>, vector<1x4x4096xf32>
    %1 = vector.shape_cast %0 : vector<1x4x4096xf32> to vector<4x4096xf32>
    %c0_2 = arith.constant 0 : index
    %c0_3 = arith.constant 0 : index
    %c0_4 = arith.constant 0 : index
    %2 = vector.load %arg2[%c0_2, %c0_3, %c0_4] : memref<1x4x4096xf32, #tpu.memory_space<vmem>>, vector<1x4x4096xf32>
    %3 = vector.shape_cast %2 : vector<1x4x4096xf32> to vector<4x4096xf32>
    %c0_5 = arith.constant 0 : index
    %c0_6 = arith.constant 0 : index
    %4 = vector.load %arg3[%c0_5, %c0_6] : memref<8x4xf32, #tpu.memory_space<vmem>>, vector<8x4xf32>
    %c0_7 = arith.constant 0 : index
    %c0_8 = arith.constant 0 : index
    %5 = vector.load %arg4[%c0_7, %c0_8] : memref<8x4xf32, #tpu.memory_space<vmem>>, vector<8x4xf32>
    %c0_9 = arith.constant 0 : index
    %c0_10 = arith.constant 0 : index
    %6 = vector.load %arg5[%c0_9, %c0_10] : memref<8x1xf32, #tpu.memory_space<vmem>>, vector<8x1xf32>
    %c0_11 = arith.constant 0 : index
    %c0_12 = arith.constant 0 : index
    %7 = vector.load %arg6[%c0_11, %c0_12] : memref<8x1xf32, #tpu.memory_space<vmem>>, vector<8x1xf32>
    %8 = vector.extract_strided_slice %4 {offsets = [0, 0], sizes = [4, 4], strides = [1, 1]} : vector<8x4xf32> to vector<4x4xf32>
    %9 = vector.extract_strided_slice %5 {offsets = [0, 0], sizes = [4, 4], strides = [1, 1]} : vector<8x4xf32> to vector<4x4xf32>
    %10 = vector.extract_strided_slice %6 {offsets = [0, 0], sizes = [4, 1], strides = [1, 1]} : vector<8x1xf32> to vector<4x1xf32>
    %11 = vector.extract_strided_slice %7 {offsets = [0, 0], sizes = [4, 1], strides = [1, 1]} : vector<8x1xf32> to vector<4x1xf32>
    %12 = vector.extract_strided_slice %8 {offsets = [0, 0], sizes = [4, 1], strides = [1, 1]} : vector<4x4xf32> to vector<4x1xf32>
    %13 = vector.extract_strided_slice %1 {offsets = [0, 0], sizes = [1, 4096], strides = [1, 1]} : vector<4x4096xf32> to vector<1x4096xf32>
    %14 = vector.broadcast %12 : vector<4x1xf32> to vector<4x4096xf32>
    %15 = vector.broadcast %13 : vector<1x4096xf32> to vector<4x4096xf32>
    %16 = arith.mulf %14, %15 : vector<4x4096xf32>
    %17 = vector.extract_strided_slice %8 {offsets = [0, 1], sizes = [4, 1], strides = [1, 1]} : vector<4x4xf32> to vector<4x1xf32>
    %18 = vector.extract_strided_slice %1 {offsets = [1, 0], sizes = [1, 4096], strides = [1, 1]} : vector<4x4096xf32> to vector<1x4096xf32>
    %19 = vector.broadcast %17 : vector<4x1xf32> to vector<4x4096xf32>
    %20 = vector.broadcast %18 : vector<1x4096xf32> to vector<4x4096xf32>
    %21 = arith.mulf %19, %20 : vector<4x4096xf32>
    %22 = arith.addf %16, %21 : vector<4x4096xf32>
    %23 = vector.extract_strided_slice %8 {offsets = [0, 2], sizes = [4, 1], strides = [1, 1]} : vector<4x4xf32> to vector<4x1xf32>
    %24 = vector.extract_strided_slice %1 {offsets = [2, 0], sizes = [1, 4096], strides = [1, 1]} : vector<4x4096xf32> to vector<1x4096xf32>
    %25 = vector.broadcast %23 : vector<4x1xf32> to vector<4x4096xf32>
    %26 = vector.broadcast %24 : vector<1x4096xf32> to vector<4x4096xf32>
    %27 = arith.mulf %25, %26 : vector<4x4096xf32>
    %28 = arith.addf %22, %27 : vector<4x4096xf32>
    %29 = vector.extract_strided_slice %8 {offsets = [0, 3], sizes = [4, 1], strides = [1, 1]} : vector<4x4xf32> to vector<4x1xf32>
    %30 = vector.extract_strided_slice %1 {offsets = [3, 0], sizes = [1, 4096], strides = [1, 1]} : vector<4x4096xf32> to vector<1x4096xf32>
    %31 = vector.broadcast %29 : vector<4x1xf32> to vector<4x4096xf32>
    %32 = vector.broadcast %30 : vector<1x4096xf32> to vector<4x4096xf32>
    %33 = arith.mulf %31, %32 : vector<4x4096xf32>
    %34 = arith.addf %28, %33 : vector<4x4096xf32>
    %35 = vector.extract_strided_slice %9 {offsets = [0, 0], sizes = [4, 1], strides = [1, 1]} : vector<4x4xf32> to vector<4x1xf32>
    %36 = vector.extract_strided_slice %3 {offsets = [0, 0], sizes = [1, 4096], strides = [1, 1]} : vector<4x4096xf32> to vector<1x4096xf32>
    %37 = vector.broadcast %35 : vector<4x1xf32> to vector<4x4096xf32>
    %38 = vector.broadcast %36 : vector<1x4096xf32> to vector<4x4096xf32>
    %39 = arith.mulf %37, %38 : vector<4x4096xf32>
    %40 = arith.addf %34, %39 : vector<4x4096xf32>
    %41 = vector.extract_strided_slice %9 {offsets = [0, 1], sizes = [4, 1], strides = [1, 1]} : vector<4x4xf32> to vector<4x1xf32>
    %42 = vector.extract_strided_slice %3 {offsets = [1, 0], sizes = [1, 4096], strides = [1, 1]} : vector<4x4096xf32> to vector<1x4096xf32>
    %43 = vector.broadcast %41 : vector<4x1xf32> to vector<4x4096xf32>
    %44 = vector.broadcast %42 : vector<1x4096xf32> to vector<4x4096xf32>
    %45 = arith.mulf %43, %44 : vector<4x4096xf32>
    %46 = arith.addf %40, %45 : vector<4x4096xf32>
    %47 = vector.extract_strided_slice %9 {offsets = [0, 2], sizes = [4, 1], strides = [1, 1]} : vector<4x4xf32> to vector<4x1xf32>
    %48 = vector.extract_strided_slice %3 {offsets = [2, 0], sizes = [1, 4096], strides = [1, 1]} : vector<4x4096xf32> to vector<1x4096xf32>
    %49 = vector.broadcast %47 : vector<4x1xf32> to vector<4x4096xf32>
    %50 = vector.broadcast %48 : vector<1x4096xf32> to vector<4x4096xf32>
    %51 = arith.mulf %49, %50 : vector<4x4096xf32>
    %52 = arith.addf %46, %51 : vector<4x4096xf32>
    %53 = vector.extract_strided_slice %9 {offsets = [0, 3], sizes = [4, 1], strides = [1, 1]} : vector<4x4xf32> to vector<4x1xf32>
    %54 = vector.extract_strided_slice %3 {offsets = [3, 0], sizes = [1, 4096], strides = [1, 1]} : vector<4x4096xf32> to vector<1x4096xf32>
    %55 = vector.broadcast %53 : vector<4x1xf32> to vector<4x4096xf32>
    %56 = vector.broadcast %54 : vector<1x4096xf32> to vector<4x4096xf32>
    %57 = arith.mulf %55, %56 : vector<4x4096xf32>
    %58 = arith.addf %52, %57 : vector<4x4096xf32>
    %cst = arith.constant dense<0.000000e+00> : vector<4xf32>
    %59 = vector.multi_reduction <add>, %58, %cst [1] : vector<4x4096xf32> to vector<4xf32>
    %60 = vector.shape_cast %59 : vector<4xf32> to vector<4x1xf32>
    %cst_13 = arith.constant 2.44140625E-4 : f32
    %61 = vector.broadcast %cst_13 : f32 to vector<4x1xf32>
    %62 = arith.mulf %60, %61 : vector<4x1xf32>
    %63 = vector.broadcast %62 : vector<4x1xf32> to vector<4x4096xf32>
    %64 = arith.subf %58, %63 : vector<4x4096xf32>
    %65 = arith.mulf %64, %64 : vector<4x4096xf32>
    %cst_14 = arith.constant dense<0.000000e+00> : vector<4xf32>
    %66 = vector.multi_reduction <add>, %65, %cst_14 [1] : vector<4x4096xf32> to vector<4xf32>
    %67 = vector.shape_cast %66 : vector<4xf32> to vector<4x1xf32>
    %cst_15 = arith.constant 2.44140625E-4 : f32
    %68 = vector.broadcast %cst_15 : f32 to vector<4x1xf32>
    %69 = arith.mulf %67, %68 : vector<4x1xf32>
    %cst_16 = arith.constant 9.99999974E-6 : f32
    %70 = vector.broadcast %cst_16 : f32 to vector<4x1xf32>
    %71 = arith.addf %69, %70 : vector<4x1xf32>
    %72 = math.rsqrt %71 : vector<4x1xf32>
    %73 = arith.mulf %10, %72 : vector<4x1xf32>
    %74 = vector.broadcast %73 : vector<4x1xf32> to vector<4x4096xf32>
    %75 = arith.mulf %64, %74 : vector<4x4096xf32>
    %76 = vector.broadcast %11 : vector<4x1xf32> to vector<4x4096xf32>
    %77 = arith.addf %75, %76 : vector<4x4096xf32>
    %cst_17 = arith.constant 0.000000e+00 : f32
    %78 = vector.broadcast %cst_17 : f32 to vector<4x4096xf32>
    %79 = arith.maximumf %77, %78 : vector<4x4096xf32>
    %c0_18 = arith.constant 0 : index
    %c0_19 = arith.constant 0 : index
    %c0_20 = arith.constant 0 : index
    %80 = vector.load %arg7[%c0_18, %c0_19, %c0_20] : memref<1x4x4096xf32, #tpu.memory_space<vmem>>, vector<1x4x4096xf32>
    %81 = vector.shape_cast %80 : vector<1x4x4096xf32> to vector<4x4096xf32>
    %82 = vector.shape_cast %79 : vector<4x4096xf32> to vector<1x4x4096xf32>
    tpu.vector_store %arg7[%c0_18, %c0_19, %c0_20], %82 {strides = array<i32>} : memref<1x4x4096xf32, #tpu.memory_space<vmem>>, vector<1x4x4096xf32>,
    %83 = vector.extract_strided_slice %4 {offsets = [4, 0], sizes = [4, 4], strides = [1, 1]} : vector<8x4xf32> to vector<4x4xf32>
    %84 = vector.extract_strided_slice %5 {offsets = [4, 0], sizes = [4, 4], strides = [1, 1]} : vector<8x4xf32> to vector<4x4xf32>
    %85 = vector.extract_strided_slice %6 {offsets = [4, 0], sizes = [4, 1], strides = [1, 1]} : vector<8x1xf32> to vector<4x1xf32>
    %86 = vector.extract_strided_slice %7 {offsets = [4, 0], sizes = [4, 1], strides = [1, 1]} : vector<8x1xf32> to vector<4x1xf32>
    %87 = vector.extract_strided_slice %83 {offsets = [0, 0], sizes = [4, 1], strides = [1, 1]} : vector<4x4xf32> to vector<4x1xf32>
    %88 = vector.extract_strided_slice %1 {offsets = [0, 0], sizes = [1, 4096], strides = [1, 1]} : vector<4x4096xf32> to vector<1x4096xf32>
    %89 = vector.broadcast %87 : vector<4x1xf32> to vector<4x4096xf32>
    %90 = vector.broadcast %88 : vector<1x4096xf32> to vector<4x4096xf32>
    %91 = arith.mulf %89, %90 : vector<4x4096xf32>
    %92 = vector.extract_strided_slice %83 {offsets = [0, 1], sizes = [4, 1], strides = [1, 1]} : vector<4x4xf32> to vector<4x1xf32>
    %93 = vector.extract_strided_slice %1 {offsets = [1, 0], sizes = [1, 4096], strides = [1, 1]} : vector<4x4096xf32> to vector<1x4096xf32>
    %94 = vector.broadcast %92 : vector<4x1xf32> to vector<4x4096xf32>
    %95 = vector.broadcast %93 : vector<1x4096xf32> to vector<4x4096xf32>
    %96 = arith.mulf %94, %95 : vector<4x4096xf32>
    %97 = arith.addf %91, %96 : vector<4x4096xf32>
    %98 = vector.extract_strided_slice %83 {offsets = [0, 2], sizes = [4, 1], strides = [1, 1]} : vector<4x4xf32> to vector<4x1xf32>
    %99 = vector.extract_strided_slice %1 {offsets = [2, 0], sizes = [1, 4096], strides = [1, 1]} : vector<4x4096xf32> to vector<1x4096xf32>
    %100 = vector.broadcast %98 : vector<4x1xf32> to vector<4x4096xf32>
    %101 = vector.broadcast %99 : vector<1x4096xf32> to vector<4x4096xf32>
    %102 = arith.mulf %100, %101 : vector<4x4096xf32>
    %103 = arith.addf %97, %102 : vector<4x4096xf32>
    %104 = vector.extract_strided_slice %83 {offsets = [0, 3], sizes = [4, 1], strides = [1, 1]} : vector<4x4xf32> to vector<4x1xf32>
    %105 = vector.extract_strided_slice %1 {offsets = [3, 0], sizes = [1, 4096], strides = [1, 1]} : vector<4x4096xf32> to vector<1x4096xf32>
    %106 = vector.broadcast %104 : vector<4x1xf32> to vector<4x4096xf32>
    %107 = vector.broadcast %105 : vector<1x4096xf32> to vector<4x4096xf32>
    %108 = arith.mulf %106, %107 : vector<4x4096xf32>
    %109 = arith.addf %103, %108 : vector<4x4096xf32>
    %110 = vector.extract_strided_slice %84 {offsets = [0, 0], sizes = [4, 1], strides = [1, 1]} : vector<4x4xf32> to vector<4x1xf32>
    %111 = vector.extract_strided_slice %3 {offsets = [0, 0], sizes = [1, 4096], strides = [1, 1]} : vector<4x4096xf32> to vector<1x4096xf32>
    %112 = vector.broadcast %110 : vector<4x1xf32> to vector<4x4096xf32>
    %113 = vector.broadcast %111 : vector<1x4096xf32> to vector<4x4096xf32>
    %114 = arith.mulf %112, %113 : vector<4x4096xf32>
    %115 = arith.addf %109, %114 : vector<4x4096xf32>
    %116 = vector.extract_strided_slice %84 {offsets = [0, 1], sizes = [4, 1], strides = [1, 1]} : vector<4x4xf32> to vector<4x1xf32>
    %117 = vector.extract_strided_slice %3 {offsets = [1, 0], sizes = [1, 4096], strides = [1, 1]} : vector<4x4096xf32> to vector<1x4096xf32>
    %118 = vector.broadcast %116 : vector<4x1xf32> to vector<4x4096xf32>
    %119 = vector.broadcast %117 : vector<1x4096xf32> to vector<4x4096xf32>
    %120 = arith.mulf %118, %119 : vector<4x4096xf32>
    %121 = arith.addf %115, %120 : vector<4x4096xf32>
    %122 = vector.extract_strided_slice %84 {offsets = [0, 2], sizes = [4, 1], strides = [1, 1]} : vector<4x4xf32> to vector<4x1xf32>
    %123 = vector.extract_strided_slice %3 {offsets = [2, 0], sizes = [1, 4096], strides = [1, 1]} : vector<4x4096xf32> to vector<1x4096xf32>
    %124 = vector.broadcast %122 : vector<4x1xf32> to vector<4x4096xf32>
    %125 = vector.broadcast %123 : vector<1x4096xf32> to vector<4x4096xf32>
    %126 = arith.mulf %124, %125 : vector<4x4096xf32>
    %127 = arith.addf %121, %126 : vector<4x4096xf32>
    %128 = vector.extract_strided_slice %84 {offsets = [0, 3], sizes = [4, 1], strides = [1, 1]} : vector<4x4xf32> to vector<4x1xf32>
    %129 = vector.extract_strided_slice %3 {offsets = [3, 0], sizes = [1, 4096], strides = [1, 1]} : vector<4x4096xf32> to vector<1x4096xf32>
    %130 = vector.broadcast %128 : vector<4x1xf32> to vector<4x4096xf32>
    %131 = vector.broadcast %129 : vector<1x4096xf32> to vector<4x4096xf32>
    %132 = arith.mulf %130, %131 : vector<4x4096xf32>
    %133 = arith.addf %127, %132 : vector<4x4096xf32>
    %cst_21 = arith.constant dense<0.000000e+00> : vector<4xf32>
    %134 = vector.multi_reduction <add>, %133, %cst_21 [1] : vector<4x4096xf32> to vector<4xf32>
    %135 = vector.shape_cast %134 : vector<4xf32> to vector<4x1xf32>
    %cst_22 = arith.constant 2.44140625E-4 : f32
    %136 = vector.broadcast %cst_22 : f32 to vector<4x1xf32>
    %137 = arith.mulf %135, %136 : vector<4x1xf32>
    %138 = vector.broadcast %137 : vector<4x1xf32> to vector<4x4096xf32>
    %139 = arith.subf %133, %138 : vector<4x4096xf32>
    %140 = arith.mulf %139, %139 : vector<4x4096xf32>
    %cst_23 = arith.constant dense<0.000000e+00> : vector<4xf32>
    %141 = vector.multi_reduction <add>, %140, %cst_23 [1] : vector<4x4096xf32> to vector<4xf32>
    %142 = vector.shape_cast %141 : vector<4xf32> to vector<4x1xf32>
    %cst_24 = arith.constant 2.44140625E-4 : f32
    %143 = vector.broadcast %cst_24 : f32 to vector<4x1xf32>
    %144 = arith.mulf %142, %143 : vector<4x1xf32>
    %cst_25 = arith.constant 9.99999974E-6 : f32
    %145 = vector.broadcast %cst_25 : f32 to vector<4x1xf32>
    %146 = arith.addf %144, %145 : vector<4x1xf32>
    %147 = math.rsqrt %146 : vector<4x1xf32>
    %148 = arith.mulf %85, %147 : vector<4x1xf32>
    %149 = vector.broadcast %148 : vector<4x1xf32> to vector<4x4096xf32>
    %150 = arith.mulf %139, %149 : vector<4x4096xf32>
    %151 = vector.broadcast %86 : vector<4x1xf32> to vector<4x4096xf32>
    %152 = arith.addf %150, %151 : vector<4x4096xf32>
    %cst_26 = arith.constant 0.000000e+00 : f32
    %153 = vector.broadcast %cst_26 : f32 to vector<4x4096xf32>
    %154 = arith.maximumf %152, %153 : vector<4x4096xf32>
    %c0_27 = arith.constant 0 : index
    %c0_28 = arith.constant 0 : index
    %c0_29 = arith.constant 0 : index
    %155 = vector.load %arg8[%c0_27, %c0_28, %c0_29] : memref<1x4x4096xf32, #tpu.memory_space<vmem>>, vector<1x4x4096xf32>
    %156 = vector.shape_cast %155 : vector<1x4x4096xf32> to vector<4x4096xf32>
    %157 = vector.shape_cast %154 : vector<4x4096xf32> to vector<1x4x4096xf32>
    tpu.vector_store %arg8[%c0_27, %c0_28, %c0_29], %157 {strides = array<i32>} : memref<1x4x4096xf32, #tpu.memory_space<vmem>>, vector<1x4x4096xf32>,
    return
  }
  func.func @transform_0(%arg0: i32) -> (i32, i32, i32) {
    %c0_i32 = arith.constant 0 : i32
    %c0_i32_0 = arith.constant 0 : i32
    %c0_i32_1 = arith.constant 0 : i32
    return %arg0, %c0_i32, %c0_i32_0 : i32, i32, i32
  }
  func.func @transform_1(%arg0: i32) -> (i32, i32, i32) {
    %c0_i32 = arith.constant 0 : i32
    %c0_i32_0 = arith.constant 0 : i32
    %c0_i32_1 = arith.constant 0 : i32
    return %arg0, %c0_i32, %c0_i32_0 : i32, i32, i32
  }
  func.func @transform_2(%arg0: i32) -> (i32, i32) {
    %c0_i32 = arith.constant 0 : i32
    %c0_i32_0 = arith.constant 0 : i32
    %c0_i32_1 = arith.constant 0 : i32
    return %c0_i32, %c0_i32_0 : i32, i32
  }
  func.func @transform_3(%arg0: i32) -> (i32, i32) {
    %c0_i32 = arith.constant 0 : i32
    %c0_i32_0 = arith.constant 0 : i32
    %c0_i32_1 = arith.constant 0 : i32
    return %c0_i32, %c0_i32_0 : i32, i32
  }
  func.func @transform_4(%arg0: i32) -> (i32, i32) {
    %c0_i32 = arith.constant 0 : i32
    %c0_i32_0 = arith.constant 0 : i32
    %c0_i32_1 = arith.constant 0 : i32
    return %c0_i32, %c0_i32_0 : i32, i32
  }
  func.func @transform_5(%arg0: i32) -> (i32, i32) {
    %c0_i32 = arith.constant 0 : i32
    %c0_i32_0 = arith.constant 0 : i32
    %c0_i32_1 = arith.constant 0 : i32
    return %c0_i32, %c0_i32_0 : i32, i32
  }
  func.func @transform_6(%arg0: i32) -> (i32, i32, i32) {
    %c0_i32 = arith.constant 0 : i32
    %c0_i32_0 = arith.constant 0 : i32
    %c0_i32_1 = arith.constant 0 : i32
    return %arg0, %c0_i32, %c0_i32_0 : i32, i32, i32
  }
  func.func @transform_7(%arg0: i32) -> (i32, i32, i32) {
    %c0_i32 = arith.constant 0 : i32
    %c0_i32_0 = arith.constant 0 : i32
    %c0_i32_1 = arith.constant 0 : i32
    return %arg0, %c0_i32, %c0_i32_0 : i32, i32, i32
  }
}

</mosaic_0001>

<llo_original>
// kernel: custom-call
$region0: #{custom-call}
  %s0 = inlined_call_operand.hbm [shape: c64[2,4,16,16,16], index: 0, kind: input, shape index: {}]
  %s1 = inlined_call_operand.vmem [shape: f32[2,4,16,16,16], index: 1, kind: output, shape index: {}]
  $region1: #{custom-call} parent=0
    #allocation0 [shape = 's32[1]{0}', space=sflag, size = 0x4, scoped, tag = 'scoped memory for custom-call']
    %2 = vsyncpa [#allocation0], 0
    %s3 = sshll.u32 %s1, 4
    %s4 = int_to_ptr.vmem [resolvable:$true] %s3
    %6 = dma.hbm_to_vmem [thread:$0]  %s0, 32768, %s4, [#allocation0]
    %7 = dma.done [#allocation0], 32768
    %8 = vsyncpa [#allocation0], 1

// kernel: custom-call.1
$region0: #{custom-call.1}
  %s0 = inlined_call_operand.hbm [shape: c64[2,4,16,16,16], index: 0, kind: input, shape index: {}]
  %s1 = inlined_call_operand.vmem [shape: f32[2,4,16,16,16], index: 1, kind: output, shape index: {}]
  %s2 = scalar_lea.hbm %s0, 32768
  $region1: #{custom-call.1} parent=0
    #allocation0 [shape = 's32[1]{0}', space=sflag, size = 0x4, scoped, tag = 'scoped memory for custom-call.1']
    %3 = vsyncpa [#allocation0], 0
    %s4 = sshll.u32 %s1, 4
    %s5 = int_to_ptr.vmem [resolvable:$true] %s4
    %7 = dma.hbm_to_vmem [thread:$0]  %s2, 32768, %s5, [#allocation0]
    %8 = dma.done [#allocation0], 32768
    %9 = vsyncpa [#allocation0], 1

// kernel: resblock_ffc3d_forward.2
$region0: #{resblock_ffc3d_forward.2}
  #allocation0 [shape = 'u32[]', space=smem, size = 0x4, offset = 0x4, fixed_abs, tag = 'smem constant byte address 0x4 - core index']
  #allocation1 [shape = 'u32[144,128]{1,0:T(1,128)}', space=vmem, size = 0x12000, scoped, tag = 'internal scratch']
  %s0 = inlined_call_operand.vmem [shape: f32[2,4,4096], index: 0, kind: input, shape index: {}]
  %s1 = inlined_call_operand.vmem [shape: f32[2,4,4096], index: 1, kind: input, shape index: {}]
  %s2 = inlined_call_operand.vmem [shape: f32[8,4], index: 2, kind: input, shape index: {}]
  %s3 = inlined_call_operand.vmem [shape: f32[8,4], index: 3, kind: input, shape index: {}]
  %s4 = inlined_call_operand.vmem [shape: f32[8,1], index: 4, kind: input, shape index: {}]
  %s5 = inlined_call_operand.vmem [shape: f32[8,1], index: 5, kind: input, shape index: {}]
  %s6 = inlined_call_operand.vmem [shape: f32[2,4,4096], index: 6, kind: output, shape index: {0}]
  %s7 = inlined_call_operand.vmem [shape: f32[2,4,4096], index: 7, kind: output, shape index: {1}]
  %8 = xla_tuple %s6, %s7
  %s9 = sld [smem:[#allocation0]]
  $region65: #{resblock_ffc3d_forward.2} parent=0
    _
  %s11 = ssub.s32 1, %s9
  %s12 = scalar_select 0, %s11, %s9
  loop: start=0, step=1, limit=4
  $region2: #{resblock_ffc3d_forward.2} parent=0 // loop_pre_header
    _
  $region3: #{resblock_ffc3d_forward.2} parent=0 // loop_header
    %s14 = sphi 0, %s18
    %p15 = scmp.ge.s32.totalorder %s14, 4
    %s24 = sphi 0, %s26
    %s27 = sphi 0, %s24
    %s28 = sphi 0, %s27
    %s44 = sphi 0, %s28
    %s50 = sphi 0, %s52
    %s53 = sphi 0, %s50
    %s54 = sphi 0, %s53
    %s70 = sphi 0, %s54
    %s74 = sphi 0, %s74
    %s76 = sphi 0, %s74
    %s77 = sphi 0, %s76
    %s91 = sphi 0, %s77
    %s95 = sphi 0, %s95
    %s97 = sphi 0, %s95
    %s98 = sphi 0, %s97
    %s112 = sphi 0, %s98
    %s116 = sphi 0, %s116
    %s118 = sphi 0, %s116
    %s119 = sphi 0, %s118
    %s133 = sphi 0, %s119
    %s137 = sphi 0, %s137
    %s139 = sphi 0, %s137
    %s140 = sphi 0, %s139
    %s154 = sphi 0, %s140
    %s160 = sphi 0, %s162
    %s163 = sphi 0, %s160
    %s164 = sphi 0, %s163
    %s180 = sphi 0, %s164
    %s186 = sphi 0, %s188
    %s189 = sphi 0, %s186
    %s190 = sphi 0, %s189
    %s206 = sphi 0, %s190
  $region4: #{resblock_ffc3d_forward.2} parent=0 // loop_header_branch
    %17 = sbr.rel (%p15) target = $region8
  $region5: #{resblock_ffc3d_forward.2} parent=0 // loop_body
    %s19 = ssub.s32 %s14, 1
    %s20 = ssub.s32 %s14, 2
    %s21 = sadd.s32 %s14, 1
    %s22 = ssub.s32 %s14, %s21
    %p23 = scmp.eq.s32.totalorder %s22, 0
    %s25 = sadd.s32 %s24, 1
    %s26 = scalar_select %p23, %s24, %s25
    %p29 = pneg %p23
    %p30 = scmp.eq.s32.totalorder %s14, 1
    %p31 = por %p29, %p30
    %p32 = scmp.ne.s32.totalorder %s24, %s27
    %p33 = scmp.eq.s32.totalorder %s14, 0
    %p34 = por %p32, %p33
    %p35 = scmp.ne.s32.totalorder %s24, %s27
    %p36 = scmp.eq.s32.totalorder %s19, 1
    %p37 = por %p35, %p36
    %p38 = scmp.ne.s32.totalorder %s27, %s28
    %p39 = scmp.eq.s32.totalorder %s19, 0
    %p40 = por %p38, %p39
    %p41 = scmp.ne.s32.totalorder %s27, %s28
    %p42 = scmp.eq.s32.totalorder %s20, 1
    %p43 = por %p41, %p42
    %p45 = scmp.ne.s32.totalorder %s28, %s44
    %p46 = scmp.eq.s32.totalorder %s20, 0
    %p47 = por %p45, %p46
    %s48 = ssub.s32 %s14, %s21
    %p49 = scmp.eq.s32.totalorder %s48, 0
    %s51 = sadd.s32 %s50, 1
    %s52 = scalar_select %p49, %s50, %s51
    %p55 = pneg %p49
    %p56 = scmp.eq.s32.totalorder %s14, 1
    %p57 = por %p55, %p56
    %p58 = scmp.ne.s32.totalorder %s50, %s53
    %p59 = scmp.eq.s32.totalorder %s14, 0
    %p60 = por %p58, %p59
    %p61 = scmp.ne.s32.totalorder %s50, %s53
    %p62 = scmp.eq.s32.totalorder %s19, 1
    %p63 = por %p61, %p62
    %p64 = scmp.ne.s32.totalorder %s53, %s54
    %p65 = scmp.eq.s32.totalorder %s19, 0
    %p66 = por %p64, %p65
    %p67 = scmp.ne.s32.totalorder %s53, %s54
    %p68 = scmp.eq.s32.totalorder %s20, 1
    %p69 = por %p67, %p68
    %p71 = scmp.ne.s32.totalorder %s54, %s70
    %p72 = scmp.eq.s32.totalorder %s20, 0
    %p73 = por %p71, %p72
    %s75 = sadd.s32 %s74, 1
    %p78 = scmp.eq.s32.totalorder %s14, 1
    %p79 = scmp.ne.s32.totalorder %s74, %s76
    %p80 = scmp.eq.s32.totalorder %s14, 0
    %p81 = por %p79, %p80
    %p82 = scmp.ne.s32.totalorder %s74, %s76
    %p83 = scmp.eq.s32.totalorder %s19, 1
    %p84 = por %p82, %p83
    %p85 = scmp.ne.s32.totalorder %s76, %s77
    %p86 = scmp.eq.s32.totalorder %s19, 0
    %p87 = por %p85, %p86
    %p88 = scmp.ne.s32.totalorder %s76, %s77
    %p89 = scmp.eq.s32.totalorder %s20, 1
    %p90 = por %p88, %p89
    %p92 = scmp.ne.s32.totalorder %s77, %s91
    %p93 = scmp.eq.s32.totalorder %s20, 0
    %p94 = por %p92, %p93
    %s96 = sadd.s32 %s95, 1
    %p99 = scmp.eq.s32.totalorder %s14, 1
    %p100 = scmp.ne.s32.totalorder %s95, %s97
    %p101 = scmp.eq.s32.totalorder %s14, 0
    %p102 = por %p100, %p101
    %p103 = scmp.ne.s32.totalorder %s95, %s97
    %p104 = scmp.eq.s32.totalorder %s19, 1
    %p105 = por %p103, %p104
    %p106 = scmp.ne.s32.totalorder %s97, %s98
    %p107 = scmp.eq.s32.totalorder %s19, 0
    %p108 = por %p106, %p107
    %p109 = scmp.ne.s32.totalorder %s97, %s98
    %p110 = scmp.eq.s32.totalorder %s20, 1
    %p111 = por %p109, %p110
    %p113 = scmp.ne.s32.totalorder %s98, %s112
    %p114 = scmp.eq.s32.totalorder %s20, 0
    %p115 = por %p113, %p114
    %s117 = sadd.s32 %s116, 1
    %p120 = scmp.eq.s32.totalorder %s14, 1
    %p121 = scmp.ne.s32.totalorder %s116, %s118
    %p122 = scmp.eq.s32.totalorder %s14, 0
    %p123 = por %p121, %p122
    %p124 = scmp.ne.s32.totalorder %s116, %s118
    %p125 = scmp.eq.s32.totalorder %s19, 1
    %p126 = por %p124, %p125
    %p127 = scmp.ne.s32.totalorder %s118, %s119
    %p128 = scmp.eq.s32.totalorder %s19, 0
    %p129 = por %p127, %p128
    %p130 = scmp.ne.s32.totalorder %s118, %s119
    %p131 = scmp.eq.s32.totalorder %s20, 1
    %p132 = por %p130, %p131
    %p134 = scmp.ne.s32.totalorder %s119, %s133
    %p135 = scmp.eq.s32.totalorder %s20, 0
    %p136 = por %p134, %p135
    %s138 = sadd.s32 %s137, 1
    %p141 = scmp.eq.s32.totalorder %s14, 1
    %p142 = scmp.ne.s32.totalorder %s137, %s139
    %p143 = scmp.eq.s32.totalorder %s14, 0
    %p144 = por %p142, %p143
    %p145 = scmp.ne.s32.totalorder %s137, %s139
    %p146 = scmp.eq.s32.totalorder %s19, 1
    %p147 = por %p145, %p146
    %p148 = scmp.ne.s32.totalorder %s139, %s140
    %p149 = scmp.eq.s32.totalorder %s19, 0
    %p150 = por %p148, %p149
    %p151 = scmp.ne.s32.totalorder %s139, %s140
    %p152 = scmp.eq.s32.totalorder %s20, 1
    %p153 = por %p151, %p152
    %p155 = scmp.ne.s32.totalorder %s140, %s154
    %p156 = scmp.eq.s32.totalorder %s20, 0
    %p157 = por %p155, %p156
    %s158 = ssub.s32 %s14, %s21
    %p159 = scmp.eq.s32.totalorder %s158, 0
    %s161 = sadd.s32 %s160, 1
    %s162 = scalar_select %p159, %s160, %s161
    %p165 = pneg %p159
    %p166 = scmp.eq.s32.totalorder %s14, 1
    %p167 = por %p165, %p166
    %p168 = scmp.ne.s32.totalorder %s160, %s163
    %p169 = scmp.eq.s32.totalorder %s14, 0
    %p170 = por %p168, %p169
    %p171 = scmp.ne.s32.totalorder %s160, %s163
    %p172 = scmp.eq.s32.totalorder %s19, 1
    %p173 = por %p171, %p172
    %p174 = scmp.ne.s32.totalorder %s163, %s164
    %p175 = scmp.eq.s32.totalorder %s19, 0
    %p176 = por %p174, %p175
    %p177 = scmp.ne.s32.totalorder %s163, %s164
    %p178 = scmp.eq.s32.totalorder %s20, 1
    %p179 = por %p177, %p178
    %p181 = scmp.ne.s32.totalorder %s164, %s180
    %p182 = scmp.eq.s32.totalorder %s20, 0
    %p183 = por %p181, %p182
    %s184 = ssub.s32 %s14, %s21
    %p185 = scmp.eq.s32.totalorder %s184, 0
    %s187 = sadd.s32 %s186, 1
    %s188 = scalar_select %p185, %s186, %s187
    %p191 = pneg %p185
    %p192 = scmp.eq.s32.totalorder %s14, 1
    %p193 = por %p191, %p192
    %p194 = scmp.ne.s32.totalorder %s186, %s189
    %p195 = scmp.eq.s32.totalorder %s14, 0
    %p196 = por %p194, %p195
    %p197 = scmp.ne.s32.totalorder %s186, %s189
    %p198 = scmp.eq.s32.totalorder %s19, 1
    %p199 = por %p197, %p198
    %p200 = scmp.ne.s32.totalorder %s189, %s190
    %p201 = scmp.eq.s32.totalorder %s19, 0
    %p202 = por %p200, %p201
    %p203 = scmp.ne.s32.totalorder %s189, %s190
    %p204 = scmp.eq.s32.totalorder %s20, 1
    %p205 = por %p203, %p204
    %p207 = scmp.ne.s32.totalorder %s190, %s206
    %p208 = scmp.eq.s32.totalorder %s20, 0
    %p209 = por %p207, %p208
    %p210 = scmp.le.s32.totalorder 1, %s14
    %p211 = scmp.lt.s32.totalorder %s14, 3
    %p212 = pnand %p210, %p211
    %p213 = pneg %p212
    // Predicated region
    $region9: #{resblock_ffc3d_forward.2} parent=5 // pred_check
      _
    $region10: #{resblock_ffc3d_forward.2} parent=5 // pred_check_branch
      %215 = sbr.rel (%p212) target = $region12
    $region11: #{resblock_ffc3d_forward.2} parent=5 // pred_region
      %s216 = ssub.s32 %s14, 1
      // Predicated region
      $region13: #{resblock_ffc3d_forward.2} parent=11 // pred_check
        %p217 = pneg %p87
      $region14: #{resblock_ffc3d_forward.2} parent=11 // pred_check_branch
        %219 = sbr.rel (%p217) target = $region16
      $region15: #{resblock_ffc3d_forward.2} parent=11 // pred_region
        _
      $region16: #{resblock_ffc3d_forward.2} parent=11 // pred_fallthru
        _
      // Predicated region
      $region17: #{resblock_ffc3d_forward.2} parent=11 // pred_check
        %p220 = pneg %p108
      $region18: #{resblock_ffc3d_forward.2} parent=11 // pred_check_branch
        %222 = sbr.rel (%p220) target = $region20
      $region19: #{resblock_ffc3d_forward.2} parent=11 // pred_region
        _
      $region20: #{resblock_ffc3d_forward.2} parent=11 // pred_fallthru
        _
      // Predicated region
      $region21: #{resblock_ffc3d_forward.2} parent=11 // pred_check
        %p223 = pneg %p129
      $region22: #{resblock_ffc3d_forward.2} parent=11 // pred_check_branch
        %225 = sbr.rel (%p223) target = $region24
      $region23: #{resblock_ffc3d_forward.2} parent=11 // pred_region
        _
      $region24: #{resblock_ffc3d_forward.2} parent=11 // pred_fallthru
        _
      // Predicated region
      $region25: #{resblock_ffc3d_forward.2} parent=11 // pred_check
        %p226 = pneg %p150
      $region26: #{resblock_ffc3d_forward.2} parent=11 // pred_check_branch
        %228 = sbr.rel (%p226) target = $region28
      $region27: #{resblock_ffc3d_forward.2} parent=11 // pred_region
        _
      $region28: #{resblock_ffc3d_forward.2} parent=11 // pred_fallthru
        _
    $region12: #{resblock_ffc3d_forward.2} parent=5 // pred_fallthru
      _
    %p229 = scmp.lt.s32.totalorder %s14, 2
    // Predicated region
    $region29: #{resblock_ffc3d_forward.2} parent=5 // pred_check
      %p230 = pneg %p229
    $region30: #{resblock_ffc3d_forward.2} parent=5 // pred_check_branch
      %232 = sbr.rel (%p230) target = $region32
    $region31: #{resblock_ffc3d_forward.2} parent=5 // pred_region
      // Predicated region
      $region33: #{resblock_ffc3d_forward.2} parent=31 // pred_check
        %p233 = pneg %p34
      $region34: #{resblock_ffc3d_forward.2} parent=31 // pred_check_branch
        %235 = sbr.rel (%p233) target = $region36
      $region35: #{resblock_ffc3d_forward.2} parent=31 // pred_region
        %p236 = scmp.lt.s32.totalorder %s14, 1
        %s237 = scalar_select %p236, %s14, 1
        %s238 = smul.addr %s237, 32
        %s239 = smul.addr %s238, 4
        %s240 = scalar_lea.vmem %s0, %s239
      $region36: #{resblock_ffc3d_forward.2} parent=31 // pred_fallthru
        _
      // Predicated region
      $region37: #{resblock_ffc3d_forward.2} parent=31 // pred_check
        %p241 = pneg %p60
      $region38: #{resblock_ffc3d_forward.2} parent=31 // pred_check_branch
        %243 = sbr.rel (%p241) target = $region40
      $region39: #{resblock_ffc3d_forward.2} parent=31 // pred_region
        %p244 = scmp.lt.s32.totalorder %s14, 1
        %s245 = scalar_select %p244, %s14, 1
        %s246 = smul.addr %s245, 32
        %s247 = smul.addr %s246, 4
        %s248 = scalar_lea.vmem %s1, %s247
      $region40: #{resblock_ffc3d_forward.2} parent=31 // pred_fallthru
        _
    $region32: #{resblock_ffc3d_forward.2} parent=5 // pred_fallthru
      _
    %p249 = scmp.le.s32.totalorder 1, %s14
    %p250 = scmp.lt.s32.totalorder %s14, 3
    %p251 = pnand %p249, %p250
    %p252 = pneg %p251
    // Predicated region
    $region41: #{resblock_ffc3d_forward.2} parent=5 // pred_check
      _
    $region42: #{resblock_ffc3d_forward.2} parent=5 // pred_check_branch
      %254 = sbr.rel (%p251) target = $region44
    $region43: #{resblock_ffc3d_forward.2} parent=5 // pred_region
      %s255 = ssub.s32 %s14, 1
      %p256 = scmp.lt.s32.totalorder %s19, 1
      %s257 = scalar_select %p256, %s19, 1
      %s258 = smul.addr %s257, 32
      %s259 = smul.addr %s258, 4
      %s260 = scalar_lea.vmem %s0, %s259
      %p261 = pneg %p40
      %p262 = pneg %p37
      %p263 = scmp.lt.s32.totalorder %s19, 1
      %s264 = scalar_select %p263, %s19, 1
      %s265 = smul.addr %s264, 32
      %s266 = smul.addr %s265, 4
      %s267 = scalar_lea.vmem %s1, %s266
      %p268 = pneg %p66
      %p269 = pneg %p63
      %p270 = pneg %p87
      %p271 = pneg %p84
      %p272 = pneg %p108
      %p273 = pneg %p105
      %p274 = pneg %p129
      %p275 = pneg %p126
      %p276 = pneg %p150
      %p277 = pneg %p147
      %p278 = pneg %p176
      %p279 = pneg %p173
      %p280 = scmp.lt.s32.totalorder %s19, 1
      %s281 = scalar_select %p280, %s19, 1
      %s282 = smul.addr %s281, 32
      %s283 = smul.addr %s282, 4
      %s284 = scalar_lea.vmem %s6, %s283
      %p285 = pneg %p202
      %p286 = pneg %p199
      %p287 = scmp.lt.s32.totalorder %s19, 1
      %s288 = scalar_select %p287, %s19, 1
      %s289 = smul.addr %s288, 32
      %s290 = smul.addr %s289, 4
      %s291 = scalar_lea.vmem %s7, %s290
      %p292 = scmp.lt.s32.totalorder %s19, 1
      %s293 = scalar_select %p292, %s19, 1
      %s294 = smul.addr %s293, 32
      %s295 = smul.addr %s294, 4
      %s296 = scalar_lea.vmem %s0, %s295
      %p297 = scmp.lt.s32.totalorder %s19, 1
      %s298 = scalar_select %p297, %s19, 1
      %s299 = smul.addr %s298, 32
      %s300 = smul.addr %s299, 4
      %s301 = scalar_lea.vmem %s1, %s300
      %p302 = scmp.lt.s32.totalorder %s19, 1
      %s303 = scalar_select %p302, %s19, 1
      %s304 = smul.addr %s303, 32
      %s305 = smul.addr %s304, 4
      %s306 = scalar_lea.vmem %s6, %s305
      %p307 = scmp.lt.s32.totalorder %s19, 1
      %s308 = scalar_select %p307, %s19, 1
      %s309 = smul.addr %s308, 32
      %s310 = smul.addr %s309, 4
      %s311 = scalar_lea.vmem %s7, %s310
      %v312 = vld [vmem:[%s296] sm:$0xff]
      %v313 = vld [vmem:[%s296 + $0x8] sm:$0xff]
      %v314 = vld [vmem:[%s296 + $0x10] sm:$0xff]
      %v315 = vld [vmem:[%s296 + $0x18] sm:$0xff]
      %v316 = vld [vmem:[%s296 + $0x20] sm:$0xff]
      %v317 = vld [vmem:[%s296 + $0x28] sm:$0xff]
      %v318 = vld [vmem:[%s296 + $0x30] sm:$0xff]
      %v319 = vld [vmem:[%s296 + $0x38] sm:$0xff]
      %v320 = vld [vmem:[%s296 + $0x40] sm:$0xff]
      %v321 = vld [vmem:[%s296 + $0x48] sm:$0xff]
      %v322 = vld [vmem:[%s296 + $0x50] sm:$0xff]
      %v323 = vld [vmem:[%s296 + $0x58] sm:$0xff]
      %v324 = vld [vmem:[%s296 + $0x60] sm:$0xff]
      %v325 = vld [vmem:[%s296 + $0x68] sm:$0xff]
      %v326 = vld [vmem:[%s296 + $0x70] sm:$0xff]
      %v327 = vld [vmem:[%s296 + $0x78] sm:$0xff]
      %v328 = vld [vmem:[%s301] sm:$0xff]
      %v329 = vld [vmem:[%s301 + $0x8] sm:$0xff]
      %v330 = vld [vmem:[%s301 + $0x10] sm:$0xff]
      %v331 = vld [vmem:[%s301 + $0x18] sm:$0xff]
      %v332 = vld [vmem:[%s301 + $0x20] sm:$0xff]
      %v333 = vld [vmem:[%s301 + $0x28] sm:$0xff]
      %v334 = vld [vmem:[%s301 + $0x30] sm:$0xff]
      %v335 = vld [vmem:[%s301 + $0x38] sm:$0xff]
      %v336 = vld [vmem:[%s301 + $0x40] sm:$0xff]
      %v337 = vld [vmem:[%s301 + $0x48] sm:$0xff]
      %v338 = vld [vmem:[%s301 + $0x50] sm:$0xff]
      %v339 = vld [vmem:[%s301 + $0x58] sm:$0xff]
      %v340 = vld [vmem:[%s301 + $0x60] sm:$0xff]
      %v341 = vld [vmem:[%s301 + $0x68] sm:$0xff]
      %v342 = vld [vmem:[%s301 + $0x70] sm:$0xff]
      %v343 = vld [vmem:[%s301 + $0x78] sm:$0xff]
      %v344 = vld [vmem:[%s2] sm:$0xff]
      %v345 = vld [vmem:[%s3] sm:$0xff]
      %v346 = vld [vmem:[%s4] sm:$0xff]
      %v347 = vld [vmem:[%s5] sm:$0xff]
      %349 = vset.pattern.permute.xlu0 0
      %350 = vperm.xlu0 %349, %v344
      %v351 = vpop.permute.xlu0 %350
      %v369 = vlaneseq
      %v370 = vshrl.u32 %v369, 7
      %v371 = vsub.s32 0, %v370
      %v372 = vrot.slane %v312, %v371
      %v373 = vlaneseq
      %v374 = vshrl.u32 %v373, 7
      %v375 = vsub.s32 4, %v374
      %v376 = vrot.slane %v312, %v375
      %v377 = vlaneseq
      %v378 = vshrl.u32 %v377, 7
      %v379 = vsub.s32 0, %v378
      %v380 = vrot.slane %v313, %v379
      %v381 = vlaneseq
      %v382 = vshrl.u32 %v381, 7
      %v383 = vsub.s32 4, %v382
      %v384 = vrot.slane %v313, %v383
      %v385 = vlaneseq
      %v386 = vshrl.u32 %v385, 7
      %v387 = vsub.s32 0, %v386
      %v388 = vrot.slane %v314, %v387
      %v389 = vlaneseq
      %v390 = vshrl.u32 %v389, 7
      %v391 = vsub.s32 4, %v390
      %v392 = vrot.slane %v314, %v391
      %v393 = vlaneseq
      %v394 = vshrl.u32 %v393, 7
      %v395 = vsub.s32 0, %v394
      %v396 = vrot.slane %v315, %v395
      %v397 = vlaneseq
      %v398 = vshrl.u32 %v397, 7
      %v399 = vsub.s32 4, %v398
      %v400 = vrot.slane %v315, %v399
      %v401 = vlaneseq
      %v402 = vshrl.u32 %v401, 7
      %v403 = vsub.s32 0, %v402
      %v404 = vrot.slane %v316, %v403
      %v405 = vlaneseq
      %v406 = vshrl.u32 %v405, 7
      %v407 = vsub.s32 4, %v406
      %v408 = vrot.slane %v316, %v407
      %v409 = vlaneseq
      %v410 = vshrl.u32 %v409, 7
      %v411 = vsub.s32 0, %v410
      %v412 = vrot.slane %v317, %v411
      %v413 = vlaneseq
      %v414 = vshrl.u32 %v413, 7
      %v415 = vsub.s32 4, %v414
      %v416 = vrot.slane %v317, %v415
      %v417 = vlaneseq
      %v418 = vshrl.u32 %v417, 7
      %v419 = vsub.s32 0, %v418
      %v420 = vrot.slane %v318, %v419
      %v421 = vlaneseq
      %v422 = vshrl.u32 %v421, 7
      %v423 = vsub.s32 4, %v422
      %v424 = vrot.slane %v318, %v423
      %v425 = vlaneseq
      %v426 = vshrl.u32 %v425, 7
      %v427 = vsub.s32 0, %v426
      %v428 = vrot.slane %v319, %v427
      %v429 = vlaneseq
      %v430 = vshrl.u32 %v429, 7
      %v431 = vsub.s32 4, %v430
      %v432 = vrot.slane %v319, %v431
      %v433 = vlaneseq
      %v434 = vshrl.u32 %v433, 7
      %v435 = vsub.s32 0, %v434
      %v436 = vrot.slane %v320, %v435
      %v437 = vlaneseq
      %v438 = vshrl.u32 %v437, 7
      %v439 = vsub.s32 4, %v438
      %v440 = vrot.slane %v320, %v439
      %v441 = vlaneseq
      %v442 = vshrl.u32 %v441, 7
      %v443 = vsub.s32 0, %v442
      %v444 = vrot.slane %v321, %v443
      %v445 = vlaneseq
      %v446 = vshrl.u32 %v445, 7
      %v447 = vsub.s32 4, %v446
      %v448 = vrot.slane %v321, %v447
      %v449 = vlaneseq
      %v450 = vshrl.u32 %v449, 7
      %v451 = vsub.s32 0, %v450
      %v452 = vrot.slane %v322, %v451
      %v453 = vlaneseq
      %v454 = vshrl.u32 %v453, 7
      %v455 = vsub.s32 4, %v454
      %v456 = vrot.slane %v322, %v455
      %v457 = vlaneseq
      %v458 = vshrl.u32 %v457, 7
      %v459 = vsub.s32 0, %v458
      %v460 = vrot.slane %v323, %v459
      %v461 = vlaneseq
      %v462 = vshrl.u32 %v461, 7
      %v463 = vsub.s32 4, %v462
      %v464 = vrot.slane %v323, %v463
      %v465 = vlaneseq
      %v466 = vshrl.u32 %v465, 7
      %v467 = vsub.s32 0, %v466
      %v468 = vrot.slane %v324, %v467
      %v469 = vlaneseq
      %v470 = vshrl.u32 %v469, 7
      %v471 = vsub.s32 4, %v470
      %v472 = vrot.slane %v324, %v471
      %v473 = vlaneseq
      %v474 = vshrl.u32 %v473, 7
      %v475 = vsub.s32 0, %v474
      %v476 = vrot.slane %v325, %v475
      %v477 = vlaneseq
      %v478 = vshrl.u32 %v477, 7
      %v479 = vsub.s32 4, %v478
      %v480 = vrot.slane %v325, %v479
      %v481 = vlaneseq
      %v482 = vshrl.u32 %v481, 7
      %v483 = vsub.s32 0, %v482
      %v484 = vrot.slane %v326, %v483
      %v485 = vlaneseq
      %v486 = vshrl.u32 %v485, 7
      %v487 = vsub.s32 4, %v486
      %v488 = vrot.slane %v326, %v487
      %v489 = vlaneseq
      %v490 = vshrl.u32 %v489, 7
      %v491 = vsub.s32 0, %v490
      %v492 = vrot.slane %v327, %v491
      %v493 = vlaneseq
      %v494 = vshrl.u32 %v493, 7
      %v495 = vsub.s32 4, %v494
      %v496 = vrot.slane %v327, %v495
      %v529 = vlaneseq
      %v530 = vshrl.u32 %v529, 7
      %v531 = vsub.s32 0, %v530
      %v532 = vrot.slane %v372, %v531
      %v533 = vlaneseq
      %v534 = vshrl.u32 %v533, 7
      %v535 = vsub.s32 0, %v534
      %v536 = vrot.slane %v376, %v535
      %v537 = vlaneseq
      %v538 = vshrl.u32 %v537, 7
      %v539 = vsub.s32 0, %v538
      %v540 = vrot.slane %v380, %v539
      %v541 = vlaneseq
      %v542 = vshrl.u32 %v541, 7
      %v543 = vsub.s32 0, %v542
      %v544 = vrot.slane %v384, %v543
      %v545 = vlaneseq
      %v546 = vshrl.u32 %v545, 7
      %v547 = vsub.s32 0, %v546
      %v548 = vrot.slane %v388, %v547
      %v549 = vlaneseq
      %v550 = vshrl.u32 %v549, 7
      %v551 = vsub.s32 0, %v550
      %v552 = vrot.slane %v392, %v551
      %v553 = vlaneseq
      %v554 = vshrl.u32 %v553, 7
      %v555 = vsub.s32 0, %v554
      %v556 = vrot.slane %v396, %v555
      %v557 = vlaneseq
      %v558 = vshrl.u32 %v557, 7
      %v559 = vsub.s32 0, %v558
      %v560 = vrot.slane %v400, %v559
      %v561 = vlaneseq
      %v562 = vshrl.u32 %v561, 7
      %v563 = vsub.s32 0, %v562
      %v564 = vrot.slane %v404, %v563
      %v565 = vlaneseq
      %v566 = vshrl.u32 %v565, 7
      %v567 = vsub.s32 0, %v566
      %v568 = vrot.slane %v408, %v567
      %v569 = vlaneseq
      %v570 = vshrl.u32 %v569, 7
      %v571 = vsub.s32 0, %v570
      %v572 = vrot.slane %v412, %v571
      %v573 = vlaneseq
      %v574 = vshrl.u32 %v573, 7
      %v575 = vsub.s32 0, %v574
      %v576 = vrot.slane %v416, %v575
      %v577 = vlaneseq
      %v578 = vshrl.u32 %v577, 7
      %v579 = vsub.s32 0, %v578
      %v580 = vrot.slane %v420, %v579
      %v581 = vlaneseq
      %v582 = vshrl.u32 %v581, 7
      %v583 = vsub.s32 0, %v582
      %v584 = vrot.slane %v424, %v583
      %v585 = vlaneseq
      %v586 = vshrl.u32 %v585, 7
      %v587 = vsub.s32 0, %v586
      %v588 = vrot.slane %v428, %v587
      %v589 = vlaneseq
      %v590 = vshrl.u32 %v589, 7
      %v591 = vsub.s32 0, %v590
      %v592 = vrot.slane %v432, %v591
      %v593 = vlaneseq
      %v594 = vshrl.u32 %v593, 7
      %v595 = vsub.s32 0, %v594
      %v596 = vrot.slane %v436, %v595
      %v597 = vlaneseq
      %v598 = vshrl.u32 %v597, 7
      %v599 = vsub.s32 0, %v598
      %v600 = vrot.slane %v440, %v599
      %v601 = vlaneseq
      %v602 = vshrl.u32 %v601, 7
      %v603 = vsub.s32 0, %v602
      %v604 = vrot.slane %v444, %v603
      %v605 = vlaneseq
      %v606 = vshrl.u32 %v605, 7
      %v607 = vsub.s32 0, %v606
      %v608 = vrot.slane %v448, %v607
      %v609 = vlaneseq
      %v610 = vshrl.u32 %v609, 7
      %v611 = vsub.s32 0, %v610
      %v612 = vrot.slane %v452, %v611
      %v613 = vlaneseq
      %v614 = vshrl.u32 %v613, 7
      %v615 = vsub.s32 0, %v614
      %v616 = vrot.slane %v456, %v615
      %v617 = vlaneseq
      %v618 = vshrl.u32 %v617, 7
      %v619 = vsub.s32 0, %v618
      %v620 = vrot.slane %v460, %v619
      %v621 = vlaneseq
      %v622 = vshrl.u32 %v621, 7
      %v623 = vsub.s32 0, %v622
      %v624 = vrot.slane %v464, %v623
      %v625 = vlaneseq
      %v626 = vshrl.u32 %v625, 7
      %v627 = vsub.s32 0, %v626
      %v628 = vrot.slane %v468, %v627
      %v629 = vlaneseq
      %v630 = vshrl.u32 %v629, 7
      %v631 = vsub.s32 0, %v630
      %v632 = vrot.slane %v472, %v631
      %v633 = vlaneseq
      %v634 = vshrl.u32 %v633, 7
      %v635 = vsub.s32 0, %v634
      %v636 = vrot.slane %v476, %v635
      %v637 = vlaneseq
      %v638 = vshrl.u32 %v637, 7
      %v639 = vsub.s32 0, %v638
      %v640 = vrot.slane %v480, %v639
      %v641 = vlaneseq
      %v642 = vshrl.u32 %v641, 7
      %v643 = vsub.s32 0, %v642
      %v644 = vrot.slane %v484, %v643
      %v645 = vlaneseq
      %v646 = vshrl.u32 %v645, 7
      %v647 = vsub.s32 0, %v646
      %v648 = vrot.slane %v488, %v647
      %v649 = vlaneseq
      %v650 = vshrl.u32 %v649, 7
      %v651 = vsub.s32 0, %v650
      %v652 = vrot.slane %v492, %v651
      %v653 = vlaneseq
      %v654 = vshrl.u32 %v653, 7
      %v655 = vsub.s32 0, %v654
      %v656 = vrot.slane %v496, %v655
      %v657 = vmul.f32 %v351, %v532
      %v658 = vmul.f32 %v351, %v536
      %v659 = vmul.f32 %v351, %v540
      %v660 = vmul.f32 %v351, %v544
      %v661 = vmul.f32 %v351, %v548
      %v662 = vmul.f32 %v351, %v552
      %v663 = vmul.f32 %v351, %v556
      %v664 = vmul.f32 %v351, %v560
      %v665 = vmul.f32 %v351, %v564
      %v666 = vmul.f32 %v351, %v568
      %v667 = vmul.f32 %v351, %v572
      %v668 = vmul.f32 %v351, %v576
      %v669 = vmul.f32 %v351, %v580
      %v670 = vmul.f32 %v351, %v584
      %v671 = vmul.f32 %v351, %v588
      %v672 = vmul.f32 %v351, %v592
      %v673 = vmul.f32 %v351, %v596
      %v674 = vmul.f32 %v351, %v600
      %v675 = vmul.f32 %v351, %v604
      %v676 = vmul.f32 %v351, %v608
      %v677 = vmul.f32 %v351, %v612
      %v678 = vmul.f32 %v351, %v616
      %v679 = vmul.f32 %v351, %v620
      %v680 = vmul.f32 %v351, %v624
      %v681 = vmul.f32 %v351, %v628
      %v682 = vmul.f32 %v351, %v632
      %v683 = vmul.f32 %v351, %v636
      %v684 = vmul.f32 %v351, %v640
      %v685 = vmul.f32 %v351, %v644
      %v686 = vmul.f32 %v351, %v648
      %v687 = vmul.f32 %v351, %v652
      %v688 = vmul.f32 %v351, %v656
      %689 = vset.pattern.permute.xlu0 1
      %690 = vperm.xlu0 %689, %v344
      %v691 = vpop.permute.xlu0 %690
      %v693 = vlaneseq
      %v694 = vshrl.u32 %v693, 7
      %v695 = vsub.s32 1, %v694
      %v696 = vrot.slane %v312, %v695
      %v697 = vlaneseq
      %v698 = vshrl.u32 %v697, 7
      %v699 = vsub.s32 5, %v698
      %v700 = vrot.slane %v312, %v699
      %v701 = vlaneseq
      %v702 = vshrl.u32 %v701, 7
      %v703 = vsub.s32 1, %v702
      %v704 = vrot.slane %v313, %v703
      %v705 = vlaneseq
      %v706 = vshrl.u32 %v705, 7
      %v707 = vsub.s32 5, %v706
      %v708 = vrot.slane %v313, %v707
      %v709 = vlaneseq
      %v710 = vshrl.u32 %v709, 7
      %v711 = vsub.s32 1, %v710
      %v712 = vrot.slane %v314, %v711
      %v713 = vlaneseq
      %v714 = vshrl.u32 %v713, 7
      %v715 = vsub.s32 5, %v714
      %v716 = vrot.slane %v314, %v715
      %v717 = vlaneseq
      %v718 = vshrl.u32 %v717, 7
      %v719 = vsub.s32 1, %v718
      %v720 = vrot.slane %v315, %v719
      %v721 = vlaneseq
      %v722 = vshrl.u32 %v721, 7
      %v723 = vsub.s32 5, %v722
      %v724 = vrot.slane %v315, %v723
      %v725 = vlaneseq
      %v726 = vshrl.u32 %v725, 7
      %v727 = vsub.s32 1, %v726
      %v728 = vrot.slane %v316, %v727
      %v729 = vlaneseq
      %v730 = vshrl.u32 %v729, 7
      %v731 = vsub.s32 5, %v730
      %v732 = vrot.slane %v316, %v731
      %v733 = vlaneseq
      %v734 = vshrl.u32 %v733, 7
      %v735 = vsub.s32 1, %v734
      %v736 = vrot.slane %v317, %v735
      %v737 = vlaneseq
      %v738 = vshrl.u32 %v737, 7
      %v739 = vsub.s32 5, %v738
      %v740 = vrot.slane %v317, %v739
      %v741 = vlaneseq
      %v742 = vshrl.u32 %v741, 7
      %v743 = vsub.s32 1, %v742
      %v744 = vrot.slane %v318, %v743
      %v745 = vlaneseq
      %v746 = vshrl.u32 %v745, 7
      %v747 = vsub.s32 5, %v746
      %v748 = vrot.slane %v318, %v747
      %v749 = vlaneseq
      %v750 = vshrl.u32 %v749, 7
      %v751 = vsub.s32 1, %v750
      %v752 = vrot.slane %v319, %v751
      %v753 = vlaneseq
      %v754 = vshrl.u32 %v753, 7
      %v755 = vsub.s32 5, %v754
      %v756 = vrot.slane %v319, %v755
      %v757 = vlaneseq
      %v758 = vshrl.u32 %v757, 7
      %v759 = vsub.s32 1, %v758
      %v760 = vrot.slane %v320, %v759
      %v761 = vlaneseq
      %v762 = vshrl.u32 %v761, 7
      %v763 = vsub.s32 5, %v762
      %v764 = vrot.slane %v320, %v763
      %v765 = vlaneseq
      %v766 = vshrl.u32 %v765, 7
      %v767 = vsub.s32 1, %v766
      %v768 = vrot.slane %v321, %v767
      %v769 = vlaneseq
      %v770 = vshrl.u32 %v769, 7
      %v771 = vsub.s32 5, %v770
      %v772 = vrot.slane %v321, %v771
      %v773 = vlaneseq
      %v774 = vshrl.u32 %v773, 7
      %v775 = vsub.s32 1, %v774
      %v776 = vrot.slane %v322, %v775
      %v777 = vlaneseq
      %v778 = vshrl.u32 %v777, 7
      %v779 = vsub.s32 5, %v778
      %v780 = vrot.slane %v322, %v779
      %v781 = vlaneseq
      %v782 = vshrl.u32 %v781, 7
      %v783 = vsub.s32 1, %v782
      %v784 = vrot.slane %v323, %v783
      %v785 = vlaneseq
      %v786 = vshrl.u32 %v785, 7
      %v787 = vsub.s32 5, %v786
      %v788 = vrot.slane %v323, %v787
      %v789 = vlaneseq
      %v790 = vshrl.u32 %v789, 7
      %v791 = vsub.s32 1, %v790
      %v792 = vrot.slane %v324, %v791
      %v793 = vlaneseq
      %v794 = vshrl.u32 %v793, 7
      %v795 = vsub.s32 5, %v794
      %v796 = vrot.slane %v324, %v795
      %v797 = vlaneseq
      %v798 = vshrl.u32 %v797, 7
      %v799 = vsub.s32 1, %v798
      %v800 = vrot.slane %v325, %v799
      %v801 = vlaneseq
      %v802 = vshrl.u32 %v801, 7
      %v803 = vsub.s32 5, %v802
      %v804 = vrot.slane %v325, %v803
      %v805 = vlaneseq
      %v806 = vshrl.u32 %v805, 7
      %v807 = vsub.s32 1, %v806
      %v808 = vrot.slane %v326, %v807
      %v809 = vlaneseq
      %v810 = vshrl.u32 %v809, 7
      %v811 = vsub.s32 5, %v810
      %v812 = vrot.slane %v326, %v811
      %v813 = vlaneseq
      %v814 = vshrl.u32 %v813, 7
      %v815 = vsub.s32 1, %v814
      %v816 = vrot.slane %v327, %v815
      %v817 = vlaneseq
      %v818 = vshrl.u32 %v817, 7
      %v819 = vsub.s32 5, %v818
      %v820 = vrot.slane %v327, %v819
      %v853 = vlaneseq
      %v854 = vshrl.u32 %v853, 7
      %v855 = vsub.s32 1, %v854
      %v856 = vrot.slane %v696, %v855
      %v857 = vlaneseq
      %v858 = vshrl.u32 %v857, 7
      %v859 = vsub.s32 1, %v858
      %v860 = vrot.slane %v700, %v859
      %v861 = vlaneseq
      %v862 = vshrl.u32 %v861, 7
      %v863 = vsub.s32 1, %v862
      %v864 = vrot.slane %v704, %v863
      %v865 = vlaneseq
      %v866 = vshrl.u32 %v865, 7
      %v867 = vsub.s32 1, %v866
      %v868 = vrot.slane %v708, %v867
      %v869 = vlaneseq
      %v870 = vshrl.u32 %v869, 7
      %v871 = vsub.s32 1, %v870
      %v872 = vrot.slane %v712, %v871
      %v873 = vlaneseq
      %v874 = vshrl.u32 %v873, 7
      %v875 = vsub.s32 1, %v874
      %v876 = vrot.slane %v716, %v875
      %v877 = vlaneseq
      %v878 = vshrl.u32 %v877, 7
      %v879 = vsub.s32 1, %v878
      %v880 = vrot.slane %v720, %v879
      %v881 = vlaneseq
      %v882 = vshrl.u32 %v881, 7
      %v883 = vsub.s32 1, %v882
      %v884 = vrot.slane %v724, %v883
      %v885 = vlaneseq
      %v886 = vshrl.u32 %v885, 7
      %v887 = vsub.s32 1, %v886
      %v888 = vrot.slane %v728, %v887
      %v889 = vlaneseq
      %v890 = vshrl.u32 %v889, 7
      %v891 = vsub.s32 1, %v890
      %v892 = vrot.slane %v732, %v891
      %v893 = vlaneseq
      %v894 = vshrl.u32 %v893, 7
      %v895 = vsub.s32 1, %v894
      %v896 = vrot.slane %v736, %v895
      %v897 = vlaneseq
      %v898 = vshrl.u32 %v897, 7
      %v899 = vsub.s32 1, %v898
      %v900 = vrot.slane %v740, %v899
      %v901 = vlaneseq
      %v902 = vshrl.u32 %v901, 7
      %v903 = vsub.s32 1, %v902
      %v904 = vrot.slane %v744, %v903
      %v905 = vlaneseq
      %v906 = vshrl.u32 %v905, 7
      %v907 = vsub.s32 1, %v906
      %v908 = vrot.slane %v748, %v907
      %v909 = vlaneseq
      %v910 = vshrl.u32 %v909, 7
      %v911 = vsub.s32 1, %v910
      %v912 = vrot.slane %v752, %v911
      %v913 = vlaneseq
      %v914 = vshrl.u32 %v913, 7
      %v915 = vsub.s32 1, %v914
      %v916 = vrot.slane %v756, %v915
      %v917 = vlaneseq
      %v918 = vshrl.u32 %v917, 7
      %v919 = vsub.s32 1, %v918
      %v920 = vrot.slane %v760, %v919
      %v921 = vlaneseq
      %v922 = vshrl.u32 %v921, 7
      %v923 = vsub.s32 1, %v922
      %v924 = vrot.slane %v764, %v923
      %v925 = vlaneseq
      %v926 = vshrl.u32 %v925, 7
      %v927 = vsub.s32 1, %v926
      %v928 = vrot.slane %v768, %v927
      %v929 = vlaneseq
      %v930 = vshrl.u32 %v929, 7
      %v931 = vsub.s32 1, %v930
      %v932 = vrot.slane %v772, %v931
      %v933 = vlaneseq
      %v934 = vshrl.u32 %v933, 7
      %v935 = vsub.s32 1, %v934
      %v936 = vrot.slane %v776, %v935
      %v937 = vlaneseq
      %v938 = vshrl.u32 %v937, 7
      %v939 = vsub.s32 1, %v938
      %v940 = vrot.slane %v780, %v939
      %v941 = vlaneseq
      %v942 = vshrl.u32 %v941, 7
      %v943 = vsub.s32 1, %v942
      %v944 = vrot.slane %v784, %v943
      %v945 = vlaneseq
      %v946 = vshrl.u32 %v945, 7
      %v947 = vsub.s32 1, %v946
      %v948 = vrot.slane %v788, %v947
      %v949 = vlaneseq
      %v950 = vshrl.u32 %v949, 7
      %v951 = vsub.s32 1, %v950
      %v952 = vrot.slane %v792, %v951
      %v953 = vlaneseq
      %v954 = vshrl.u32 %v953, 7
      %v955 = vsub.s32 1, %v954
      %v956 = vrot.slane %v796, %v955
      %v957 = vlaneseq
      %v958 = vshrl.u32 %v957, 7
      %v959 = vsub.s32 1, %v958
      %v960 = vrot.slane %v800, %v959
      %v961 = vlaneseq
      %v962 = vshrl.u32 %v961, 7
      %v963 = vsub.s32 1, %v962
      %v964 = vrot.slane %v804, %v963
      %v965 = vlaneseq
      %v966 = vshrl.u32 %v965, 7
      %v967 = vsub.s32 1, %v966
      %v968 = vrot.slane %v808, %v967
      %v969 = vlaneseq
      %v970 = vshrl.u32 %v969, 7
      %v971 = vsub.s32 1, %v970
      %v972 = vrot.slane %v812, %v971
      %v973 = vlaneseq
      %v974 = vshrl.u32 %v973, 7
      %v975 = vsub.s32 1, %v974
      %v976 = vrot.slane %v816, %v975
      %v977 = vlaneseq
      %v978 = vshrl.u32 %v977, 7
      %v979 = vsub.s32 1, %v978
      %v980 = vrot.slane %v820, %v979
      %v981 = vmul.f32 %v691, %v856
      %v982 = vmul.f32 %v691, %v860
      %v983 = vmul.f32 %v691, %v864
      %v984 = vmul.f32 %v691, %v868
      %v985 = vmul.f32 %v691, %v872
      %v986 = vmul.f32 %v691, %v876
      %v987 = vmul.f32 %v691, %v880
      %v988 = vmul.f32 %v691, %v884
      %v989 = vmul.f32 %v691, %v888
      %v990 = vmul.f32 %v691, %v892
      %v991 = vmul.f32 %v691, %v896
      %v992 = vmul.f32 %v691, %v900
      %v993 = vmul.f32 %v691, %v904
      %v994 = vmul.f32 %v691, %v908
      %v995 = vmul.f32 %v691, %v912
      %v996 = vmul.f32 %v691, %v916
      %v997 = vmul.f32 %v691, %v920
      %v998 = vmul.f32 %v691, %v924
      %v999 = vmul.f32 %v691, %v928
      %v1000 = vmul.f32 %v691, %v932
      %v1001 = vmul.f32 %v691, %v936
      %v1002 = vmul.f32 %v691, %v940
      %v1003 = vmul.f32 %v691, %v944
      %v1004 = vmul.f32 %v691, %v948
      %v1005 = vmul.f32 %v691, %v952
      %v1006 = vmul.f32 %v691, %v956
      %v1007 = vmul.f32 %v691, %v960
      %v1008 = vmul.f32 %v691, %v964
      %v1009 = vmul.f32 %v691, %v968
      %v1010 = vmul.f32 %v691, %v972
      %v1011 = vmul.f32 %v691, %v976
      %v1012 = vmul.f32 %v691, %v980
      %v1013 = vadd.f32 %v657, %v981
      %v1014 = vadd.f32 %v658, %v982
      %v1015 = vadd.f32 %v659, %v983
      %v1016 = vadd.f32 %v660, %v984
      %v1017 = vadd.f32 %v661, %v985
      %v1018 = vadd.f32 %v662, %v986
      %v1019 = vadd.f32 %v663, %v987
      %v1020 = vadd.f32 %v664, %v988
      %v1021 = vadd.f32 %v665, %v989
      %v1022 = vadd.f32 %v666, %v990
      %v1023 = vadd.f32 %v667, %v991
      %v1024 = vadd.f32 %v668, %v992
      %v1025 = vadd.f32 %v669, %v993
      %v1026 = vadd.f32 %v670, %v994
      %v1027 = vadd.f32 %v671, %v995
      %v1028 = vadd.f32 %v672, %v996
      %v1029 = vadd.f32 %v673, %v997
      %v1030 = vadd.f32 %v674, %v998
      %v1031 = vadd.f32 %v675, %v999
      %v1032 = vadd.f32 %v676, %v1000
      %v1033 = vadd.f32 %v677, %v1001
      %v1034 = vadd.f32 %v678, %v1002
      %v1035 = vadd.f32 %v679, %v1003
      %v1036 = vadd.f32 %v680, %v1004
      %v1037 = vadd.f32 %v681, %v1005
      %v1038 = vadd.f32 %v682, %v1006
      %v1039 = vadd.f32 %v683, %v1007
      %v1040 = vadd.f32 %v684, %v1008
      %v1041 = vadd.f32 %v685, %v1009
      %v1042 = vadd.f32 %v686, %v1010
      %v1043 = vadd.f32 %v687, %v1011
      %v1044 = vadd.f32 %v688, %v1012
      %1045 = vset.pattern.permute.xlu0 2
      %1046 = vperm.xlu0 %1045, %v344
      %v1047 = vpop.permute.xlu0 %1046
      %v1049 = vlaneseq
      %v1050 = vshrl.u32 %v1049, 7
      %v1051 = vsub.s32 2, %v1050
      %v1052 = vrot.slane %v312, %v1051
      %v1053 = vlaneseq
      %v1054 = vshrl.u32 %v1053, 7
      %v1055 = vsub.s32 6, %v1054
      %v1056 = vrot.slane %v312, %v1055
      %v1057 = vlaneseq
      %v1058 = vshrl.u32 %v1057, 7
      %v1059 = vsub.s32 2, %v1058
      %v1060 = vrot.slane %v313, %v1059
      %v1061 = vlaneseq
      %v1062 = vshrl.u32 %v1061, 7
      %v1063 = vsub.s32 6, %v1062
      %v1064 = vrot.slane %v313, %v1063
      %v1065 = vlaneseq
      %v1066 = vshrl.u32 %v1065, 7
      %v1067 = vsub.s32 2, %v1066
      %v1068 = vrot.slane %v314, %v1067
      %v1069 = vlaneseq
      %v1070 = vshrl.u32 %v1069, 7
      %v1071 = vsub.s32 6, %v1070
      %v1072 = vrot.slane %v314, %v1071
      %v1073 = vlaneseq
      %v1074 = vshrl.u32 %v1073, 7
      %v1075 = vsub.s32 2, %v1074
      %v1076 = vrot.slane %v315, %v1075
      %v1077 = vlaneseq
      %v1078 = vshrl.u32 %v1077, 7
      %v1079 = vsub.s32 6, %v1078
      %v1080 = vrot.slane %v315, %v1079
      %v1081 = vlaneseq
      %v1082 = vshrl.u32 %v1081, 7
      %v1083 = vsub.s32 2, %v1082
      %v1084 = vrot.slane %v316, %v1083
      %v1085 = vlaneseq
      %v1086 = vshrl.u32 %v1085, 7
      %v1087 = vsub.s32 6, %v1086
      %v1088 = vrot.slane %v316, %v1087
      %v1089 = vlaneseq
      %v1090 = vshrl.u32 %v1089, 7
      %v1091 = vsub.s32 2, %v1090
      %v1092 = vrot.slane %v317, %v1091
      %v1093 = vlaneseq
      %v1094 = vshrl.u32 %v1093, 7
      %v1095 = vsub.s32 6, %v1094
      %v1096 = vrot.slane %v317, %v1095
      %v1097 = vlaneseq
      %v1098 = vshrl.u32 %v1097, 7
      %v1099 = vsub.s32 2, %v1098
      %v1100 = vrot.slane %v318, %v1099
      %v1101 = vlaneseq
      %v1102 = vshrl.u32 %v1101, 7
      %v1103 = vsub.s32 6, %v1102
      %v1104 = vrot.slane %v318, %v1103
      %v1105 = vlaneseq
      %v1106 = vshrl.u32 %v1105, 7
      %v1107 = vsub.s32 2, %v1106
      %v1108 = vrot.slane %v319, %v1107
      %v1109 = vlaneseq
      %v1110 = vshrl.u32 %v1109, 7
      %v1111 = vsub.s32 6, %v1110
      %v1112 = vrot.slane %v319, %v1111
      %v1113 = vlaneseq
      %v1114 = vshrl.u32 %v1113, 7
      %v1115 = vsub.s32 2, %v1114
      %v1116 = vrot.slane %v320, %v1115
      %v1117 = vlaneseq
      %v1118 = vshrl.u32 %v1117, 7
      %v1119 = vsub.s32 6, %v1118
      %v1120 = vrot.slane %v320, %v1119
      %v1121 = vlaneseq
      %v1122 = vshrl.u32 %v1121, 7
      %v1123 = vsub.s32 2, %v1122
      %v1124 = vrot.slane %v321, %v1123
      %v1125 = vlaneseq
      %v1126 = vshrl.u32 %v1125, 7
      %v1127 = vsub.s32 6, %v1126
      %v1128 = vrot.slane %v321, %v1127
      %v1129 = vlaneseq
      %v1130 = vshrl.u32 %v1129, 7
      %v1131 = vsub.s32 2, %v1130
      %v1132 = vrot.slane %v322, %v1131
      %v1133 = vlaneseq
      %v1134 = vshrl.u32 %v1133, 7
      %v1135 = vsub.s32 6, %v1134
      %v1136 = vrot.slane %v322, %v1135
      %v1137 = vlaneseq
      %v1138 = vshrl.u32 %v1137, 7
      %v1139 = vsub.s32 2, %v1138
      %v1140 = vrot.slane %v323, %v1139
      %v1141 = vlaneseq
      %v1142 = vshrl.u32 %v1141, 7
      %v1143 = vsub.s32 6, %v1142
      %v1144 = vrot.slane %v323, %v1143
      %v1145 = vlaneseq
      %v1146 = vshrl.u32 %v1145, 7
      %v1147 = vsub.s32 2, %v1146
      %v1148 = vrot.slane %v324, %v1147
      %v1149 = vlaneseq
      %v1150 = vshrl.u32 %v1149, 7
      %v1151 = vsub.s32 6, %v1150
      %v1152 = vrot.slane %v324, %v1151
      %v1153 = vlaneseq
      %v1154 = vshrl.u32 %v1153, 7
      %v1155 = vsub.s32 2, %v1154
      %v1156 = vrot.slane %v325, %v1155
      %v1157 = vlaneseq
      %v1158 = vshrl.u32 %v1157, 7
      %v1159 = vsub.s32 6, %v1158
      %v1160 = vrot.slane %v325, %v1159
      %v1161 = vlaneseq
      %v1162 = vshrl.u32 %v1161, 7
      %v1163 = vsub.s32 2, %v1162
      %v1164 = vrot.slane %v326, %v1163
      %v1165 = vlaneseq
      %v1166 = vshrl.u32 %v1165, 7
      %v1167 = vsub.s32 6, %v1166
      %v1168 = vrot.slane %v326, %v1167
      %v1169 = vlaneseq
      %v1170 = vshrl.u32 %v1169, 7
      %v1171 = vsub.s32 2, %v1170
      %v1172 = vrot.slane %v327, %v1171
      %v1173 = vlaneseq
      %v1174 = vshrl.u32 %v1173, 7
      %v1175 = vsub.s32 6, %v1174
      %v1176 = vrot.slane %v327, %v1175
      %v1209 = vlaneseq
      %v1210 = vshrl.u32 %v1209, 7
      %v1211 = vsub.s32 2, %v1210
      %v1212 = vrot.slane %v1052, %v1211
      %v1213 = vlaneseq
      %v1214 = vshrl.u32 %v1213, 7
      %v1215 = vsub.s32 2, %v1214
      %v1216 = vrot.slane %v1056, %v1215
      %v1217 = vlaneseq
      %v1218 = vshrl.u32 %v1217, 7
      %v1219 = vsub.s32 2, %v1218
      %v1220 = vrot.slane %v1060, %v1219
      %v1221 = vlaneseq
      %v1222 = vshrl.u32 %v1221, 7
      %v1223 = vsub.s32 2, %v1222
      %v1224 = vrot.slane %v1064, %v1223
      %v1225 = vlaneseq
      %v1226 = vshrl.u32 %v1225, 7
      %v1227 = vsub.s32 2, %v1226
      %v1228 = vrot.slane %v1068, %v1227
      %v1229 = vlaneseq
      %v1230 = vshrl.u32 %v1229, 7
      %v1231 = vsub.s32 2, %v1230
      %v1232 = vrot.slane %v1072, %v1231
      %v1233 = vlaneseq
      %v1234 = vshrl.u32 %v1233, 7
      %v1235 = vsub.s32 2, %v1234
      %v1236 = vrot.slane %v1076, %v1235
      %v1237 = vlaneseq
      %v1238 = vshrl.u32 %v1237, 7
      %v1239 = vsub.s32 2, %v1238
      %v1240 = vrot.slane %v1080, %v1239
      %v1241 = vlaneseq
      %v1242 = vshrl.u32 %v1241, 7
      %v1243 = vsub.s32 2, %v1242
      %v1244 = vrot.slane %v1084, %v1243
      %v1245 = vlaneseq
      %v1246 = vshrl.u32 %v1245, 7
      %v1247 = vsub.s32 2, %v1246
      %v1248 = vrot.slane %v1088, %v1247
      %v1249 = vlaneseq
      %v1250 = vshrl.u32 %v1249, 7
      %v1251 = vsub.s32 2, %v1250
      %v1252 = vrot.slane %v1092, %v1251
      %v1253 = vlaneseq
      %v1254 = vshrl.u32 %v1253, 7
      %v1255 = vsub.s32 2, %v1254
      %v1256 = vrot.slane %v1096, %v1255
      %v1257 = vlaneseq
      %v1258 = vshrl.u32 %v1257, 7
      %v1259 = vsub.s32 2, %v1258
      %v1260 = vrot.slane %v1100, %v1259
      %v1261 = vlaneseq
      %v1262 = vshrl.u32 %v1261, 7
      %v1263 = vsub.s32 2, %v1262
      %v1264 = vrot.slane %v1104, %v1263
      %v1265 = vlaneseq
      %v1266 = vshrl.u32 %v1265, 7
      %v1267 = vsub.s32 2, %v1266
      %v1268 = vrot.slane %v1108, %v1267
      %v1269 = vlaneseq
      %v1270 = vshrl.u32 %v1269, 7
      %v1271 = vsub.s32 2, %v1270
      %v1272 = vrot.slane %v1112, %v1271
      %v1273 = vlaneseq
      %v1274 = vshrl.u32 %v1273, 7
      %v1275 = vsub.s32 2, %v1274
      %v1276 = vrot.slane %v1116, %v1275
      %v1277 = vlaneseq
      %v1278 = vshrl.u32 %v1277, 7
      %v1279 = vsub.s32 2, %v1278
      %v1280 = vrot.slane %v1120, %v1279
      %v1281 = vlaneseq
      %v1282 = vshrl.u32 %v1281, 7
      %v1283 = vsub.s32 2, %v1282
      %v1284 = vrot.slane %v1124, %v1283
      %v1285 = vlaneseq
      %v1286 = vshrl.u32 %v1285, 7
      %v1287 = vsub.s32 2, %v1286
      %v1288 = vrot.slane %v1128, %v1287
      %v1289 = vlaneseq
      %v1290 = vshrl.u32 %v1289, 7
      %v1291 = vsub.s32 2, %v1290
      %v1292 = vrot.slane %v1132, %v1291
      %v1293 = vlaneseq
      %v1294 = vshrl.u32 %v1293, 7
      %v1295 = vsub.s32 2, %v1294
      %v1296 = vrot.slane %v1136, %v1295
      %v1297 = vlaneseq
      %v1298 = vshrl.u32 %v1297, 7
      %v1299 = vsub.s32 2, %v1298
      %v1300 = vrot.slane %v1140, %v1299
      %v1301 = vlaneseq
      %v1302 = vshrl.u32 %v1301, 7
      %v1303 = vsub.s32 2, %v1302
      %v1304 = vrot.slane %v1144, %v1303
      %v1305 = vlaneseq
      %v1306 = vshrl.u32 %v1305, 7
      %v1307 = vsub.s32 2, %v1306
      %v1308 = vrot.slane %v1148, %v1307
      %v1309 = vlaneseq
      %v1310 = vshrl.u32 %v1309, 7
      %v1311 = vsub.s32 2, %v1310
      %v1312 = vrot.slane %v1152, %v1311
      %v1313 = vlaneseq
      %v1314 = vshrl.u32 %v1313, 7
      %v1315 = vsub.s32 2, %v1314
      %v1316 = vrot.slane %v1156, %v1315
      %v1317 = vlaneseq
      %v1318 = vshrl.u32 %v1317, 7
      %v1319 = vsub.s32 2, %v1318
      %v1320 = vrot.slane %v1160, %v1319
      %v1321 = vlaneseq
      %v1322 = vshrl.u32 %v1321, 7
      %v1323 = vsub.s32 2, %v1322
      %v1324 = vrot.slane %v1164, %v1323
      %v1325 = vlaneseq
      %v1326 = vshrl.u32 %v1325, 7
      %v1327 = vsub.s32 2, %v1326
      %v1328 = vrot.slane %v1168, %v1327
      %v1329 = vlaneseq
      %v1330 = vshrl.u32 %v1329, 7
      %v1331 = vsub.s32 2, %v1330
      %v1332 = vrot.slane %v1172, %v1331
      %v1333 = vlaneseq
      %v1334 = vshrl.u32 %v1333, 7
      %v1335 = vsub.s32 2, %v1334
      %v1336 = vrot.slane %v1176, %v1335
      %v1337 = vmul.f32 %v1047, %v1212
      %v1338 = vmul.f32 %v1047, %v1216
      %v1339 = vmul.f32 %v1047, %v1220
      %v1340 = vmul.f32 %v1047, %v1224
      %v1341 = vmul.f32 %v1047, %v1228
      %v1342 = vmul.f32 %v1047, %v1232
      %v1343 = vmul.f32 %v1047, %v1236
      %v1344 = vmul.f32 %v1047, %v1240
      %v1345 = vmul.f32 %v1047, %v1244
      %v1346 = vmul.f32 %v1047, %v1248
      %v1347 = vmul.f32 %v1047, %v1252
      %v1348 = vmul.f32 %v1047, %v1256
      %v1349 = vmul.f32 %v1047, %v1260
      %v1350 = vmul.f32 %v1047, %v1264
      %v1351 = vmul.f32 %v1047, %v1268
      %v1352 = vmul.f32 %v1047, %v1272
      %v1353 = vmul.f32 %v1047, %v1276
      %v1354 = vmul.f32 %v1047, %v1280
      %v1355 = vmul.f32 %v1047, %v1284
      %v1356 = vmul.f32 %v1047, %v1288
      %v1357 = vmul.f32 %v1047, %v1292
      %v1358 = vmul.f32 %v1047, %v1296
      %v1359 = vmul.f32 %v1047, %v1300
      %v1360 = vmul.f32 %v1047, %v1304
      %v1361 = vmul.f32 %v1047, %v1308
      %v1362 = vmul.f32 %v1047, %v1312
      %v1363 = vmul.f32 %v1047, %v1316
      %v1364 = vmul.f32 %v1047, %v1320
      %v1365 = vmul.f32 %v1047, %v1324
      %v1366 = vmul.f32 %v1047, %v1328
      %v1367 = vmul.f32 %v1047, %v1332
      %v1368 = vmul.f32 %v1047, %v1336
      %v1369 = vadd.f32 %v1013, %v1337
      %v1370 = vadd.f32 %v1014, %v1338
      %v1371 = vadd.f32 %v1015, %v1339
      %v1372 = vadd.f32 %v1016, %v1340
      %v1373 = vadd.f32 %v1017, %v1341
      %v1374 = vadd.f32 %v1018, %v1342
      %v1375 = vadd.f32 %v1019, %v1343
      %v1376 = vadd.f32 %v1020, %v1344
      %v1377 = vadd.f32 %v1021, %v1345
      %v1378 = vadd.f32 %v1022, %v1346
      %v1379 = vadd.f32 %v1023, %v1347
      %v1380 = vadd.f32 %v1024, %v1348
      %v1381 = vadd.f32 %v1025, %v1349
      %v1382 = vadd.f32 %v1026, %v1350
      %v1383 = vadd.f32 %v1027, %v1351
      %v1384 = vadd.f32 %v1028, %v1352
      %v1385 = vadd.f32 %v1029, %v1353
      %v1386 = vadd.f32 %v1030, %v1354
      %v1387 = vadd.f32 %v1031, %v1355
      %v1388 = vadd.f32 %v1032, %v1356
      %v1389 = vadd.f32 %v1033, %v1357
      %v1390 = vadd.f32 %v1034, %v1358
      %v1391 = vadd.f32 %v1035, %v1359
      %v1392 = vadd.f32 %v1036, %v1360
      %v1393 = vadd.f32 %v1037, %v1361
      %v1394 = vadd.f32 %v1038, %v1362
      %v1395 = vadd.f32 %v1039, %v1363
      %v1396 = vadd.f32 %v1040, %v1364
      %v1397 = vadd.f32 %v1041, %v1365
      %v1398 = vadd.f32 %v1042, %v1366
      %v1399 = vadd.f32 %v1043, %v1367
      %v1400 = vadd.f32 %v1044, %v1368
      %1401 = vset.pattern.permute.xlu0 3
      %1402 = vperm.xlu0 %1401, %v344
      %v1403 = vpop.permute.xlu0 %1402
      %v1405 = vlaneseq
      %v1406 = vshrl.u32 %v1405, 7
      %v1407 = vsub.s32 3, %v1406
      %v1408 = vrot.slane %v312, %v1407
      %v1409 = vlaneseq
      %v1410 = vshrl.u32 %v1409, 7
      %v1411 = vsub.s32 7, %v1410
      %v1412 = vrot.slane %v312, %v1411
      %v1413 = vlaneseq
      %v1414 = vshrl.u32 %v1413, 7
      %v1415 = vsub.s32 3, %v1414
      %v1416 = vrot.slane %v313, %v1415
      %v1417 = vlaneseq
      %v1418 = vshrl.u32 %v1417, 7
      %v1419 = vsub.s32 7, %v1418
      %v1420 = vrot.slane %v313, %v1419
      %v1421 = vlaneseq
      %v1422 = vshrl.u32 %v1421, 7
      %v1423 = vsub.s32 3, %v1422
      %v1424 = vrot.slane %v314, %v1423
      %v1425 = vlaneseq
      %v1426 = vshrl.u32 %v1425, 7
      %v1427 = vsub.s32 7, %v1426
      %v1428 = vrot.slane %v314, %v1427
      %v1429 = vlaneseq
      %v1430 = vshrl.u32 %v1429, 7
      %v1431 = vsub.s32 3, %v1430
      %v1432 = vrot.slane %v315, %v1431
      %v1433 = vlaneseq
      %v1434 = vshrl.u32 %v1433, 7
      %v1435 = vsub.s32 7, %v1434
      %v1436 = vrot.slane %v315, %v1435
      %v1437 = vlaneseq
      %v1438 = vshrl.u32 %v1437, 7
      %v1439 = vsub.s32 3, %v1438
      %v1440 = vrot.slane %v316, %v1439
      %v1441 = vlaneseq
      %v1442 = vshrl.u32 %v1441, 7
      %v1443 = vsub.s32 7, %v1442
      %v1444 = vrot.slane %v316, %v1443
      %v1445 = vlaneseq
      %v1446 = vshrl.u32 %v1445, 7
      %v1447 = vsub.s32 3, %v1446
      %v1448 = vrot.slane %v317, %v1447
      %v1449 = vlaneseq
      %v1450 = vshrl.u32 %v1449, 7
      %v1451 = vsub.s32 7, %v1450
      %v1452 = vrot.slane %v317, %v1451
      %v1453 = vlaneseq
      %v1454 = vshrl.u32 %v1453, 7
      %v1455 = vsub.s32 3, %v1454
      %v1456 = vrot.slane %v318, %v1455
      %v1457 = vlaneseq
      %v1458 = vshrl.u32 %v1457, 7
      %v1459 = vsub.s32 7, %v1458
      %v1460 = vrot.slane %v318, %v1459
      %v1461 = vlaneseq
      %v1462 = vshrl.u32 %v1461, 7
      %v1463 = vsub.s32 3, %v1462
      %v1464 = vrot.slane %v319, %v1463
      %v1465 = vlaneseq
      %v1466 = vshrl.u32 %v1465, 7
      %v1467 = vsub.s32 7, %v1466
      %v1468 = vrot.slane %v319, %v1467
      %v1469 = vlaneseq
      %v1470 = vshrl.u32 %v1469, 7
      %v1471 = vsub.s32 3, %v1470
      %v1472 = vrot.slane %v320, %v1471
      %v1473 = vlaneseq
      %v1474 = vshrl.u32 %v1473, 7
      %v1475 = vsub.s32 7, %v1474
      %v1476 = vrot.slane %v320, %v1475
      %v1477 = vlaneseq
      %v1478 = vshrl.u32 %v1477, 7
      %v1479 = vsub.s32 3, %v1478
      %v1480 = vrot.slane %v321, %v1479
      %v1481 = vlaneseq
      %v1482 = vshrl.u32 %v1481, 7
      %v1483 = vsub.s32 7, %v1482
      %v1484 = vrot.slane %v321, %v1483
      %v1485 = vlaneseq
      %v1486 = vshrl.u32 %v1485, 7
      %v1487 = vsub.s32 3, %v1486
      %v1488 = vrot.slane %v322, %v1487
      %v1489 = vlaneseq
      %v1490 = vshrl.u32 %v1489, 7
      %v1491 = vsub.s32 7, %v1490
      %v1492 = vrot.slane %v322, %v1491
      %v1493 = vlaneseq
      %v1494 = vshrl.u32 %v1493, 7
      %v1495 = vsub.s32 3, %v1494
      %v1496 = vrot.slane %v323, %v1495
      %v1497 = vlaneseq
      %v1498 = vshrl.u32 %v1497, 7
      %v1499 = vsub.s32 7, %v1498
      %v1500 = vrot.slane %v323, %v1499
      %v1501 = vlaneseq
      %v1502 = vshrl.u32 %v1501, 7
      %v1503 = vsub.s32 3, %v1502
      %v1504 = vrot.slane %v324, %v1503
      %v1505 = vlaneseq
      %v1506 = vshrl.u32 %v1505, 7
      %v1507 = vsub.s32 7, %v1506
      %v1508 = vrot.slane %v324, %v1507
      %v1509 = vlaneseq
      %v1510 = vshrl.u32 %v1509, 7
      %v1511 = vsub.s32 3, %v1510
      %v1512 = vrot.slane %v325, %v1511
      %v1513 = vlaneseq
      %v1514 = vshrl.u32 %v1513, 7
      %v1515 = vsub.s32 7, %v1514
      %v1516 = vrot.slane %v325, %v1515
      %v1517 = vlaneseq
      %v1518 = vshrl.u32 %v1517, 7
      %v1519 = vsub.s32 3, %v1518
      %v1520 = vrot.slane %v326, %v1519
      %v1521 = vlaneseq
      %v1522 = vshrl.u32 %v1521, 7
      %v1523 = vsub.s32 7, %v1522
      %v1524 = vrot.slane %v326, %v1523
      %v1525 = vlaneseq
      %v1526 = vshrl.u32 %v1525, 7
      %v1527 = vsub.s32 3, %v1526
      %v1528 = vrot.slane %v327, %v1527
      %v1529 = vlaneseq
      %v1530 = vshrl.u32 %v1529, 7
      %v1531 = vsub.s32 7, %v1530
      %v1532 = vrot.slane %v327, %v1531
      %v1565 = vlaneseq
      %v1566 = vshrl.u32 %v1565, 7
      %v1567 = vsub.s32 3, %v1566
      %v1568 = vrot.slane %v1408, %v1567
      %v1569 = vlaneseq
      %v1570 = vshrl.u32 %v1569, 7
      %v1571 = vsub.s32 3, %v1570
      %v1572 = vrot.slane %v1412, %v1571
      %v1573 = vlaneseq
      %v1574 = vshrl.u32 %v1573, 7
      %v1575 = vsub.s32 3, %v1574
      %v1576 = vrot.slane %v1416, %v1575
      %v1577 = vlaneseq
      %v1578 = vshrl.u32 %v1577, 7
      %v1579 = vsub.s32 3, %v1578
      %v1580 = vrot.slane %v1420, %v1579
      %v1581 = vlaneseq
      %v1582 = vshrl.u32 %v1581, 7
      %v1583 = vsub.s32 3, %v1582
      %v1584 = vrot.slane %v1424, %v1583
      %v1585 = vlaneseq
      %v1586 = vshrl.u32 %v1585, 7
      %v1587 = vsub.s32 3, %v1586
      %v1588 = vrot.slane %v1428, %v1587
      %v1589 = vlaneseq
      %v1590 = vshrl.u32 %v1589, 7
      %v1591 = vsub.s32 3, %v1590
      %v1592 = vrot.slane %v1432, %v1591
      %v1593 = vlaneseq
      %v1594 = vshrl.u32 %v1593, 7
      %v1595 = vsub.s32 3, %v1594
      %v1596 = vrot.slane %v1436, %v1595
      %v1597 = vlaneseq
      %v1598 = vshrl.u32 %v1597, 7
      %v1599 = vsub.s32 3, %v1598
      %v1600 = vrot.slane %v1440, %v1599
      %v1601 = vlaneseq
      %v1602 = vshrl.u32 %v1601, 7
      %v1603 = vsub.s32 3, %v1602
      %v1604 = vrot.slane %v1444, %v1603
      %v1605 = vlaneseq
      %v1606 = vshrl.u32 %v1605, 7
      %v1607 = vsub.s32 3, %v1606
      %v1608 = vrot.slane %v1448, %v1607
      %v1609 = vlaneseq
      %v1610 = vshrl.u32 %v1609, 7
      %v1611 = vsub.s32 3, %v1610
      %v1612 = vrot.slane %v1452, %v1611
      %v1613 = vlaneseq
      %v1614 = vshrl.u32 %v1613, 7
      %v1615 = vsub.s32 3, %v1614
      %v1616 = vrot.slane %v1456, %v1615
      %v1617 = vlaneseq
      %v1618 = vshrl.u32 %v1617, 7
      %v1619 = vsub.s32 3, %v1618
      %v1620 = vrot.slane %v1460, %v1619
      %v1621 = vlaneseq
      %v1622 = vshrl.u32 %v1621, 7
      %v1623 = vsub.s32 3, %v1622
      %v1624 = vrot.slane %v1464, %v1623
      %v1625 = vlaneseq
      %v1626 = vshrl.u32 %v1625, 7
      %v1627 = vsub.s32 3, %v1626
      %v1628 = vrot.slane %v1468, %v1627
      %v1629 = vlaneseq
      %v1630 = vshrl.u32 %v1629, 7
      %v1631 = vsub.s32 3, %v1630
      %v1632 = vrot.slane %v1472, %v1631
      %v1633 = vlaneseq
      %v1634 = vshrl.u32 %v1633, 7
      %v1635 = vsub.s32 3, %v1634
      %v1636 = vrot.slane %v1476, %v1635
      %v1637 = vlaneseq
      %v1638 = vshrl.u32 %v1637, 7
      %v1639 = vsub.s32 3, %v1638
      %v1640 = vrot.slane %v1480, %v1639
      %v1641 = vlaneseq
      %v1642 = vshrl.u32 %v1641, 7
      %v1643 = vsub.s32 3, %v1642
      %v1644 = vrot.slane %v1484, %v1643
      %v1645 = vlaneseq
      %v1646 = vshrl.u32 %v1645, 7
      %v1647 = vsub.s32 3, %v1646
      %v1648 = vrot.slane %v1488, %v1647
      %v1649 = vlaneseq
      %v1650 = vshrl.u32 %v1649, 7
      %v1651 = vsub.s32 3, %v1650
      %v1652 = vrot.slane %v1492, %v1651
      %v1653 = vlaneseq
      %v1654 = vshrl.u32 %v1653, 7
      %v1655 = vsub.s32 3, %v1654
      %v1656 = vrot.slane %v1496, %v1655
      %v1657 = vlaneseq
      %v1658 = vshrl.u32 %v1657, 7
      %v1659 = vsub.s32 3, %v1658
      %v1660 = vrot.slane %v1500, %v1659
      %v1661 = vlaneseq
      %v1662 = vshrl.u32 %v1661, 7
      %v1663 = vsub.s32 3, %v1662
      %v1664 = vrot.slane %v1504, %v1663
      %v1665 = vlaneseq
      %v1666 = vshrl.u32 %v1665, 7
      %v1667 = vsub.s32 3, %v1666
      %v1668 = vrot.slane %v1508, %v1667
      %v1669 = vlaneseq
      %v1670 = vshrl.u32 %v1669, 7
      %v1671 = vsub.s32 3, %v1670
      %v1672 = vrot.slane %v1512, %v1671
      %v1673 = vlaneseq
      %v1674 = vshrl.u32 %v1673, 7
      %v1675 = vsub.s32 3, %v1674
      %v1676 = vrot.slane %v1516, %v1675
      %v1677 = vlaneseq
      %v1678 = vshrl.u32 %v1677, 7
      %v1679 = vsub.s32 3, %v1678
      %v1680 = vrot.slane %v1520, %v1679
      %v1681 = vlaneseq
      %v1682 = vshrl.u32 %v1681, 7
      %v1683 = vsub.s32 3, %v1682
      %v1684 = vrot.slane %v1524, %v1683
      %v1685 = vlaneseq
      %v1686 = vshrl.u32 %v1685, 7
      %v1687 = vsub.s32 3, %v1686
      %v1688 = vrot.slane %v1528, %v1687
      %v1689 = vlaneseq
      %v1690 = vshrl.u32 %v1689, 7
      %v1691 = vsub.s32 3, %v1690
      %v1692 = vrot.slane %v1532, %v1691
      %v1693 = vmul.f32 %v1403, %v1568
      %v1694 = vmul.f32 %v1403, %v1572
      %v1695 = vmul.f32 %v1403, %v1576
      %v1696 = vmul.f32 %v1403, %v1580
      %v1697 = vmul.f32 %v1403, %v1584
      %v1698 = vmul.f32 %v1403, %v1588
      %v1699 = vmul.f32 %v1403, %v1592
      %v1700 = vmul.f32 %v1403, %v1596
      %v1701 = vmul.f32 %v1403, %v1600
      %v1702 = vmul.f32 %v1403, %v1604
      %v1703 = vmul.f32 %v1403, %v1608
      %v1704 = vmul.f32 %v1403, %v1612
      %v1705 = vmul.f32 %v1403, %v1616
      %v1706 = vmul.f32 %v1403, %v1620
      %v1707 = vmul.f32 %v1403, %v1624
      %v1708 = vmul.f32 %v1403, %v1628
      %v1709 = vmul.f32 %v1403, %v1632
      %v1710 = vmul.f32 %v1403, %v1636
      %v1711 = vmul.f32 %v1403, %v1640
      %v1712 = vmul.f32 %v1403, %v1644
      %v1713 = vmul.f32 %v1403, %v1648
      %v1714 = vmul.f32 %v1403, %v1652
      %v1715 = vmul.f32 %v1403, %v1656
      %v1716 = vmul.f32 %v1403, %v1660
      %v1717 = vmul.f32 %v1403, %v1664
      %v1718 = vmul.f32 %v1403, %v1668
      %v1719 = vmul.f32 %v1403, %v1672
      %v1720 = vmul.f32 %v1403, %v1676
      %v1721 = vmul.f32 %v1403, %v1680
      %v1722 = vmul.f32 %v1403, %v1684
      %v1723 = vmul.f32 %v1403, %v1688
      %v1724 = vmul.f32 %v1403, %v1692
      %v1725 = vadd.f32 %v1369, %v1693
      %v1726 = vadd.f32 %v1370, %v1694
      %v1727 = vadd.f32 %v1371, %v1695
      %v1728 = vadd.f32 %v1372, %v1696
      %v1729 = vadd.f32 %v1373, %v1697
      %v1730 = vadd.f32 %v1374, %v1698
      %v1731 = vadd.f32 %v1375, %v1699
      %v1732 = vadd.f32 %v1376, %v1700
      %v1733 = vadd.f32 %v1377, %v1701
      %v1734 = vadd.f32 %v1378, %v1702
      %v1735 = vadd.f32 %v1379, %v1703
      %v1736 = vadd.f32 %v1380, %v1704
      %v1737 = vadd.f32 %v1381, %v1705
      %v1738 = vadd.f32 %v1382, %v1706
      %v1739 = vadd.f32 %v1383, %v1707
      %v1740 = vadd.f32 %v1384, %v1708
      %v1741 = vadd.f32 %v1385, %v1709
      %v1742 = vadd.f32 %v1386, %v1710
      %v1743 = vadd.f32 %v1387, %v1711
      %v1744 = vadd.f32 %v1388, %v1712
      %v1745 = vadd.f32 %v1389, %v1713
      %v1746 = vadd.f32 %v1390, %v1714
      %v1747 = vadd.f32 %v1391, %v1715
      %v1748 = vadd.f32 %v1392, %v1716
      %v1749 = vadd.f32 %v1393, %v1717
      %v1750 = vadd.f32 %v1394, %v1718
      %v1751 = vadd.f32 %v1395, %v1719
      %v1752 = vadd.f32 %v1396, %v1720
      %v1753 = vadd.f32 %v1397, %v1721
      %v1754 = vadd.f32 %v1398, %v1722
      %v1755 = vadd.f32 %v1399, %v1723
      %v1756 = vadd.f32 %v1400, %v1724
      %1758 = vset.pattern.permute.xlu0 0
      %1759 = vperm.xlu0 %1758, %v345
      %v1760 = vpop.permute.xlu0 %1759
      %v1778 = vlaneseq
      %v1779 = vshrl.u32 %v1778, 7
      %v1780 = vsub.s32 0, %v1779
      %v1781 = vrot.slane %v328, %v1780
      %v1782 = vlaneseq
      %v1783 = vshrl.u32 %v1782, 7
      %v1784 = vsub.s32 4, %v1783
      %v1785 = vrot.slane %v328, %v1784
      %v1786 = vlaneseq
      %v1787 = vshrl.u32 %v1786, 7
      %v1788 = vsub.s32 0, %v1787
      %v1789 = vrot.slane %v329, %v1788
      %v1790 = vlaneseq
      %v1791 = vshrl.u32 %v1790, 7
      %v1792 = vsub.s32 4, %v1791
      %v1793 = vrot.slane %v329, %v1792
      %v1794 = vlaneseq
      %v1795 = vshrl.u32 %v1794, 7
      %v1796 = vsub.s32 0, %v1795
      %v1797 = vrot.slane %v330, %v1796
      %v1798 = vlaneseq
      %v1799 = vshrl.u32 %v1798, 7
      %v1800 = vsub.s32 4, %v1799
      %v1801 = vrot.slane %v330, %v1800
      %v1802 = vlaneseq
      %v1803 = vshrl.u32 %v1802, 7
      %v1804 = vsub.s32 0, %v1803
      %v1805 = vrot.slane %v331, %v1804
      %v1806 = vlaneseq
      %v1807 = vshrl.u32 %v1806, 7
      %v1808 = vsub.s32 4, %v1807
      %v1809 = vrot.slane %v331, %v1808
      %v1810 = vlaneseq
      %v1811 = vshrl.u32 %v1810, 7
      %v1812 = vsub.s32 0, %v1811
      %v1813 = vrot.slane %v332, %v1812
      %v1814 = vlaneseq
      %v1815 = vshrl.u32 %v1814, 7
      %v1816 = vsub.s32 4, %v1815
      %v1817 = vrot.slane %v332, %v1816
      %v1818 = vlaneseq
      %v1819 = vshrl.u32 %v1818, 7
      %v1820 = vsub.s32 0, %v1819
      %v1821 = vrot.slane %v333, %v1820
      %v1822 = vlaneseq
      %v1823 = vshrl.u32 %v1822, 7
      %v1824 = vsub.s32 4, %v1823
      %v1825 = vrot.slane %v333, %v1824
      %v1826 = vlaneseq
      %v1827 = vshrl.u32 %v1826, 7
      %v1828 = vsub.s32 0, %v1827
      %v1829 = vrot.slane %v334, %v1828
      %v1830 = vlaneseq
      %v1831 = vshrl.u32 %v1830, 7
      %v1832 = vsub.s32 4, %v1831
      %v1833 = vrot.slane %v334, %v1832
      %v1834 = vlaneseq
      %v1835 = vshrl.u32 %v1834, 7
      %v1836 = vsub.s32 0, %v1835
      %v1837 = vrot.slane %v335, %v1836
      %v1838 = vlaneseq
      %v1839 = vshrl.u32 %v1838, 7
      %v1840 = vsub.s32 4, %v1839
      %v1841 = vrot.slane %v335, %v1840
      %v1842 = vlaneseq
      %v1843 = vshrl.u32 %v1842, 7
      %v1844 = vsub.s32 0, %v1843
      %v1845 = vrot.slane %v336, %v1844
      %v1846 = vlaneseq
      %v1847 = vshrl.u32 %v1846, 7
      %v1848 = vsub.s32 4, %v1847
      %v1849 = vrot.slane %v336, %v1848
      %v1850 = vlaneseq
      %v1851 = vshrl.u32 %v1850, 7
      %v1852 = vsub.s32 0, %v1851
      %v1853 = vrot.slane %v337, %v1852
      %v1854 = vlaneseq
      %v1855 = vshrl.u32 %v1854, 7
      %v1856 = vsub.s32 4, %v1855
      %v1857 = vrot.slane %v337, %v1856
      %v1858 = vlaneseq
      %v1859 = vshrl.u32 %v1858, 7
      %v1860 = vsub.s32 0, %v1859
      %v1861 = vrot.slane %v338, %v1860
      %v1862 = vlaneseq
      %v1863 = vshrl.u32 %v1862, 7
      %v1864 = vsub.s32 4, %v1863
      %v1865 = vrot.slane %v338, %v1864
      %v1866 = vlaneseq
      %v1867 = vshrl.u32 %v1866, 7
      %v1868 = vsub.s32 0, %v1867
      %v1869 = vrot.slane %v339, %v1868
      %v1870 = vlaneseq
      %v1871 = vshrl.u32 %v1870, 7
      %v1872 = vsub.s32 4, %v1871
      %v1873 = vrot.slane %v339, %v1872
      %v1874 = vlaneseq
      %v1875 = vshrl.u32 %v1874, 7
      %v1876 = vsub.s32 0, %v1875
      %v1877 = vrot.slane %v340, %v1876
      %v1878 = vlaneseq
      %v1879 = vshrl.u32 %v1878, 7
      %v1880 = vsub.s32 4, %v1879
      %v1881 = vrot.slane %v340, %v1880
      %v1882 = vlaneseq
      %v1883 = vshrl.u32 %v1882, 7
      %v1884 = vsub.s32 0, %v1883
      %v1885 = vrot.slane %v341, %v1884
      %v1886 = vlaneseq
      %v1887 = vshrl.u32 %v1886, 7
      %v1888 = vsub.s32 4, %v1887
      %v1889 = vrot.slane %v341, %v1888
      %v1890 = vlaneseq
      %v1891 = vshrl.u32 %v1890, 7
      %v1892 = vsub.s32 0, %v1891
      %v1893 = vrot.slane %v342, %v1892
      %v1894 = vlaneseq
      %v1895 = vshrl.u32 %v1894, 7
      %v1896 = vsub.s32 4, %v1895
      %v1897 = vrot.slane %v342, %v1896
      %v1898 = vlaneseq
      %v1899 = vshrl.u32 %v1898, 7
      %v1900 = vsub.s32 0, %v1899
      %v1901 = vrot.slane %v343, %v1900
      %v1902 = vlaneseq
      %v1903 = vshrl.u32 %v1902, 7
      %v1904 = vsub.s32 4, %v1903
      %v1905 = vrot.slane %v343, %v1904
      %v1938 = vlaneseq
      %v1939 = vshrl.u32 %v1938, 7
      %v1940 = vsub.s32 0, %v1939
      %v1941 = vrot.slane %v1781, %v1940
      %v1942 = vlaneseq
      %v1943 = vshrl.u32 %v1942, 7
      %v1944 = vsub.s32 0, %v1943
      %v1945 = vrot.slane %v1785, %v1944
      %v1946 = vlaneseq
      %v1947 = vshrl.u32 %v1946, 7
      %v1948 = vsub.s32 0, %v1947
      %v1949 = vrot.slane %v1789, %v1948
      %v1950 = vlaneseq
      %v1951 = vshrl.u32 %v1950, 7
      %v1952 = vsub.s32 0, %v1951
      %v1953 = vrot.slane %v1793, %v1952
      %v1954 = vlaneseq
      %v1955 = vshrl.u32 %v1954, 7
      %v1956 = vsub.s32 0, %v1955
      %v1957 = vrot.slane %v1797, %v1956
      %v1958 = vlaneseq
      %v1959 = vshrl.u32 %v1958, 7
      %v1960 = vsub.s32 0, %v1959
      %v1961 = vrot.slane %v1801, %v1960
      %v1962 = vlaneseq
      %v1963 = vshrl.u32 %v1962, 7
      %v1964 = vsub.s32 0, %v1963
      %v1965 = vrot.slane %v1805, %v1964
      %v1966 = vlaneseq
      %v1967 = vshrl.u32 %v1966, 7
      %v1968 = vsub.s32 0, %v1967
      %v1969 = vrot.slane %v1809, %v1968
      %v1970 = vlaneseq
      %v1971 = vshrl.u32 %v1970, 7
      %v1972 = vsub.s32 0, %v1971
      %v1973 = vrot.slane %v1813, %v1972
      %v1974 = vlaneseq
      %v1975 = vshrl.u32 %v1974, 7
      %v1976 = vsub.s32 0, %v1975
      %v1977 = vrot.slane %v1817, %v1976
      %v1978 = vlaneseq
      %v1979 = vshrl.u32 %v1978, 7
      %v1980 = vsub.s32 0, %v1979
      %v1981 = vrot.slane %v1821, %v1980
      %v1982 = vlaneseq
      %v1983 = vshrl.u32 %v1982, 7
      %v1984 = vsub.s32 0, %v1983
      %v1985 = vrot.slane %v1825, %v1984
      %v1986 = vlaneseq
      %v1987 = vshrl.u32 %v1986, 7
      %v1988 = vsub.s32 0, %v1987
      %v1989 = vrot.slane %v1829, %v1988
      %v1990 = vlaneseq
      %v1991 = vshrl.u32 %v1990, 7
      %v1992 = vsub.s32 0, %v1991
      %v1993 = vrot.slane %v1833, %v1992
      %v1994 = vlaneseq
      %v1995 = vshrl.u32 %v1994, 7
      %v1996 = vsub.s32 0, %v1995
      %v1997 = vrot.slane %v1837, %v1996
      %v1998 = vlaneseq
      %v1999 = vshrl.u32 %v1998, 7
      %v2000 = vsub.s32 0, %v1999
      %v2001 = vrot.slane %v1841, %v2000
      %v2002 = vlaneseq
      %v2003 = vshrl.u32 %v2002, 7
      %v2004 = vsub.s32 0, %v2003
      %v2005 = vrot.slane %v1845, %v2004
      %v2006 = vlaneseq
      %v2007 = vshrl.u32 %v2006, 7
      %v2008 = vsub.s32 0, %v2007
      %v2009 = vrot.slane %v1849, %v2008
      %v2010 = vlaneseq
      %v2011 = vshrl.u32 %v2010, 7
      %v2012 = vsub.s32 0, %v2011
      %v2013 = vrot.slane %v1853, %v2012
      %v2014 = vlaneseq
      %v2015 = vshrl.u32 %v2014, 7
      %v2016 = vsub.s32 0, %v2015
      %v2017 = vrot.slane %v1857, %v2016
      %v2018 = vlaneseq
      %v2019 = vshrl.u32 %v2018, 7
      %v2020 = vsub.s32 0, %v2019
      %v2021 = vrot.slane %v1861, %v2020
      %v2022 = vlaneseq
      %v2023 = vshrl.u32 %v2022, 7
      %v2024 = vsub.s32 0, %v2023
      %v2025 = vrot.slane %v1865, %v2024
      %v2026 = vlaneseq
      %v2027 = vshrl.u32 %v2026, 7
      %v2028 = vsub.s32 0, %v2027
      %v2029 = vrot.slane %v1869, %v2028
      %v2030 = vlaneseq
      %v2031 = vshrl.u32 %v2030, 7
      %v2032 = vsub.s32 0, %v2031
      %v2033 = vrot.slane %v1873, %v2032
      %v2034 = vlaneseq
      %v2035 = vshrl.u32 %v2034, 7
      %v2036 = vsub.s32 0, %v2035
      %v2037 = vrot.slane %v1877, %v2036
      %v2038 = vlaneseq
      %v2039 = vshrl.u32 %v2038, 7
      %v2040 = vsub.s32 0, %v2039
      %v2041 = vrot.slane %v1881, %v2040
      %v2042 = vlaneseq
      %v2043 = vshrl.u32 %v2042, 7
      %v2044 = vsub.s32 0, %v2043
      %v2045 = vrot.slane %v1885, %v2044
      %v2046 = vlaneseq
      %v2047 = vshrl.u32 %v2046, 7
      %v2048 = vsub.s32 0, %v2047
      %v2049 = vrot.slane %v1889, %v2048
      %v2050 = vlaneseq
      %v2051 = vshrl.u32 %v2050, 7
      %v2052 = vsub.s32 0, %v2051
      %v2053 = vrot.slane %v1893, %v2052
      %v2054 = vlaneseq
      %v2055 = vshrl.u32 %v2054, 7
      %v2056 = vsub.s32 0, %v2055
      %v2057 = vrot.slane %v1897, %v2056
      %v2058 = vlaneseq
      %v2059 = vshrl.u32 %v2058, 7
      %v2060 = vsub.s32 0, %v2059
      %v2061 = vrot.slane %v1901, %v2060
      %v2062 = vlaneseq
      %v2063 = vshrl.u32 %v2062, 7
      %v2064 = vsub.s32 0, %v2063
      %v2065 = vrot.slane %v1905, %v2064
      %v2066 = vmul.f32 %v1760, %v1941
      %v2067 = vmul.f32 %v1760, %v1945
      %v2068 = vmul.f32 %v1760, %v1949
      %v2069 = vmul.f32 %v1760, %v1953
      %v2070 = vmul.f32 %v1760, %v1957
      %v2071 = vmul.f32 %v1760, %v1961
      %v2072 = vmul.f32 %v1760, %v1965
      %v2073 = vmul.f32 %v1760, %v1969
      %v2074 = vmul.f32 %v1760, %v1973
      %v2075 = vmul.f32 %v1760, %v1977
      %v2076 = vmul.f32 %v1760, %v1981
      %v2077 = vmul.f32 %v1760, %v1985
      %v2078 = vmul.f32 %v1760, %v1989
      %v2079 = vmul.f32 %v1760, %v1993
      %v2080 = vmul.f32 %v1760, %v1997
      %v2081 = vmul.f32 %v1760, %v2001
      %v2082 = vmul.f32 %v1760, %v2005
      %v2083 = vmul.f32 %v1760, %v2009
      %v2084 = vmul.f32 %v1760, %v2013
      %v2085 = vmul.f32 %v1760, %v2017
      %v2086 = vmul.f32 %v1760, %v2021
      %v2087 = vmul.f32 %v1760, %v2025
      %v2088 = vmul.f32 %v1760, %v2029
      %v2089 = vmul.f32 %v1760, %v2033
      %v2090 = vmul.f32 %v1760, %v2037
      %v2091 = vmul.f32 %v1760, %v2041
      %v2092 = vmul.f32 %v1760, %v2045
      %v2093 = vmul.f32 %v1760, %v2049
      %v2094 = vmul.f32 %v1760, %v2053
      %v2095 = vmul.f32 %v1760, %v2057
      %v2096 = vmul.f32 %v1760, %v2061
      %v2097 = vmul.f32 %v1760, %v2065
      %v2098 = vadd.f32 %v1725, %v2066
      %v2099 = vadd.f32 %v1726, %v2067
      %v2100 = vadd.f32 %v1727, %v2068
      %v2101 = vadd.f32 %v1728, %v2069
      %v2102 = vadd.f32 %v1729, %v2070
      %v2103 = vadd.f32 %v1730, %v2071
      %v2104 = vadd.f32 %v1731, %v2072
      %v2105 = vadd.f32 %v1732, %v2073
      %v2106 = vadd.f32 %v1733, %v2074
      %v2107 = vadd.f32 %v1734, %v2075
      %v2108 = vadd.f32 %v1735, %v2076
      %v2109 = vadd.f32 %v1736, %v2077
      %v2110 = vadd.f32 %v1737, %v2078
      %v2111 = vadd.f32 %v1738, %v2079
      %v2112 = vadd.f32 %v1739, %v2080
      %v2113 = vadd.f32 %v1740, %v2081
      %v2114 = vadd.f32 %v1741, %v2082
      %v2115 = vadd.f32 %v1742, %v2083
      %v2116 = vadd.f32 %v1743, %v2084
      %v2117 = vadd.f32 %v1744, %v2085
      %v2118 = vadd.f32 %v1745, %v2086
      %v2119 = vadd.f32 %v1746, %v2087
      %v2120 = vadd.f32 %v1747, %v2088
      %v2121 = vadd.f32 %v1748, %v2089
      %v2122 = vadd.f32 %v1749, %v2090
      %v2123 = vadd.f32 %v1750, %v2091
      %v2124 = vadd.f32 %v1751, %v2092
      %v2125 = vadd.f32 %v1752, %v2093
      %v2126 = vadd.f32 %v1753, %v2094
      %v2127 = vadd.f32 %v1754, %v2095
      %v2128 = vadd.f32 %v1755, %v2096
      %v2129 = vadd.f32 %v1756, %v2097
      %2130 = vset.pattern.permute.xlu0 1
      %2131 = vperm.xlu0 %2130, %v345
      %v2132 = vpop.permute.xlu0 %2131
      %v2134 = vlaneseq
      %v2135 = vshrl.u32 %v2134, 7
      %v2136 = vsub.s32 1, %v2135
      %v2137 = vrot.slane %v328, %v2136
      %v2138 = vlaneseq
      %v2139 = vshrl.u32 %v2138, 7
      %v2140 = vsub.s32 5, %v2139
      %v2141 = vrot.slane %v328, %v2140
      %v2142 = vlaneseq
      %v2143 = vshrl.u32 %v2142, 7
      %v2144 = vsub.s32 1, %v2143
      %v2145 = vrot.slane %v329, %v2144
      %v2146 = vlaneseq
      %v2147 = vshrl.u32 %v2146, 7
      %v2148 = vsub.s32 5, %v2147
      %v2149 = vrot.slane %v329, %v2148
      %v2150 = vlaneseq
      %v2151 = vshrl.u32 %v2150, 7
      %v2152 = vsub.s32 1, %v2151
      %v2153 = vrot.slane %v330, %v2152
      %v2154 = vlaneseq
      %v2155 = vshrl.u32 %v2154, 7
      %v2156 = vsub.s32 5, %v2155
      %v2157 = vrot.slane %v330, %v2156
      %v2158 = vlaneseq
      %v2159 = vshrl.u32 %v2158, 7
      %v2160 = vsub.s32 1, %v2159
      %v2161 = vrot.slane %v331, %v2160
      %v2162 = vlaneseq
      %v2163 = vshrl.u32 %v2162, 7
      %v2164 = vsub.s32 5, %v2163
      %v2165 = vrot.slane %v331, %v2164
      %v2166 = vlaneseq
      %v2167 = vshrl.u32 %v2166, 7
      %v2168 = vsub.s32 1, %v2167
      %v2169 = vrot.slane %v332, %v2168
      %v2170 = vlaneseq
      %v2171 = vshrl.u32 %v2170, 7
      %v2172 = vsub.s32 5, %v2171
      %v2173 = vrot.slane %v332, %v2172
      %v2174 = vlaneseq
      %v2175 = vshrl.u32 %v2174, 7
      %v2176 = vsub.s32 1, %v2175
      %v2177 = vrot.slane %v333, %v2176
      %v2178 = vlaneseq
      %v2179 = vshrl.u32 %v2178, 7
      %v2180 = vsub.s32 5, %v2179
      %v2181 = vrot.slane %v333, %v2180
      %v2182 = vlaneseq
      %v2183 = vshrl.u32 %v2182, 7
      %v2184 = vsub.s32 1, %v2183
      %v2185 = vrot.slane %v334, %v2184
      %v2186 = vlaneseq
      %v2187 = vshrl.u32 %v2186, 7
      %v2188 = vsub.s32 5, %v2187
      %v2189 = vrot.slane %v334, %v2188
      %v2190 = vlaneseq
      %v2191 = vshrl.u32 %v2190, 7
      %v2192 = vsub.s32 1, %v2191
      %v2193 = vrot.slane %v335, %v2192
      %v2194 = vlaneseq
      %v2195 = vshrl.u32 %v2194, 7
      %v2196 = vsub.s32 5, %v2195
      %v2197 = vrot.slane %v335, %v2196
      %v2198 = vlaneseq
      %v2199 = vshrl.u32 %v2198, 7
      %v2200 = vsub.s32 1, %v2199
      %v2201 = vrot.slane %v336, %v2200
      %v2202 = vlaneseq
      %v2203 = vshrl.u32 %v2202, 7
      %v2204 = vsub.s32 5, %v2203
      %v2205 = vrot.slane %v336, %v2204
      %v2206 = vlaneseq
      %v2207 = vshrl.u32 %v2206, 7
      %v2208 = vsub.s32 1, %v2207
      %v2209 = vrot.slane %v337, %v2208
      %v2210 = vlaneseq
      %v2211 = vshrl.u32 %v2210, 7
      %v2212 = vsub.s32 5, %v2211
      %v2213 = vrot.slane %v337, %v2212
      %v2214 = vlaneseq
      %v2215 = vshrl.u32 %v2214, 7
      %v2216 = vsub.s32 1, %v2215
      %v2217 = vrot.slane %v338, %v2216
      %v2218 = vlaneseq
      %v2219 = vshrl.u32 %v2218, 7
      %v2220 = vsub.s32 5, %v2219
      %v2221 = vrot.slane %v338, %v2220
      %v2222 = vlaneseq
      %v2223 = vshrl.u32 %v2222, 7
      %v2224 = vsub.s32 1, %v2223
      %v2225 = vrot.slane %v339, %v2224
      %v2226 = vlaneseq
      %v2227 = vshrl.u32 %v2226, 7
      %v2228 = vsub.s32 5, %v2227
      %v2229 = vrot.slane %v339, %v2228
      %v2230 = vlaneseq
      %v2231 = vshrl.u32 %v2230, 7
      %v2232 = vsub.s32 1, %v2231
      %v2233 = vrot.slane %v340, %v2232
      %v2234 = vlaneseq
      %v2235 = vshrl.u32 %v2234, 7
      %v2236 = vsub.s32 5, %v2235
      %v2237 = vrot.slane %v340, %v2236
      %v2238 = vlaneseq
      %v2239 = vshrl.u32 %v2238, 7
      %v2240 = vsub.s32 1, %v2239
      %v2241 = vrot.slane %v341, %v2240
      %v2242 = vlaneseq
      %v2243 = vshrl.u32 %v2242, 7
      %v2244 = vsub.s32 5, %v2243
      %v2245 = vrot.slane %v341, %v2244
      %v2246 = vlaneseq
      %v2247 = vshrl.u32 %v2246, 7
      %v2248 = vsub.s32 1, %v2247
      %v2249 = vrot.slane %v342, %v2248
      %v2250 = vlaneseq
      %v2251 = vshrl.u32 %v2250, 7
      %v2252 = vsub.s32 5, %v2251
      %v2253 = vrot.slane %v342, %v2252
      %v2254 = vlaneseq
      %v2255 = vshrl.u32 %v2254, 7
      %v2256 = vsub.s32 1, %v2255
      %v2257 = vrot.slane %v343, %v2256
      %v2258 = vlaneseq
      %v2259 = vshrl.u32 %v2258, 7
      %v2260 = vsub.s32 5, %v2259
      %v2261 = vrot.slane %v343, %v2260
      %v2294 = vlaneseq
      %v2295 = vshrl.u32 %v2294, 7
      %v2296 = vsub.s32 1, %v2295
      %v2297 = vrot.slane %v2137, %v2296
      %v2298 = vlaneseq
      %v2299 = vshrl.u32 %v2298, 7
      %v2300 = vsub.s32 1, %v2299
      %v2301 = vrot.slane %v2141, %v2300
      %v2302 = vlaneseq
      %v2303 = vshrl.u32 %v2302, 7
      %v2304 = vsub.s32 1, %v2303
      %v2305 = vrot.slane %v2145, %v2304
      %v2306 = vlaneseq
      %v2307 = vshrl.u32 %v2306, 7
      %v2308 = vsub.s32 1, %v2307
      %v2309 = vrot.slane %v2149, %v2308
      %v2310 = vlaneseq
      %v2311 = vshrl.u32 %v2310, 7
      %v2312 = vsub.s32 1, %v2311
      %v2313 = vrot.slane %v2153, %v2312
      %v2314 = vlaneseq
      %v2315 = vshrl.u32 %v2314, 7
      %v2316 = vsub.s32 1, %v2315
      %v2317 = vrot.slane %v2157, %v2316
      %v2318 = vlaneseq
      %v2319 = vshrl.u32 %v2318, 7
      %v2320 = vsub.s32 1, %v2319
      %v2321 = vrot.slane %v2161, %v2320
      %v2322 = vlaneseq
      %v2323 = vshrl.u32 %v2322, 7
      %v2324 = vsub.s32 1, %v2323
      %v2325 = vrot.slane %v2165, %v2324
      %v2326 = vlaneseq
      %v2327 = vshrl.u32 %v2326, 7
      %v2328 = vsub.s32 1, %v2327
      %v2329 = vrot.slane %v2169, %v2328
      %v2330 = vlaneseq
      %v2331 = vshrl.u32 %v2330, 7
      %v2332 = vsub.s32 1, %v2331
      %v2333 = vrot.slane %v2173, %v2332
      %v2334 = vlaneseq
      %v2335 = vshrl.u32 %v2334, 7
      %v2336 = vsub.s32 1, %v2335
      %v2337 = vrot.slane %v2177, %v2336
      %v2338 = vlaneseq
      %v2339 = vshrl.u32 %v2338, 7
      %v2340 = vsub.s32 1, %v2339
      %v2341 = vrot.slane %v2181, %v2340
      %v2342 = vlaneseq
      %v2343 = vshrl.u32 %v2342, 7
      %v2344 = vsub.s32 1, %v2343
      %v2345 = vrot.slane %v2185, %v2344
      %v2346 = vlaneseq
      %v2347 = vshrl.u32 %v2346, 7
      %v2348 = vsub.s32 1, %v2347
      %v2349 = vrot.slane %v2189, %v2348
      %v2350 = vlaneseq
      %v2351 = vshrl.u32 %v2350, 7
      %v2352 = vsub.s32 1, %v2351
      %v2353 = vrot.slane %v2193, %v2352
      %v2354 = vlaneseq
      %v2355 = vshrl.u32 %v2354, 7
      %v2356 = vsub.s32 1, %v2355
      %v2357 = vrot.slane %v2197, %v2356
      %v2358 = vlaneseq
      %v2359 = vshrl.u32 %v2358, 7
      %v2360 = vsub.s32 1, %v2359
      %v2361 = vrot.slane %v2201, %v2360
      %v2362 = vlaneseq
      %v2363 = vshrl.u32 %v2362, 7
      %v2364 = vsub.s32 1, %v2363
      %v2365 = vrot.slane %v2205, %v2364
      %v2366 = vlaneseq
      %v2367 = vshrl.u32 %v2366, 7
      %v2368 = vsub.s32 1, %v2367
      %v2369 = vrot.slane %v2209, %v2368
      %v2370 = vlaneseq
      %v2371 = vshrl.u32 %v2370, 7
      %v2372 = vsub.s32 1, %v2371
      %v2373 = vrot.slane %v2213, %v2372
      %v2374 = vlaneseq
      %v2375 = vshrl.u32 %v2374, 7
      %v2376 = vsub.s32 1, %v2375
      %v2377 = vrot.slane %v2217, %v2376
      %v2378 = vlaneseq
      %v2379 = vshrl.u32 %v2378, 7
      %v2380 = vsub.s32 1, %v2379
      %v2381 = vrot.slane %v2221, %v2380
      %v2382 = vlaneseq
      %v2383 = vshrl.u32 %v2382, 7
      %v2384 = vsub.s32 1, %v2383
      %v2385 = vrot.slane %v2225, %v2384
      %v2386 = vlaneseq
      %v2387 = vshrl.u32 %v2386, 7
      %v2388 = vsub.s32 1, %v2387
      %v2389 = vrot.slane %v2229, %v2388
      %v2390 = vlaneseq
      %v2391 = vshrl.u32 %v2390, 7
      %v2392 = vsub.s32 1, %v2391
      %v2393 = vrot.slane %v2233, %v2392
      %v2394 = vlaneseq
      %v2395 = vshrl.u32 %v2394, 7
      %v2396 = vsub.s32 1, %v2395
      %v2397 = vrot.slane %v2237, %v2396
      %v2398 = vlaneseq
      %v2399 = vshrl.u32 %v2398, 7
      %v2400 = vsub.s32 1, %v2399
      %v2401 = vrot.slane %v2241, %v2400
      %v2402 = vlaneseq
      %v2403 = vshrl.u32 %v2402, 7
      %v2404 = vsub.s32 1, %v2403
      %v2405 = vrot.slane %v2245, %v2404
      %v2406 = vlaneseq
      %v2407 = vshrl.u32 %v2406, 7
      %v2408 = vsub.s32 1, %v2407
      %v2409 = vrot.slane %v2249, %v2408
      %v2410 = vlaneseq
      %v2411 = vshrl.u32 %v2410, 7
      %v2412 = vsub.s32 1, %v2411
      %v2413 = vrot.slane %v2253, %v2412
      %v2414 = vlaneseq
      %v2415 = vshrl.u32 %v2414, 7
      %v2416 = vsub.s32 1, %v2415
      %v2417 = vrot.slane %v2257, %v2416
      %v2418 = vlaneseq
      %v2419 = vshrl.u32 %v2418, 7
      %v2420 = vsub.s32 1, %v2419
      %v2421 = vrot.slane %v2261, %v2420
      %v2422 = vmul.f32 %v2132, %v2297
      %v2423 = vmul.f32 %v2132, %v2301
      %v2424 = vmul.f32 %v2132, %v2305
      %v2425 = vmul.f32 %v2132, %v2309
      %v2426 = vmul.f32 %v2132, %v2313
      %v2427 = vmul.f32 %v2132, %v2317
      %v2428 = vmul.f32 %v2132, %v2321
      %v2429 = vmul.f32 %v2132, %v2325
      %v2430 = vmul.f32 %v2132, %v2329
      %v2431 = vmul.f32 %v2132, %v2333
      %v2432 = vmul.f32 %v2132, %v2337
      %v2433 = vmul.f32 %v2132, %v2341
      %v2434 = vmul.f32 %v2132, %v2345
      %v2435 = vmul.f32 %v2132, %v2349
      %v2436 = vmul.f32 %v2132, %v2353
      %v2437 = vmul.f32 %v2132, %v2357
      %v2438 = vmul.f32 %v2132, %v2361
      %v2439 = vmul.f32 %v2132, %v2365
      %v2440 = vmul.f32 %v2132, %v2369
      %v2441 = vmul.f32 %v2132, %v2373
      %v2442 = vmul.f32 %v2132, %v2377
      %v2443 = vmul.f32 %v2132, %v2381
      %v2444 = vmul.f32 %v2132, %v2385
      %v2445 = vmul.f32 %v2132, %v2389
      %v2446 = vmul.f32 %v2132, %v2393
      %v2447 = vmul.f32 %v2132, %v2397
      %v2448 = vmul.f32 %v2132, %v2401
      %v2449 = vmul.f32 %v2132, %v2405
      %v2450 = vmul.f32 %v2132, %v2409
      %v2451 = vmul.f32 %v2132, %v2413
      %v2452 = vmul.f32 %v2132, %v2417
      %v2453 = vmul.f32 %v2132, %v2421
      %v2454 = vadd.f32 %v2098, %v2422
      %v2455 = vadd.f32 %v2099, %v2423
      %v2456 = vadd.f32 %v2100, %v2424
      %v2457 = vadd.f32 %v2101, %v2425
      %v2458 = vadd.f32 %v2102, %v2426
      %v2459 = vadd.f32 %v2103, %v2427
      %v2460 = vadd.f32 %v2104, %v2428
      %v2461 = vadd.f32 %v2105, %v2429
      %v2462 = vadd.f32 %v2106, %v2430
      %v2463 = vadd.f32 %v2107, %v2431
      %v2464 = vadd.f32 %v2108, %v2432
      %v2465 = vadd.f32 %v2109, %v2433
      %v2466 = vadd.f32 %v2110, %v2434
      %v2467 = vadd.f32 %v2111, %v2435
      %v2468 = vadd.f32 %v2112, %v2436
      %v2469 = vadd.f32 %v2113, %v2437
      %v2470 = vadd.f32 %v2114, %v2438
      %v2471 = vadd.f32 %v2115, %v2439
      %v2472 = vadd.f32 %v2116, %v2440
      %v2473 = vadd.f32 %v2117, %v2441
      %v2474 = vadd.f32 %v2118, %v2442
      %v2475 = vadd.f32 %v2119, %v2443
      %v2476 = vadd.f32 %v2120, %v2444
      %v2477 = vadd.f32 %v2121, %v2445
      %v2478 = vadd.f32 %v2122, %v2446
      %v2479 = vadd.f32 %v2123, %v2447
      %v2480 = vadd.f32 %v2124, %v2448
      %v2481 = vadd.f32 %v2125, %v2449
      %v2482 = vadd.f32 %v2126, %v2450
      %v2483 = vadd.f32 %v2127, %v2451
      %v2484 = vadd.f32 %v2128, %v2452
      %v2485 = vadd.f32 %v2129, %v2453
      %2486 = vset.pattern.permute.xlu0 2
      %2487 = vperm.xlu0 %2486, %v345
      %v2488 = vpop.permute.xlu0 %2487
      %v2490 = vlaneseq
      %v2491 = vshrl.u32 %v2490, 7
      %v2492 = vsub.s32 2, %v2491
      %v2493 = vrot.slane %v328, %v2492
      %v2494 = vlaneseq
      %v2495 = vshrl.u32 %v2494, 7
      %v2496 = vsub.s32 6, %v2495
      %v2497 = vrot.slane %v328, %v2496
      %v2498 = vlaneseq
      %v2499 = vshrl.u32 %v2498, 7
      %v2500 = vsub.s32 2, %v2499
      %v2501 = vrot.slane %v329, %v2500
      %v2502 = vlaneseq
      %v2503 = vshrl.u32 %v2502, 7
      %v2504 = vsub.s32 6, %v2503
      %v2505 = vrot.slane %v329, %v2504
      %v2506 = vlaneseq
      %v2507 = vshrl.u32 %v2506, 7
      %v2508 = vsub.s32 2, %v2507
      %v2509 = vrot.slane %v330, %v2508
      %v2510 = vlaneseq
      %v2511 = vshrl.u32 %v2510, 7
      %v2512 = vsub.s32 6, %v2511
      %v2513 = vrot.slane %v330, %v2512
      %v2514 = vlaneseq
      %v2515 = vshrl.u32 %v2514, 7
      %v2516 = vsub.s32 2, %v2515
      %v2517 = vrot.slane %v331, %v2516
      %v2518 = vlaneseq
      %v2519 = vshrl.u32 %v2518, 7
      %v2520 = vsub.s32 6, %v2519
      %v2521 = vrot.slane %v331, %v2520
      %v2522 = vlaneseq
      %v2523 = vshrl.u32 %v2522, 7
      %v2524 = vsub.s32 2, %v2523
      %v2525 = vrot.slane %v332, %v2524
      %v2526 = vlaneseq
      %v2527 = vshrl.u32 %v2526, 7
      %v2528 = vsub.s32 6, %v2527
      %v2529 = vrot.slane %v332, %v2528
      %v2530 = vlaneseq
      %v2531 = vshrl.u32 %v2530, 7
      %v2532 = vsub.s32 2, %v2531
      %v2533 = vrot.slane %v333, %v2532
      %v2534 = vlaneseq
      %v2535 = vshrl.u32 %v2534, 7
      %v2536 = vsub.s32 6, %v2535
      %v2537 = vrot.slane %v333, %v2536
      %v2538 = vlaneseq
      %v2539 = vshrl.u32 %v2538, 7
      %v2540 = vsub.s32 2, %v2539
      %v2541 = vrot.slane %v334, %v2540
      %v2542 = vlaneseq
      %v2543 = vshrl.u32 %v2542, 7
      %v2544 = vsub.s32 6, %v2543
      %v2545 = vrot.slane %v334, %v2544
      %v2546 = vlaneseq
      %v2547 = vshrl.u32 %v2546, 7
      %v2548 = vsub.s32 2, %v2547
      %v2549 = vrot.slane %v335, %v2548
      %v2550 = vlaneseq
      %v2551 = vshrl.u32 %v2550, 7
      %v2552 = vsub.s32 6, %v2551
      %v2553 = vrot.slane %v335, %v2552
      %v2554 = vlaneseq
      %v2555 = vshrl.u32 %v2554, 7
      %v2556 = vsub.s32 2, %v2555
      %v2557 = vrot.slane %v336, %v2556
      %v2558 = vlaneseq
      %v2559 = vshrl.u32 %v2558, 7
      %v2560 = vsub.s32 6, %v2559
      %v2561 = vrot.slane %v336, %v2560
      %v2562 = vlaneseq
      %v2563 = vshrl.u32 %v2562, 7
      %v2564 = vsub.s32 2, %v2563
      %v2565 = vrot.slane %v337, %v2564
      %v2566 = vlaneseq
      %v2567 = vshrl.u32 %v2566, 7
      %v2568 = vsub.s32 6, %v2567
      %v2569 = vrot.slane %v337, %v2568
      %v2570 = vlaneseq
      %v2571 = vshrl.u32 %v2570, 7
      %v2572 = vsub.s32 2, %v2571
      %v2573 = vrot.slane %v338, %v2572
      %v2574 = vlaneseq
      %v2575 = vshrl.u32 %v2574, 7
      %v2576 = vsub.s32 6, %v2575
      %v2577 = vrot.slane %v338, %v2576
      %v2578 = vlaneseq
      %v2579 = vshrl.u32 %v2578, 7
      %v2580 = vsub.s32 2, %v2579
      %v2581 = vrot.slane %v339, %v2580
      %v2582 = vlaneseq
      %v2583 = vshrl.u32 %v2582, 7
      %v2584 = vsub.s32 6, %v2583
      %v2585 = vrot.slane %v339, %v2584
      %v2586 = vlaneseq
      %v2587 = vshrl.u32 %v2586, 7
      %v2588 = vsub.s32 2, %v2587
      %v2589 = vrot.slane %v340, %v2588
      %v2590 = vlaneseq
      %v2591 = vshrl.u32 %v2590, 7
      %v2592 = vsub.s32 6, %v2591
      %v2593 = vrot.slane %v340, %v2592
      %v2594 = vlaneseq
      %v2595 = vshrl.u32 %v2594, 7
      %v2596 = vsub.s32 2, %v2595
      %v2597 = vrot.slane %v341, %v2596
      %v2598 = vlaneseq
      %v2599 = vshrl.u32 %v2598, 7
      %v2600 = vsub.s32 6, %v2599
      %v2601 = vrot.slane %v341, %v2600
      %v2602 = vlaneseq
      %v2603 = vshrl.u32 %v2602, 7
      %v2604 = vsub.s32 2, %v2603
      %v2605 = vrot.slane %v342, %v2604
      %v2606 = vlaneseq
      %v2607 = vshrl.u32 %v2606, 7
      %v2608 = vsub.s32 6, %v2607
      %v2609 = vrot.slane %v342, %v2608
      %v2610 = vlaneseq
      %v2611 = vshrl.u32 %v2610, 7
      %v2612 = vsub.s32 2, %v2611
      %v2613 = vrot.slane %v343, %v2612
      %v2614 = vlaneseq
      %v2615 = vshrl.u32 %v2614, 7
      %v2616 = vsub.s32 6, %v2615
      %v2617 = vrot.slane %v343, %v2616
      %v2650 = vlaneseq
      %v2651 = vshrl.u32 %v2650, 7
      %v2652 = vsub.s32 2, %v2651
      %v2653 = vrot.slane %v2493, %v2652
      %v2654 = vlaneseq
      %v2655 = vshrl.u32 %v2654, 7
      %v2656 = vsub.s32 2, %v2655
      %v2657 = vrot.slane %v2497, %v2656
      %v2658 = vlaneseq
      %v2659 = vshrl.u32 %v2658, 7
      %v2660 = vsub.s32 2, %v2659
      %v2661 = vrot.slane %v2501, %v2660
      %v2662 = vlaneseq
      %v2663 = vshrl.u32 %v2662, 7
      %v2664 = vsub.s32 2, %v2663
      %v2665 = vrot.slane %v2505, %v2664
      %v2666 = vlaneseq
      %v2667 = vshrl.u32 %v2666, 7
      %v2668 = vsub.s32 2, %v2667
      %v2669 = vrot.slane %v2509, %v2668
      %v2670 = vlaneseq
      %v2671 = vshrl.u32 %v2670, 7
      %v2672 = vsub.s32 2, %v2671
      %v2673 = vrot.slane %v2513, %v2672
      %v2674 = vlaneseq
      %v2675 = vshrl.u32 %v2674, 7
      %v2676 = vsub.s32 2, %v2675
      %v2677 = vrot.slane %v2517, %v2676
      %v2678 = vlaneseq
      %v2679 = vshrl.u32 %v2678, 7
      %v2680 = vsub.s32 2, %v2679
      %v2681 = vrot.slane %v2521, %v2680
      %v2682 = vlaneseq
      %v2683 = vshrl.u32 %v2682, 7
      %v2684 = vsub.s32 2, %v2683
      %v2685 = vrot.slane %v2525, %v2684
      %v2686 = vlaneseq
      %v2687 = vshrl.u32 %v2686, 7
      %v2688 = vsub.s32 2, %v2687
      %v2689 = vrot.slane %v2529, %v2688
      %v2690 = vlaneseq
      %v2691 = vshrl.u32 %v2690, 7
      %v2692 = vsub.s32 2, %v2691
      %v2693 = vrot.slane %v2533, %v2692
      %v2694 = vlaneseq
      %v2695 = vshrl.u32 %v2694, 7
      %v2696 = vsub.s32 2, %v2695
      %v2697 = vrot.slane %v2537, %v2696
      %v2698 = vlaneseq
      %v2699 = vshrl.u32 %v2698, 7
      %v2700 = vsub.s32 2, %v2699
      %v2701 = vrot.slane %v2541, %v2700
      %v2702 = vlaneseq
      %v2703 = vshrl.u32 %v2702, 7
      %v2704 = vsub.s32 2, %v2703
      %v2705 = vrot.slane %v2545, %v2704
      %v2706 = vlaneseq
      %v2707 = vshrl.u32 %v2706, 7
      %v2708 = vsub.s32 2, %v2707
      %v2709 = vrot.slane %v2549, %v2708
      %v2710 = vlaneseq
      %v2711 = vshrl.u32 %v2710, 7
      %v2712 = vsub.s32 2, %v2711
      %v2713 = vrot.slane %v2553, %v2712
      %v2714 = vlaneseq
      %v2715 = vshrl.u32 %v2714, 7
      %v2716 = vsub.s32 2, %v2715
      %v2717 = vrot.slane %v2557, %v2716
      %v2718 = vlaneseq
      %v2719 = vshrl.u32 %v2718, 7
      %v2720 = vsub.s32 2, %v2719
      %v2721 = vrot.slane %v2561, %v2720
      %v2722 = vlaneseq
      %v2723 = vshrl.u32 %v2722, 7
      %v2724 = vsub.s32 2, %v2723
      %v2725 = vrot.slane %v2565, %v2724
      %v2726 = vlaneseq
      %v2727 = vshrl.u32 %v2726, 7
      %v2728 = vsub.s32 2, %v2727
      %v2729 = vrot.slane %v2569, %v2728
      %v2730 = vlaneseq
      %v2731 = vshrl.u32 %v2730, 7
      %v2732 = vsub.s32 2, %v2731
      %v2733 = vrot.slane %v2573, %v2732
      %v2734 = vlaneseq
      %v2735 = vshrl.u32 %v2734, 7
      %v2736 = vsub.s32 2, %v2735
      %v2737 = vrot.slane %v2577, %v2736
      %v2738 = vlaneseq
      %v2739 = vshrl.u32 %v2738, 7
      %v2740 = vsub.s32 2, %v2739
      %v2741 = vrot.slane %v2581, %v2740
      %v2742 = vlaneseq
      %v2743 = vshrl.u32 %v2742, 7
      %v2744 = vsub.s32 2, %v2743
      %v2745 = vrot.slane %v2585, %v2744
      %v2746 = vlaneseq
      %v2747 = vshrl.u32 %v2746, 7
      %v2748 = vsub.s32 2, %v2747
      %v2749 = vrot.slane %v2589, %v2748
      %v2750 = vlaneseq
      %v2751 = vshrl.u32 %v2750, 7
      %v2752 = vsub.s32 2, %v2751
      %v2753 = vrot.slane %v2593, %v2752
      %v2754 = vlaneseq
      %v2755 = vshrl.u32 %v2754, 7
      %v2756 = vsub.s32 2, %v2755
      %v2757 = vrot.slane %v2597, %v2756
      %v2758 = vlaneseq
      %v2759 = vshrl.u32 %v2758, 7
      %v2760 = vsub.s32 2, %v2759
      %v2761 = vrot.slane %v2601, %v2760
      %v2762 = vlaneseq
      %v2763 = vshrl.u32 %v2762, 7
      %v2764 = vsub.s32 2, %v2763
      %v2765 = vrot.slane %v2605, %v2764
      %v2766 = vlaneseq
      %v2767 = vshrl.u32 %v2766, 7
      %v2768 = vsub.s32 2, %v2767
      %v2769 = vrot.slane %v2609, %v2768
      %v2770 = vlaneseq
      %v2771 = vshrl.u32 %v2770, 7
      %v2772 = vsub.s32 2, %v2771
      %v2773 = vrot.slane %v2613, %v2772
      %v2774 = vlaneseq
      %v2775 = vshrl.u32 %v2774, 7
      %v2776 = vsub.s32 2, %v2775
      %v2777 = vrot.slane %v2617, %v2776
      %v2778 = vmul.f32 %v2488, %v2653
      %v2779 = vmul.f32 %v2488, %v2657
      %v2780 = vmul.f32 %v2488, %v2661
      %v2781 = vmul.f32 %v2488, %v2665
      %v2782 = vmul.f32 %v2488, %v2669
      %v2783 = vmul.f32 %v2488, %v2673
      %v2784 = vmul.f32 %v2488, %v2677
      %v2785 = vmul.f32 %v2488, %v2681
      %v2786 = vmul.f32 %v2488, %v2685
      %v2787 = vmul.f32 %v2488, %v2689
      %v2788 = vmul.f32 %v2488, %v2693
      %v2789 = vmul.f32 %v2488, %v2697
      %v2790 = vmul.f32 %v2488, %v2701
      %v2791 = vmul.f32 %v2488, %v2705
      %v2792 = vmul.f32 %v2488, %v2709
      %v2793 = vmul.f32 %v2488, %v2713
      %v2794 = vmul.f32 %v2488, %v2717
      %v2795 = vmul.f32 %v2488, %v2721
      %v2796 = vmul.f32 %v2488, %v2725
      %v2797 = vmul.f32 %v2488, %v2729
      %v2798 = vmul.f32 %v2488, %v2733
      %v2799 = vmul.f32 %v2488, %v2737
      %v2800 = vmul.f32 %v2488, %v2741
      %v2801 = vmul.f32 %v2488, %v2745
      %v2802 = vmul.f32 %v2488, %v2749
      %v2803 = vmul.f32 %v2488, %v2753
      %v2804 = vmul.f32 %v2488, %v2757
      %v2805 = vmul.f32 %v2488, %v2761
      %v2806 = vmul.f32 %v2488, %v2765
      %v2807 = vmul.f32 %v2488, %v2769
      %v2808 = vmul.f32 %v2488, %v2773
      %v2809 = vmul.f32 %v2488, %v2777
      %v2810 = vadd.f32 %v2454, %v2778
      %v2811 = vadd.f32 %v2455, %v2779
      %v2812 = vadd.f32 %v2456, %v2780
      %v2813 = vadd.f32 %v2457, %v2781
      %v2814 = vadd.f32 %v2458, %v2782
      %v2815 = vadd.f32 %v2459, %v2783
      %v2816 = vadd.f32 %v2460, %v2784
      %v2817 = vadd.f32 %v2461, %v2785
      %v2818 = vadd.f32 %v2462, %v2786
      %v2819 = vadd.f32 %v2463, %v2787
      %v2820 = vadd.f32 %v2464, %v2788
      %v2821 = vadd.f32 %v2465, %v2789
      %v2822 = vadd.f32 %v2466, %v2790
      %v2823 = vadd.f32 %v2467, %v2791
      %v2824 = vadd.f32 %v2468, %v2792
      %v2825 = vadd.f32 %v2469, %v2793
      %v2826 = vadd.f32 %v2470, %v2794
      %v2827 = vadd.f32 %v2471, %v2795
      %v2828 = vadd.f32 %v2472, %v2796
      %v2829 = vadd.f32 %v2473, %v2797
      %v2830 = vadd.f32 %v2474, %v2798
      %v2831 = vadd.f32 %v2475, %v2799
      %v2832 = vadd.f32 %v2476, %v2800
      %v2833 = vadd.f32 %v2477, %v2801
      %v2834 = vadd.f32 %v2478, %v2802
      %v2835 = vadd.f32 %v2479, %v2803
      %v2836 = vadd.f32 %v2480, %v2804
      %v2837 = vadd.f32 %v2481, %v2805
      %v2838 = vadd.f32 %v2482, %v2806
      %v2839 = vadd.f32 %v2483, %v2807
      %v2840 = vadd.f32 %v2484, %v2808
      %v2841 = vadd.f32 %v2485, %v2809
      %2842 = vset.pattern.permute.xlu0 3
      %2843 = vperm.xlu0 %2842, %v345
      %v2844 = vpop.permute.xlu0 %2843
      %v2846 = vlaneseq
      %v2847 = vshrl.u32 %v2846, 7
      %v2848 = vsub.s32 3, %v2847
      %v2849 = vrot.slane %v328, %v2848
      %v2850 = vlaneseq
      %v2851 = vshrl.u32 %v2850, 7
      %v2852 = vsub.s32 7, %v2851
      %v2853 = vrot.slane %v328, %v2852
      %v2854 = vlaneseq
      %v2855 = vshrl.u32 %v2854, 7
      %v2856 = vsub.s32 3, %v2855
      %v2857 = vrot.slane %v329, %v2856
      %v2858 = vlaneseq
      %v2859 = vshrl.u32 %v2858, 7
      %v2860 = vsub.s32 7, %v2859
      %v2861 = vrot.slane %v329, %v2860
      %v2862 = vlaneseq
      %v2863 = vshrl.u32 %v2862, 7
      %v2864 = vsub.s32 3, %v2863
      %v2865 = vrot.slane %v330, %v2864
      %v2866 = vlaneseq
      %v2867 = vshrl.u32 %v2866, 7
      %v2868 = vsub.s32 7, %v2867
      %v2869 = vrot.slane %v330, %v2868
      %v2870 = vlaneseq
      %v2871 = vshrl.u32 %v2870, 7
      %v2872 = vsub.s32 3, %v2871
      %v2873 = vrot.slane %v331, %v2872
      %v2874 = vlaneseq
      %v2875 = vshrl.u32 %v2874, 7
      %v2876 = vsub.s32 7, %v2875
      %v2877 = vrot.slane %v331, %v2876
      %v2878 = vlaneseq
      %v2879 = vshrl.u32 %v2878, 7
      %v2880 = vsub.s32 3, %v2879
      %v2881 = vrot.slane %v332, %v2880
      %v2882 = vlaneseq
      %v2883 = vshrl.u32 %v2882, 7
      %v2884 = vsub.s32 7, %v2883
      %v2885 = vrot.slane %v332, %v2884
      %v2886 = vlaneseq
      %v2887 = vshrl.u32 %v2886, 7
      %v2888 = vsub.s32 3, %v2887
      %v2889 = vrot.slane %v333, %v2888
      %v2890 = vlaneseq
      %v2891 = vshrl.u32 %v2890, 7
      %v2892 = vsub.s32 7, %v2891
      %v2893 = vrot.slane %v333, %v2892
      %v2894 = vlaneseq
      %v2895 = vshrl.u32 %v2894, 7
      %v2896 = vsub.s32 3, %v2895
      %v2897 = vrot.slane %v334, %v2896
      %v2898 = vlaneseq
      %v2899 = vshrl.u32 %v2898, 7
      %v2900 = vsub.s32 7, %v2899
      %v2901 = vrot.slane %v334, %v2900
      %v2902 = vlaneseq
      %v2903 = vshrl.u32 %v2902, 7
      %v2904 = vsub.s32 3, %v2903
      %v2905 = vrot.slane %v335, %v2904
      %v2906 = vlaneseq
      %v2907 = vshrl.u32 %v2906, 7
      %v2908 = vsub.s32 7, %v2907
      %v2909 = vrot.slane %v335, %v2908
      %v2910 = vlaneseq
      %v2911 = vshrl.u32 %v2910, 7
      %v2912 = vsub.s32 3, %v2911
      %v2913 = vrot.slane %v336, %v2912
      %v2914 = vlaneseq
      %v2915 = vshrl.u32 %v2914, 7
      %v2916 = vsub.s32 7, %v2915
      %v2917 = vrot.slane %v336, %v2916
      %v2918 = vlaneseq
      %v2919 = vshrl.u32 %v2918, 7
      %v2920 = vsub.s32 3, %v2919
      %v2921 = vrot.slane %v337, %v2920
      %v2922 = vlaneseq
      %v2923 = vshrl.u32 %v2922, 7
      %v2924 = vsub.s32 7, %v2923
      %v2925 = vrot.slane %v337, %v2924
      %v2926 = vlaneseq
      %v2927 = vshrl.u32 %v2926, 7
      %v2928 = vsub.s32 3, %v2927
      %v2929 = vrot.slane %v338, %v2928
      %v2930 = vlaneseq
      %v2931 = vshrl.u32 %v2930, 7
      %v2932 = vsub.s32 7, %v2931
      %v2933 = vrot.slane %v338, %v2932
      %v2934 = vlaneseq
      %v2935 = vshrl.u32 %v2934, 7
      %v2936 = vsub.s32 3, %v2935
      %v2937 = vrot.slane %v339, %v2936
      %v2938 = vlaneseq
      %v2939 = vshrl.u32 %v2938, 7
      %v2940 = vsub.s32 7, %v2939
      %v2941 = vrot.slane %v339, %v2940
      %v2942 = vlaneseq
      %v2943 = vshrl.u32 %v2942, 7
      %v2944 = vsub.s32 3, %v2943
      %v2945 = vrot.slane %v340, %v2944
      %v2946 = vlaneseq
      %v2947 = vshrl.u32 %v2946, 7
      %v2948 = vsub.s32 7, %v2947
      %v2949 = vrot.slane %v340, %v2948
      %v2950 = vlaneseq
      %v2951 = vshrl.u32 %v2950, 7
      %v2952 = vsub.s32 3, %v2951
      %v2953 = vrot.slane %v341, %v2952
      %v2954 = vlaneseq
      %v2955 = vshrl.u32 %v2954, 7
      %v2956 = vsub.s32 7, %v2955
      %v2957 = vrot.slane %v341, %v2956
      %v2958 = vlaneseq
      %v2959 = vshrl.u32 %v2958, 7
      %v2960 = vsub.s32 3, %v2959
      %v2961 = vrot.slane %v342, %v2960
      %v2962 = vlaneseq
      %v2963 = vshrl.u32 %v2962, 7
      %v2964 = vsub.s32 7, %v2963
      %v2965 = vrot.slane %v342, %v2964
      %v2966 = vlaneseq
      %v2967 = vshrl.u32 %v2966, 7
      %v2968 = vsub.s32 3, %v2967
      %v2969 = vrot.slane %v343, %v2968
      %v2970 = vlaneseq
      %v2971 = vshrl.u32 %v2970, 7
      %v2972 = vsub.s32 7, %v2971
      %v2973 = vrot.slane %v343, %v2972
      %v3006 = vlaneseq
      %v3007 = vshrl.u32 %v3006, 7
      %v3008 = vsub.s32 3, %v3007
      %v3009 = vrot.slane %v2849, %v3008
      %v3010 = vlaneseq
      %v3011 = vshrl.u32 %v3010, 7
      %v3012 = vsub.s32 3, %v3011
      %v3013 = vrot.slane %v2853, %v3012
      %v3014 = vlaneseq
      %v3015 = vshrl.u32 %v3014, 7
      %v3016 = vsub.s32 3, %v3015
      %v3017 = vrot.slane %v2857, %v3016
      %v3018 = vlaneseq
      %v3019 = vshrl.u32 %v3018, 7
      %v3020 = vsub.s32 3, %v3019
      %v3021 = vrot.slane %v2861, %v3020
      %v3022 = vlaneseq
      %v3023 = vshrl.u32 %v3022, 7
      %v3024 = vsub.s32 3, %v3023
      %v3025 = vrot.slane %v2865, %v3024
      %v3026 = vlaneseq
      %v3027 = vshrl.u32 %v3026, 7
      %v3028 = vsub.s32 3, %v3027
      %v3029 = vrot.slane %v2869, %v3028
      %v3030 = vlaneseq
      %v3031 = vshrl.u32 %v3030, 7
      %v3032 = vsub.s32 3, %v3031
      %v3033 = vrot.slane %v2873, %v3032
      %v3034 = vlaneseq
      %v3035 = vshrl.u32 %v3034, 7
      %v3036 = vsub.s32 3, %v3035
      %v3037 = vrot.slane %v2877, %v3036
      %v3038 = vlaneseq
      %v3039 = vshrl.u32 %v3038, 7
      %v3040 = vsub.s32 3, %v3039
      %v3041 = vrot.slane %v2881, %v3040
      %v3042 = vlaneseq
      %v3043 = vshrl.u32 %v3042, 7
      %v3044 = vsub.s32 3, %v3043
      %v3045 = vrot.slane %v2885, %v3044
      %v3046 = vlaneseq
      %v3047 = vshrl.u32 %v3046, 7
      %v3048 = vsub.s32 3, %v3047
      %v3049 = vrot.slane %v2889, %v3048
      %v3050 = vlaneseq
      %v3051 = vshrl.u32 %v3050, 7
      %v3052 = vsub.s32 3, %v3051
      %v3053 = vrot.slane %v2893, %v3052
      %v3054 = vlaneseq
      %v3055 = vshrl.u32 %v3054, 7
      %v3056 = vsub.s32 3, %v3055
      %v3057 = vrot.slane %v2897, %v3056
      %v3058 = vlaneseq
      %v3059 = vshrl.u32 %v3058, 7
      %v3060 = vsub.s32 3, %v3059
      %v3061 = vrot.slane %v2901, %v3060
      %v3062 = vlaneseq
      %v3063 = vshrl.u32 %v3062, 7
      %v3064 = vsub.s32 3, %v3063
      %v3065 = vrot.slane %v2905, %v3064
      %v3066 = vlaneseq
      %v3067 = vshrl.u32 %v3066, 7
      %v3068 = vsub.s32 3, %v3067
      %v3069 = vrot.slane %v2909, %v3068
      %v3070 = vlaneseq
      %v3071 = vshrl.u32 %v3070, 7
      %v3072 = vsub.s32 3, %v3071
      %v3073 = vrot.slane %v2913, %v3072
      %v3074 = vlaneseq
      %v3075 = vshrl.u32 %v3074, 7
      %v3076 = vsub.s32 3, %v3075
      %v3077 = vrot.slane %v2917, %v3076
      %v3078 = vlaneseq
      %v3079 = vshrl.u32 %v3078, 7
      %v3080 = vsub.s32 3, %v3079
      %v3081 = vrot.slane %v2921, %v3080
      %v3082 = vlaneseq
      %v3083 = vshrl.u32 %v3082, 7
      %v3084 = vsub.s32 3, %v3083
      %v3085 = vrot.slane %v2925, %v3084
      %v3086 = vlaneseq
      %v3087 = vshrl.u32 %v3086, 7
      %v3088 = vsub.s32 3, %v3087
      %v3089 = vrot.slane %v2929, %v3088
      %v3090 = vlaneseq
      %v3091 = vshrl.u32 %v3090, 7
      %v3092 = vsub.s32 3, %v3091
      %v3093 = vrot.slane %v2933, %v3092
      %v3094 = vlaneseq
      %v3095 = vshrl.u32 %v3094, 7
      %v3096 = vsub.s32 3, %v3095
      %v3097 = vrot.slane %v2937, %v3096
      %v3098 = vlaneseq
      %v3099 = vshrl.u32 %v3098, 7
      %v3100 = vsub.s32 3, %v3099
      %v3101 = vrot.slane %v2941, %v3100
      %v3102 = vlaneseq
      %v3103 = vshrl.u32 %v3102, 7
      %v3104 = vsub.s32 3, %v3103
      %v3105 = vrot.slane %v2945, %v3104
      %v3106 = vlaneseq
      %v3107 = vshrl.u32 %v3106, 7
      %v3108 = vsub.s32 3, %v3107
      %v3109 = vrot.slane %v2949, %v3108
      %v3110 = vlaneseq
      %v3111 = vshrl.u32 %v3110, 7
      %v3112 = vsub.s32 3, %v3111
      %v3113 = vrot.slane %v2953, %v3112
      %v3114 = vlaneseq
      %v3115 = vshrl.u32 %v3114, 7
      %v3116 = vsub.s32 3, %v3115
      %v3117 = vrot.slane %v2957, %v3116
      %v3118 = vlaneseq
      %v3119 = vshrl.u32 %v3118, 7
      %v3120 = vsub.s32 3, %v3119
      %v3121 = vrot.slane %v2961, %v3120
      %v3122 = vlaneseq
      %v3123 = vshrl.u32 %v3122, 7
      %v3124 = vsub.s32 3, %v3123
      %v3125 = vrot.slane %v2965, %v3124
      %v3126 = vlaneseq
      %v3127 = vshrl.u32 %v3126, 7
      %v3128 = vsub.s32 3, %v3127
      %v3129 = vrot.slane %v2969, %v3128
      %v3130 = vlaneseq
      %v3131 = vshrl.u32 %v3130, 7
      %v3132 = vsub.s32 3, %v3131
      %v3133 = vrot.slane %v2973, %v3132
      %v3134 = vmul.f32 %v2844, %v3009
      %v3135 = vmul.f32 %v2844, %v3013
      %v3136 = vmul.f32 %v2844, %v3017
      %v3137 = vmul.f32 %v2844, %v3021
      %v3138 = vmul.f32 %v2844, %v3025
      %v3139 = vmul.f32 %v2844, %v3029
      %v3140 = vmul.f32 %v2844, %v3033
      %v3141 = vmul.f32 %v2844, %v3037
      %v3142 = vmul.f32 %v2844, %v3041
      %v3143 = vmul.f32 %v2844, %v3045
      %v3144 = vmul.f32 %v2844, %v3049
      %v3145 = vmul.f32 %v2844, %v3053
      %v3146 = vmul.f32 %v2844, %v3057
      %v3147 = vmul.f32 %v2844, %v3061
      %v3148 = vmul.f32 %v2844, %v3065
      %v3149 = vmul.f32 %v2844, %v3069
      %v3150 = vmul.f32 %v2844, %v3073
      %v3151 = vmul.f32 %v2844, %v3077
      %v3152 = vmul.f32 %v2844, %v3081
      %v3153 = vmul.f32 %v2844, %v3085
      %v3154 = vmul.f32 %v2844, %v3089
      %v3155 = vmul.f32 %v2844, %v3093
      %v3156 = vmul.f32 %v2844, %v3097
      %v3157 = vmul.f32 %v2844, %v3101
      %v3158 = vmul.f32 %v2844, %v3105
      %v3159 = vmul.f32 %v2844, %v3109
      %v3160 = vmul.f32 %v2844, %v3113
      %v3161 = vmul.f32 %v2844, %v3117
      %v3162 = vmul.f32 %v2844, %v3121
      %v3163 = vmul.f32 %v2844, %v3125
      %v3164 = vmul.f32 %v2844, %v3129
      %v3165 = vmul.f32 %v2844, %v3133
      %v3166 = vadd.f32 %v2810, %v3134
      %v3167 = vadd.f32 %v2811, %v3135
      %v3168 = vadd.f32 %v2812, %v3136
      %v3169 = vadd.f32 %v2813, %v3137
      %v3170 = vadd.f32 %v2814, %v3138
      %v3171 = vadd.f32 %v2815, %v3139
      %v3172 = vadd.f32 %v2816, %v3140
      %v3173 = vadd.f32 %v2817, %v3141
      %v3174 = vadd.f32 %v2818, %v3142
      %v3175 = vadd.f32 %v2819, %v3143
      %v3176 = vadd.f32 %v2820, %v3144
      %v3177 = vadd.f32 %v2821, %v3145
      %v3178 = vadd.f32 %v2822, %v3146
      %v3179 = vadd.f32 %v2823, %v3147
      %v3180 = vadd.f32 %v2824, %v3148
      %v3181 = vadd.f32 %v2825, %v3149
      %v3182 = vadd.f32 %v2826, %v3150
      %v3183 = vadd.f32 %v2827, %v3151
      %v3184 = vadd.f32 %v2828, %v3152
      %v3185 = vadd.f32 %v2829, %v3153
      %v3186 = vadd.f32 %v2830, %v3154
      %v3187 = vadd.f32 %v2831, %v3155
      %v3188 = vadd.f32 %v2832, %v3156
      %v3189 = vadd.f32 %v2833, %v3157
      %v3190 = vadd.f32 %v2834, %v3158
      %v3191 = vadd.f32 %v2835, %v3159
      %v3192 = vadd.f32 %v2836, %v3160
      %v3193 = vadd.f32 %v2837, %v3161
      %v3194 = vadd.f32 %v2838, %v3162
      %v3195 = vadd.f32 %v2839, %v3163
      %v3196 = vadd.f32 %v2840, %v3164
      %v3197 = vadd.f32 %v2841, %v3165
      %vm3198 = vcmask 1043456
      %v3199 = vsel %vm3198, %v3166, 0.0
      %v3200 = vsel %vm3198, %v3167, 0.0
      %v3201 = vadd.f32 %v3199, %v3200
      %v3202 = vsel %vm3198, %v3168, 0.0
      %v3203 = vadd.f32 %v3201, %v3202
      %v3204 = vsel %vm3198, %v3169, 0.0
      %v3205 = vadd.f32 %v3203, %v3204
      %v3206 = vsel %vm3198, %v3170, 0.0
      %v3207 = vadd.f32 %v3205, %v3206
      %v3208 = vsel %vm3198, %v3171, 0.0
      %v3209 = vadd.f32 %v3207, %v3208
      %v3210 = vsel %vm3198, %v3172, 0.0
      %v3211 = vadd.f32 %v3209, %v3210
      %v3212 = vsel %vm3198, %v3173, 0.0
      %v3213 = vadd.f32 %v3211, %v3212
      %v3214 = vsel %vm3198, %v3174, 0.0
      %v3215 = vadd.f32 %v3213, %v3214
      %v3216 = vsel %vm3198, %v3175, 0.0
      %v3217 = vadd.f32 %v3215, %v3216
      %v3218 = vsel %vm3198, %v3176, 0.0
      %v3219 = vadd.f32 %v3217, %v3218
      %v3220 = vsel %vm3198, %v3177, 0.0
      %v3221 = vadd.f32 %v3219, %v3220
      %v3222 = vsel %vm3198, %v3178, 0.0
      %v3223 = vadd.f32 %v3221, %v3222
      %v3224 = vsel %vm3198, %v3179, 0.0
      %v3225 = vadd.f32 %v3223, %v3224
      %v3226 = vsel %vm3198, %v3180, 0.0
      %v3227 = vadd.f32 %v3225, %v3226
      %v3228 = vsel %vm3198, %v3181, 0.0
      %v3229 = vadd.f32 %v3227, %v3228
      %v3230 = vsel %vm3198, %v3182, 0.0
      %v3231 = vadd.f32 %v3229, %v3230
      %v3232 = vsel %vm3198, %v3183, 0.0
      %v3233 = vadd.f32 %v3231, %v3232
      %v3234 = vsel %vm3198, %v3184, 0.0
      %v3235 = vadd.f32 %v3233, %v3234
      %v3236 = vsel %vm3198, %v3185, 0.0
      %v3237 = vadd.f32 %v3235, %v3236
      %v3238 = vsel %vm3198, %v3186, 0.0
      %v3239 = vadd.f32 %v3237, %v3238
      %v3240 = vsel %vm3198, %v3187, 0.0
      %v3241 = vadd.f32 %v3239, %v3240
      %v3242 = vsel %vm3198, %v3188, 0.0
      %v3243 = vadd.f32 %v3241, %v3242
      %v3244 = vsel %vm3198, %v3189, 0.0
      %v3245 = vadd.f32 %v3243, %v3244
      %v3246 = vsel %vm3198, %v3190, 0.0
      %v3247 = vadd.f32 %v3245, %v3246
      %v3248 = vsel %vm3198, %v3191, 0.0
      %v3249 = vadd.f32 %v3247, %v3248
      %v3250 = vsel %vm3198, %v3192, 0.0
      %v3251 = vadd.f32 %v3249, %v3250
      %v3252 = vsel %vm3198, %v3193, 0.0
      %v3253 = vadd.f32 %v3251, %v3252
      %v3254 = vsel %vm3198, %v3194, 0.0
      %v3255 = vadd.f32 %v3253, %v3254
      %v3256 = vsel %vm3198, %v3195, 0.0
      %v3257 = vadd.f32 %v3255, %v3256
      %v3258 = vsel %vm3198, %v3196, 0.0
      %v3259 = vadd.f32 %v3257, %v3258
      %v3260 = vsel %vm3198, %v3197, 0.0
      %v3261 = vadd.f32 %v3259, %v3260
      %3262 = vadd.xlane.f32.xlu0 %v3261
      %v3263 = vpop.xlane.xlu0 %3262
      %v3264 = vmul.f32 %v3263, 0.00024414063
      %v3265 = vsub.f32 %v3166, %v3264
      %v3266 = vsub.f32 %v3167, %v3264
      %v3267 = vsub.f32 %v3168, %v3264
      %v3268 = vsub.f32 %v3169, %v3264
      %v3269 = vsub.f32 %v3170, %v3264
      %v3270 = vsub.f32 %v3171, %v3264
      %v3271 = vsub.f32 %v3172, %v3264
      %v3272 = vsub.f32 %v3173, %v3264
      %v3273 = vsub.f32 %v3174, %v3264
      %v3274 = vsub.f32 %v3175, %v3264
      %v3275 = vsub.f32 %v3176, %v3264
      %v3276 = vsub.f32 %v3177, %v3264
      %v3277 = vsub.f32 %v3178, %v3264
      %v3278 = vsub.f32 %v3179, %v3264
      %v3279 = vsub.f32 %v3180, %v3264
      %v3280 = vsub.f32 %v3181, %v3264
      %v3281 = vsub.f32 %v3182, %v3264
      %v3282 = vsub.f32 %v3183, %v3264
      %v3283 = vsub.f32 %v3184, %v3264
      %v3284 = vsub.f32 %v3185, %v3264
      %v3285 = vsub.f32 %v3186, %v3264
      %v3286 = vsub.f32 %v3187, %v3264
      %v3287 = vsub.f32 %v3188, %v3264
      %v3288 = vsub.f32 %v3189, %v3264
      %v3289 = vsub.f32 %v3190, %v3264
      %v3290 = vsub.f32 %v3191, %v3264
      %v3291 = vsub.f32 %v3192, %v3264
      %v3292 = vsub.f32 %v3193, %v3264
      %v3293 = vsub.f32 %v3194, %v3264
      %v3294 = vsub.f32 %v3195, %v3264
      %v3295 = vsub.f32 %v3196, %v3264
      %v3296 = vsub.f32 %v3197, %v3264
      %v3297 = vmul.f32 %v3265, %v3265
      %v3298 = vmul.f32 %v3266, %v3266
      %v3299 = vmul.f32 %v3267, %v3267
      %v3300 = vmul.f32 %v3268, %v3268
      %v3301 = vmul.f32 %v3269, %v3269
      %v3302 = vmul.f32 %v3270, %v3270
      %v3303 = vmul.f32 %v3271, %v3271
      %v3304 = vmul.f32 %v3272, %v3272
      %v3305 = vmul.f32 %v3273, %v3273
      %v3306 = vmul.f32 %v3274, %v3274
      %v3307 = vmul.f32 %v3275, %v3275
      %v3308 = vmul.f32 %v3276, %v3276
      %v3309 = vmul.f32 %v3277, %v3277
      %v3310 = vmul.f32 %v3278, %v3278
      %v3311 = vmul.f32 %v3279, %v3279
      %v3312 = vmul.f32 %v3280, %v3280
      %v3313 = vmul.f32 %v3281, %v3281
      %v3314 = vmul.f32 %v3282, %v3282
      %v3315 = vmul.f32 %v3283, %v3283
      %v3316 = vmul.f32 %v3284, %v3284
      %v3317 = vmul.f32 %v3285, %v3285
      %v3318 = vmul.f32 %v3286, %v3286
      %v3319 = vmul.f32 %v3287, %v3287
      %v3320 = vmul.f32 %v3288, %v3288
      %v3321 = vmul.f32 %v3289, %v3289
      %v3322 = vmul.f32 %v3290, %v3290
      %v3323 = vmul.f32 %v3291, %v3291
      %v3324 = vmul.f32 %v3292, %v3292
      %v3325 = vmul.f32 %v3293, %v3293
      %v3326 = vmul.f32 %v3294, %v3294
      %v3327 = vmul.f32 %v3295, %v3295
      %v3328 = vmul.f32 %v3296, %v3296
      %v3329 = vsel %vm3198, %v3297, 0.0
      %v3330 = vsel %vm3198, %v3298, 0.0
      %v3331 = vadd.f32 %v3329, %v3330
      %v3332 = vsel %vm3198, %v3299, 0.0
      %v3333 = vadd.f32 %v3331, %v3332
      %v3334 = vsel %vm3198, %v3300, 0.0
      %v3335 = vadd.f32 %v3333, %v3334
      %v3336 = vsel %vm3198, %v3301, 0.0
      %v3337 = vadd.f32 %v3335, %v3336
      %v3338 = vsel %vm3198, %v3302, 0.0
      %v3339 = vadd.f32 %v3337, %v3338
      %v3340 = vsel %vm3198, %v3303, 0.0
      %v3341 = vadd.f32 %v3339, %v3340
      %v3342 = vsel %vm3198, %v3304, 0.0
      %v3343 = vadd.f32 %v3341, %v3342
      %v3344 = vsel %vm3198, %v3305, 0.0
      %v3345 = vadd.f32 %v3343, %v3344
      %v3346 = vsel %vm3198, %v3306, 0.0
      %v3347 = vadd.f32 %v3345, %v3346
      %v3348 = vsel %vm3198, %v3307, 0.0
      %v3349 = vadd.f32 %v3347, %v3348
      %v3350 = vsel %vm3198, %v3308, 0.0
      %v3351 = vadd.f32 %v3349, %v3350
      %v3352 = vsel %vm3198, %v3309, 0.0
      %v3353 = vadd.f32 %v3351, %v3352
      %v3354 = vsel %vm3198, %v3310, 0.0
      %v3355 = vadd.f32 %v3353, %v3354
      %v3356 = vsel %vm3198, %v3311, 0.0
      %v3357 = vadd.f32 %v3355, %v3356
      %v3358 = vsel %vm3198, %v3312, 0.0
      %v3359 = vadd.f32 %v3357, %v3358
      %v3360 = vsel %vm3198, %v3313, 0.0
      %v3361 = vadd.f32 %v3359, %v3360
      %v3362 = vsel %vm3198, %v3314, 0.0
      %v3363 = vadd.f32 %v3361, %v3362
      %v3364 = vsel %vm3198, %v3315, 0.0
      %v3365 = vadd.f32 %v3363, %v3364
      %v3366 = vsel %vm3198, %v3316, 0.0
      %v3367 = vadd.f32 %v3365, %v3366
      %v3368 = vsel %vm3198, %v3317, 0.0
      %v3369 = vadd.f32 %v3367, %v3368
      %v3370 = vsel %vm3198, %v3318, 0.0
      %v3371 = vadd.f32 %v3369, %v3370
      %v3372 = vsel %vm3198, %v3319, 0.0
      %v3373 = vadd.f32 %v3371, %v3372
      %v3374 = vsel %vm3198, %v3320, 0.0
      %v3375 = vadd.f32 %v3373, %v3374
      %v3376 = vsel %vm3198, %v3321, 0.0
      %v3377 = vadd.f32 %v3375, %v3376
      %v3378 = vsel %vm3198, %v3322, 0.0
      %v3379 = vadd.f32 %v3377, %v3378
      %v3380 = vsel %vm3198, %v3323, 0.0
      %v3381 = vadd.f32 %v3379, %v3380
      %v3382 = vsel %vm3198, %v3324, 0.0
      %v3383 = vadd.f32 %v3381, %v3382
      %v3384 = vsel %vm3198, %v3325, 0.0
      %v3385 = vadd.f32 %v3383, %v3384
      %v3386 = vsel %vm3198, %v3326, 0.0
      %v3387 = vadd.f32 %v3385, %v3386
      %v3388 = vsel %vm3198, %v3327, 0.0
      %v3389 = vadd.f32 %v3387, %v3388
      %v3390 = vsel %vm3198, %v3328, 0.0
      %v3391 = vadd.f32 %v3389, %v3390
      %3392 = vadd.xlane.f32.xlu0 %v3391
      %v3393 = vpop.xlane.xlu0 %3392
      %v3394 = vmul.f32 %v3393, 0.00024414063
      %v3395 = vadd.f32 %v3394, 1e-05
      %v3396 = vrsqrt.pop %v3395
      %v3397 = vmul.f32 %v346, %v3396
      %3399 = vset.pattern.permute.xlu0 0
      %3400 = vperm.xlu0 %3399, %v3397
      %v3401 = vpop.permute.xlu0 %3400
      %v3403 = vmul.f32 %v3265, %v3401
      %v3404 = vmul.f32 %v3266, %v3401
      %v3405 = vmul.f32 %v3267, %v3401
      %v3406 = vmul.f32 %v3268, %v3401
      %v3407 = vmul.f32 %v3269, %v3401
      %v3408 = vmul.f32 %v3270, %v3401
      %v3409 = vmul.f32 %v3271, %v3401
      %v3410 = vmul.f32 %v3272, %v3401
      %v3411 = vmul.f32 %v3273, %v3401
      %v3412 = vmul.f32 %v3274, %v3401
      %v3413 = vmul.f32 %v3275, %v3401
      %v3414 = vmul.f32 %v3276, %v3401
      %v3415 = vmul.f32 %v3277, %v3401
      %v3416 = vmul.f32 %v3278, %v3401
      %v3417 = vmul.f32 %v3279, %v3401
      %v3418 = vmul.f32 %v3280, %v3401
      %v3419 = vmul.f32 %v3281, %v3401
      %v3420 = vmul.f32 %v3282, %v3401
      %v3421 = vmul.f32 %v3283, %v3401
      %v3422 = vmul.f32 %v3284, %v3401
      %v3423 = vmul.f32 %v3285, %v3401
      %v3424 = vmul.f32 %v3286, %v3401
      %v3425 = vmul.f32 %v3287, %v3401
      %v3426 = vmul.f32 %v3288, %v3401
      %v3427 = vmul.f32 %v3289, %v3401
      %v3428 = vmul.f32 %v3290, %v3401
      %v3429 = vmul.f32 %v3291, %v3401
      %v3430 = vmul.f32 %v3292, %v3401
      %v3431 = vmul.f32 %v3293, %v3401
      %v3432 = vmul.f32 %v3294, %v3401
      %v3433 = vmul.f32 %v3295, %v3401
      %v3434 = vmul.f32 %v3296, %v3401
      %3436 = vset.pattern.permute.xlu0 0
      %3437 = vperm.xlu0 %3436, %v347
      %v3438 = vpop.permute.xlu0 %3437
      %v3440 = vadd.f32 %v3403, %v3438
      %v3441 = vadd.f32 %v3404, %v3438
      %v3442 = vadd.f32 %v3405, %v3438
      %v3443 = vadd.f32 %v3406, %v3438
      %v3444 = vadd.f32 %v3407, %v3438
      %v3445 = vadd.f32 %v3408, %v3438
      %v3446 = vadd.f32 %v3409, %v3438
      %v3447 = vadd.f32 %v3410, %v3438
      %v3448 = vadd.f32 %v3411, %v3438
      %v3449 = vadd.f32 %v3412, %v3438
      %v3450 = vadd.f32 %v3413, %v3438
      %v3451 = vadd.f32 %v3414, %v3438
      %v3452 = vadd.f32 %v3415, %v3438
      %v3453 = vadd.f32 %v3416, %v3438
      %v3454 = vadd.f32 %v3417, %v3438
      %v3455 = vadd.f32 %v3418, %v3438
      %v3456 = vadd.f32 %v3419, %v3438
      %v3457 = vadd.f32 %v3420, %v3438
      %v3458 = vadd.f32 %v3421, %v3438
      %v3459 = vadd.f32 %v3422, %v3438
      %v3460 = vadd.f32 %v3423, %v3438
      %v3461 = vadd.f32 %v3424, %v3438
      %v3462 = vadd.f32 %v3425, %v3438
      %v3463 = vadd.f32 %v3426, %v3438
      %v3464 = vadd.f32 %v3427, %v3438
      %v3465 = vadd.f32 %v3428, %v3438
      %v3466 = vadd.f32 %v3429, %v3438
      %v3467 = vadd.f32 %v3430, %v3438
      %v3468 = vadd.f32 %v3431, %v3438
      %v3469 = vadd.f32 %v3432, %v3438
      %v3470 = vadd.f32 %v3433, %v3438
      %v3471 = vadd.f32 %v3434, %v3438
      %v3472 = vmax.f32 %v3440, 0.0
      %v3473 = vmax.f32 %v3441, 0.0
      %v3474 = vmax.f32 %v3442, 0.0
      %v3475 = vmax.f32 %v3443, 0.0
      %v3476 = vmax.f32 %v3444, 0.0
      %v3477 = vmax.f32 %v3445, 0.0
      %v3478 = vmax.f32 %v3446, 0.0
      %v3479 = vmax.f32 %v3447, 0.0
      %v3480 = vmax.f32 %v3448, 0.0
      %v3481 = vmax.f32 %v3449, 0.0
      %v3482 = vmax.f32 %v3450, 0.0
      %v3483 = vmax.f32 %v3451, 0.0
      %v3484 = vmax.f32 %v3452, 0.0
      %v3485 = vmax.f32 %v3453, 0.0
      %v3486 = vmax.f32 %v3454, 0.0
      %v3487 = vmax.f32 %v3455, 0.0
      %v3488 = vmax.f32 %v3456, 0.0
      %v3489 = vmax.f32 %v3457, 0.0
      %v3490 = vmax.f32 %v3458, 0.0
      %v3491 = vmax.f32 %v3459, 0.0
      %v3492 = vmax.f32 %v3460, 0.0
      %v3493 = vmax.f32 %v3461, 0.0
      %v3494 = vmax.f32 %v3462, 0.0
      %v3495 = vmax.f32 %v3463, 0.0
      %v3496 = vmax.f32 %v3464, 0.0
      %v3497 = vmax.f32 %v3465, 0.0
      %v3498 = vmax.f32 %v3466, 0.0
      %v3499 = vmax.f32 %v3467, 0.0
      %v3500 = vmax.f32 %v3468, 0.0
      %v3501 = vmax.f32 %v3469, 0.0
      %v3502 = vmax.f32 %v3470, 0.0
      %v3503 = vmax.f32 %v3471, 0.0
      %v3536 = vcombine.low %v3472, %v3473
      %v3537 = vcombine.low %v3474, %v3475
      %v3538 = vcombine.low %v3476, %v3477
      %v3539 = vcombine.low %v3478, %v3479
      %v3540 = vcombine.low %v3480, %v3481
      %v3541 = vcombine.low %v3482, %v3483
      %v3542 = vcombine.low %v3484, %v3485
      %v3543 = vcombine.low %v3486, %v3487
      %v3544 = vcombine.low %v3488, %v3489
      %v3545 = vcombine.low %v3490, %v3491
      %v3546 = vcombine.low %v3492, %v3493
      %v3547 = vcombine.low %v3494, %v3495
      %v3548 = vcombine.low %v3496, %v3497
      %v3549 = vcombine.low %v3498, %v3499
      %v3550 = vcombine.low %v3500, %v3501
      %v3551 = vcombine.low %v3502, %v3503
      %3568 = vst [vmem:[%s306] sm:$0xff] %v3536
      %3569 = vst [vmem:[%s306 + $0x8] sm:$0xff] %v3537
      %3570 = vst [vmem:[%s306 + $0x10] sm:$0xff] %v3538
      %3571 = vst [vmem:[%s306 + $0x18] sm:$0xff] %v3539
      %3572 = vst [vmem:[%s306 + $0x20] sm:$0xff] %v3540
      %3573 = vst [vmem:[%s306 + $0x28] sm:$0xff] %v3541
      %3574 = vst [vmem:[%s306 + $0x30] sm:$0xff] %v3542
      %3575 = vst [vmem:[%s306 + $0x38] sm:$0xff] %v3543
      %3576 = vst [vmem:[%s306 + $0x40] sm:$0xff] %v3544
      %3577 = vst [vmem:[%s306 + $0x48] sm:$0xff] %v3545
      %3578 = vst [vmem:[%s306 + $0x50] sm:$0xff] %v3546
      %3579 = vst [vmem:[%s306 + $0x58] sm:$0xff] %v3547
      %3580 = vst [vmem:[%s306 + $0x60] sm:$0xff] %v3548
      %3581 = vst [vmem:[%s306 + $0x68] sm:$0xff] %v3549
      %3582 = vst [vmem:[%s306 + $0x70] sm:$0xff] %v3550
      %3583 = vst [vmem:[%s306 + $0x78] sm:$0xff] %v3551
      %vm3584 = vcmask 1047556
      %v3585 = vsel %vm3584, %v3166, 0.0
      %v3586 = vsel %vm3584, %v3167, 0.0
      %v3587 = vadd.f32 %v3585, %v3586
      %v3588 = vsel %vm3584, %v3168, 0.0
      %v3589 = vadd.f32 %v3587, %v3588
      %v3590 = vsel %vm3584, %v3169, 0.0
      %v3591 = vadd.f32 %v3589, %v3590
      %v3592 = vsel %vm3584, %v3170, 0.0
      %v3593 = vadd.f32 %v3591, %v3592
      %v3594 = vsel %vm3584, %v3171, 0.0
      %v3595 = vadd.f32 %v3593, %v3594
      %v3596 = vsel %vm3584, %v3172, 0.0
      %v3597 = vadd.f32 %v3595, %v3596
      %v3598 = vsel %vm3584, %v3173, 0.0
      %v3599 = vadd.f32 %v3597, %v3598
      %v3600 = vsel %vm3584, %v3174, 0.0
      %v3601 = vadd.f32 %v3599, %v3600
      %v3602 = vsel %vm3584, %v3175, 0.0
      %v3603 = vadd.f32 %v3601, %v3602
      %v3604 = vsel %vm3584, %v3176, 0.0
      %v3605 = vadd.f32 %v3603, %v3604
      %v3606 = vsel %vm3584, %v3177, 0.0
      %v3607 = vadd.f32 %v3605, %v3606
      %v3608 = vsel %vm3584, %v3178, 0.0
      %v3609 = vadd.f32 %v3607, %v3608
      %v3610 = vsel %vm3584, %v3179, 0.0
      %v3611 = vadd.f32 %v3609, %v3610
      %v3612 = vsel %vm3584, %v3180, 0.0
      %v3613 = vadd.f32 %v3611, %v3612
      %v3614 = vsel %vm3584, %v3181, 0.0
      %v3615 = vadd.f32 %v3613, %v3614
      %v3616 = vsel %vm3584, %v3182, 0.0
      %v3617 = vadd.f32 %v3615, %v3616
      %v3618 = vsel %vm3584, %v3183, 0.0
      %v3619 = vadd.f32 %v3617, %v3618
      %v3620 = vsel %vm3584, %v3184, 0.0
      %v3621 = vadd.f32 %v3619, %v3620
      %v3622 = vsel %vm3584, %v3185, 0.0
      %v3623 = vadd.f32 %v3621, %v3622
      %v3624 = vsel %vm3584, %v3186, 0.0
      %v3625 = vadd.f32 %v3623, %v3624
      %v3626 = vsel %vm3584, %v3187, 0.0
      %v3627 = vadd.f32 %v3625, %v3626
      %v3628 = vsel %vm3584, %v3188, 0.0
      %v3629 = vadd.f32 %v3627, %v3628
      %v3630 = vsel %vm3584, %v3189, 0.0
      %v3631 = vadd.f32 %v3629, %v3630
      %v3632 = vsel %vm3584, %v3190, 0.0
      %v3633 = vadd.f32 %v3631, %v3632
      %v3634 = vsel %vm3584, %v3191, 0.0
      %v3635 = vadd.f32 %v3633, %v3634
      %v3636 = vsel %vm3584, %v3192, 0.0
      %v3637 = vadd.f32 %v3635, %v3636
      %v3638 = vsel %vm3584, %v3193, 0.0
      %v3639 = vadd.f32 %v3637, %v3638
      %v3640 = vsel %vm3584, %v3194, 0.0
      %v3641 = vadd.f32 %v3639, %v3640
      %v3642 = vsel %vm3584, %v3195, 0.0
      %v3643 = vadd.f32 %v3641, %v3642
      %v3644 = vsel %vm3584, %v3196, 0.0
      %v3645 = vadd.f32 %v3643, %v3644
      %v3646 = vsel %vm3584, %v3197, 0.0
      %v3647 = vadd.f32 %v3645, %v3646
      %3648 = vadd.xlane.f32.xlu0 %v3647
      %v3649 = vpop.xlane.xlu0 %3648
      %v3650 = vmul.f32 %v3649, 0.00024414063
      %v3651 = vsub.f32 %v3166, %v3650
      %v3652 = vsub.f32 %v3167, %v3650
      %v3653 = vsub.f32 %v3168, %v3650
      %v3654 = vsub.f32 %v3169, %v3650
      %v3655 = vsub.f32 %v3170, %v3650
      %v3656 = vsub.f32 %v3171, %v3650
      %v3657 = vsub.f32 %v3172, %v3650
      %v3658 = vsub.f32 %v3173, %v3650
      %v3659 = vsub.f32 %v3174, %v3650
      %v3660 = vsub.f32 %v3175, %v3650
      %v3661 = vsub.f32 %v3176, %v3650
      %v3662 = vsub.f32 %v3177, %v3650
      %v3663 = vsub.f32 %v3178, %v3650
      %v3664 = vsub.f32 %v3179, %v3650
      %v3665 = vsub.f32 %v3180, %v3650
      %v3666 = vsub.f32 %v3181, %v3650
      %v3667 = vsub.f32 %v3182, %v3650
      %v3668 = vsub.f32 %v3183, %v3650
      %v3669 = vsub.f32 %v3184, %v3650
      %v3670 = vsub.f32 %v3185, %v3650
      %v3671 = vsub.f32 %v3186, %v3650
      %v3672 = vsub.f32 %v3187, %v3650
      %v3673 = vsub.f32 %v3188, %v3650
      %v3674 = vsub.f32 %v3189, %v3650
      %v3675 = vsub.f32 %v3190, %v3650
      %v3676 = vsub.f32 %v3191, %v3650
      %v3677 = vsub.f32 %v3192, %v3650
      %v3678 = vsub.f32 %v3193, %v3650
      %v3679 = vsub.f32 %v3194, %v3650
      %v3680 = vsub.f32 %v3195, %v3650
      %v3681 = vsub.f32 %v3196, %v3650
      %v3682 = vsub.f32 %v3197, %v3650
      %v3683 = vmul.f32 %v3651, %v3651
      %v3684 = vmul.f32 %v3652, %v3652
      %v3685 = vmul.f32 %v3653, %v3653
      %v3686 = vmul.f32 %v3654, %v3654
      %v3687 = vmul.f32 %v3655, %v3655
      %v3688 = vmul.f32 %v3656, %v3656
      %v3689 = vmul.f32 %v3657, %v3657
      %v3690 = vmul.f32 %v3658, %v3658
      %v3691 = vmul.f32 %v3659, %v3659
      %v3692 = vmul.f32 %v3660, %v3660
      %v3693 = vmul.f32 %v3661, %v3661
      %v3694 = vmul.f32 %v3662, %v3662
      %v3695 = vmul.f32 %v3663, %v3663
      %v3696 = vmul.f32 %v3664, %v3664
      %v3697 = vmul.f32 %v3665, %v3665
      %v3698 = vmul.f32 %v3666, %v3666
      %v3699 = vmul.f32 %v3667, %v3667
      %v3700 = vmul.f32 %v3668, %v3668
      %v3701 = vmul.f32 %v3669, %v3669
      %v3702 = vmul.f32 %v3670, %v3670
      %v3703 = vmul.f32 %v3671, %v3671
      %v3704 = vmul.f32 %v3672, %v3672
      %v3705 = vmul.f32 %v3673, %v3673
      %v3706 = vmul.f32 %v3674, %v3674
      %v3707 = vmul.f32 %v3675, %v3675
      %v3708 = vmul.f32 %v3676, %v3676
      %v3709 = vmul.f32 %v3677, %v3677
      %v3710 = vmul.f32 %v3678, %v3678
      %v3711 = vmul.f32 %v3679, %v3679
      %v3712 = vmul.f32 %v3680, %v3680
      %v3713 = vmul.f32 %v3681, %v3681
      %v3714 = vmul.f32 %v3682, %v3682
      %v3715 = vsel %vm3584, %v3683, 0.0
      %v3716 = vsel %vm3584, %v3684, 0.0
      %v3717 = vadd.f32 %v3715, %v3716
      %v3718 = vsel %vm3584, %v3685, 0.0
      %v3719 = vadd.f32 %v3717, %v3718
      %v3720 = vsel %vm3584, %v3686, 0.0
      %v3721 = vadd.f32 %v3719, %v3720
      %v3722 = vsel %vm3584, %v3687, 0.0
      %v3723 = vadd.f32 %v3721, %v3722
      %v3724 = vsel %vm3584, %v3688, 0.0
      %v3725 = vadd.f32 %v3723, %v3724
      %v3726 = vsel %vm3584, %v3689, 0.0
      %v3727 = vadd.f32 %v3725, %v3726
      %v3728 = vsel %vm3584, %v3690, 0.0
      %v3729 = vadd.f32 %v3727, %v3728
      %v3730 = vsel %vm3584, %v3691, 0.0
      %v3731 = vadd.f32 %v3729, %v3730
      %v3732 = vsel %vm3584, %v3692, 0.0
      %v3733 = vadd.f32 %v3731, %v3732
      %v3734 = vsel %vm3584, %v3693, 0.0
      %v3735 = vadd.f32 %v3733, %v3734
      %v3736 = vsel %vm3584, %v3694, 0.0
      %v3737 = vadd.f32 %v3735, %v3736
      %v3738 = vsel %vm3584, %v3695, 0.0
      %v3739 = vadd.f32 %v3737, %v3738
      %v3740 = vsel %vm3584, %v3696, 0.0
      %v3741 = vadd.f32 %v3739, %v3740
      %v3742 = vsel %vm3584, %v3697, 0.0
      %v3743 = vadd.f32 %v3741, %v3742
      %v3744 = vsel %vm3584, %v3698, 0.0
      %v3745 = vadd.f32 %v3743, %v3744
      %v3746 = vsel %vm3584, %v3699, 0.0
      %v3747 = vadd.f32 %v3745, %v3746
      %v3748 = vsel %vm3584, %v3700, 0.0
      %v3749 = vadd.f32 %v3747, %v3748
      %v3750 = vsel %vm3584, %v3701, 0.0
      %v3751 = vadd.f32 %v3749, %v3750
      %v3752 = vsel %vm3584, %v3702, 0.0
      %v3753 = vadd.f32 %v3751, %v3752
      %v3754 = vsel %vm3584, %v3703, 0.0
      %v3755 = vadd.f32 %v3753, %v3754
      %v3756 = vsel %vm3584, %v3704, 0.0
      %v3757 = vadd.f32 %v3755, %v3756
      %v3758 = vsel %vm3584, %v3705, 0.0
      %v3759 = vadd.f32 %v3757, %v3758
      %v3760 = vsel %vm3584, %v3706, 0.0
      %v3761 = vadd.f32 %v3759, %v3760
      %v3762 = vsel %vm3584, %v3707, 0.0
      %v3763 = vadd.f32 %v3761, %v3762
      %v3764 = vsel %vm3584, %v3708, 0.0
      %v3765 = vadd.f32 %v3763, %v3764
      %v3766 = vsel %vm3584, %v3709, 0.0
      %v3767 = vadd.f32 %v3765, %v3766
      %v3768 = vsel %vm3584, %v3710, 0.0
      %v3769 = vadd.f32 %v3767, %v3768
      %v3770 = vsel %vm3584, %v3711, 0.0
      %v3771 = vadd.f32 %v3769, %v3770
      %v3772 = vsel %vm3584, %v3712, 0.0
      %v3773 = vadd.f32 %v3771, %v3772
      %v3774 = vsel %vm3584, %v3713, 0.0
      %v3775 = vadd.f32 %v3773, %v3774
      %v3776 = vsel %vm3584, %v3714, 0.0
      %v3777 = vadd.f32 %v3775, %v3776
      %3778 = vadd.xlane.f32.xlu0 %v3777
      %v3779 = vpop.xlane.xlu0 %3778
      %v3780 = vmul.f32 %v3779, 0.00024414063
      %v3781 = vadd.f32 %v3780, 1e-05
      %v3782 = vrsqrt.pop %v3781
      %v3783 = vmul.f32 %v346, %v3782
      %3785 = vset.pattern.permute.xlu0 0
      %3786 = vperm.xlu0 %3785, %v3783
      %v3787 = vpop.permute.xlu0 %3786
      %v3789 = vmul.f32 %v3651, %v3787
      %v3790 = vmul.f32 %v3652, %v3787
      %v3791 = vmul.f32 %v3653, %v3787
      %v3792 = vmul.f32 %v3654, %v3787
      %v3793 = vmul.f32 %v3655, %v3787
      %v3794 = vmul.f32 %v3656, %v3787
      %v3795 = vmul.f32 %v3657, %v3787
      %v3796 = vmul.f32 %v3658, %v3787
      %v3797 = vmul.f32 %v3659, %v3787
      %v3798 = vmul.f32 %v3660, %v3787
      %v3799 = vmul.f32 %v3661, %v3787
      %v3800 = vmul.f32 %v3662, %v3787
      %v3801 = vmul.f32 %v3663, %v3787
      %v3802 = vmul.f32 %v3664, %v3787
      %v3803 = vmul.f32 %v3665, %v3787
      %v3804 = vmul.f32 %v3666, %v3787
      %v3805 = vmul.f32 %v3667, %v3787
      %v3806 = vmul.f32 %v3668, %v3787
      %v3807 = vmul.f32 %v3669, %v3787
      %v3808 = vmul.f32 %v3670, %v3787
      %v3809 = vmul.f32 %v3671, %v3787
      %v3810 = vmul.f32 %v3672, %v3787
      %v3811 = vmul.f32 %v3673, %v3787
      %v3812 = vmul.f32 %v3674, %v3787
      %v3813 = vmul.f32 %v3675, %v3787
      %v3814 = vmul.f32 %v3676, %v3787
      %v3815 = vmul.f32 %v3677, %v3787
      %v3816 = vmul.f32 %v3678, %v3787
      %v3817 = vmul.f32 %v3679, %v3787
      %v3818 = vmul.f32 %v3680, %v3787
      %v3819 = vmul.f32 %v3681, %v3787
      %v3820 = vmul.f32 %v3682, %v3787
      %v3821 = vadd.f32 %v3789, %v3438
      %v3822 = vadd.f32 %v3790, %v3438
      %v3823 = vadd.f32 %v3791, %v3438
      %v3824 = vadd.f32 %v3792, %v3438
      %v3825 = vadd.f32 %v3793, %v3438
      %v3826 = vadd.f32 %v3794, %v3438
      %v3827 = vadd.f32 %v3795, %v3438
      %v3828 = vadd.f32 %v3796, %v3438
      %v3829 = vadd.f32 %v3797, %v3438
      %v3830 = vadd.f32 %v3798, %v3438
      %v3831 = vadd.f32 %v3799, %v3438
      %v3832 = vadd.f32 %v3800, %v3438
      %v3833 = vadd.f32 %v3801, %v3438
      %v3834 = vadd.f32 %v3802, %v3438
      %v3835 = vadd.f32 %v3803, %v3438
      %v3836 = vadd.f32 %v3804, %v3438
      %v3837 = vadd.f32 %v3805, %v3438
      %v3838 = vadd.f32 %v3806, %v3438
      %v3839 = vadd.f32 %v3807, %v3438
      %v3840 = vadd.f32 %v3808, %v3438
      %v3841 = vadd.f32 %v3809, %v3438
      %v3842 = vadd.f32 %v3810, %v3438
      %v3843 = vadd.f32 %v3811, %v3438
      %v3844 = vadd.f32 %v3812, %v3438
      %v3845 = vadd.f32 %v3813, %v3438
      %v3846 = vadd.f32 %v3814, %v3438
      %v3847 = vadd.f32 %v3815, %v3438
      %v3848 = vadd.f32 %v3816, %v3438
      %v3849 = vadd.f32 %v3817, %v3438
      %v3850 = vadd.f32 %v3818, %v3438
      %v3851 = vadd.f32 %v3819, %v3438
      %v3852 = vadd.f32 %v3820, %v3438
      %v3853 = vmax.f32 %v3821, 0.0
      %v3854 = vmax.f32 %v3822, 0.0
      %v3855 = vmax.f32 %v3823, 0.0
      %v3856 = vmax.f32 %v3824, 0.0
      %v3857 = vmax.f32 %v3825, 0.0
      %v3858 = vmax.f32 %v3826, 0.0
      %v3859 = vmax.f32 %v3827, 0.0
      %v3860 = vmax.f32 %v3828, 0.0
      %v3861 = vmax.f32 %v3829, 0.0
      %v3862 = vmax.f32 %v3830, 0.0
      %v3863 = vmax.f32 %v3831, 0.0
      %v3864 = vmax.f32 %v3832, 0.0
      %v3865 = vmax.f32 %v3833, 0.0
      %v3866 = vmax.f32 %v3834, 0.0
      %v3867 = vmax.f32 %v3835, 0.0
      %v3868 = vmax.f32 %v3836, 0.0
      %v3869 = vmax.f32 %v3837, 0.0
      %v3870 = vmax.f32 %v3838, 0.0
      %v3871 = vmax.f32 %v3839, 0.0
      %v3872 = vmax.f32 %v3840, 0.0
      %v3873 = vmax.f32 %v3841, 0.0
      %v3874 = vmax.f32 %v3842, 0.0
      %v3875 = vmax.f32 %v3843, 0.0
      %v3876 = vmax.f32 %v3844, 0.0
      %v3877 = vmax.f32 %v3845, 0.0
      %v3878 = vmax.f32 %v3846, 0.0
      %v3879 = vmax.f32 %v3847, 0.0
      %v3880 = vmax.f32 %v3848, 0.0
      %v3881 = vmax.f32 %v3849, 0.0
      %v3882 = vmax.f32 %v3850, 0.0
      %v3883 = vmax.f32 %v3851, 0.0
      %v3884 = vmax.f32 %v3852, 0.0
      %v3917 = vcombine.high %v3853, %v3854
      %v3918 = vcombine.high %v3855, %v3856
      %v3919 = vcombine.high %v3857, %v3858
      %v3920 = vcombine.high %v3859, %v3860
      %v3921 = vcombine.high %v3861, %v3862
      %v3922 = vcombine.high %v3863, %v3864
      %v3923 = vcombine.high %v3865, %v3866
      %v3924 = vcombine.high %v3867, %v3868
      %v3925 = vcombine.high %v3869, %v3870
      %v3926 = vcombine.high %v3871, %v3872
      %v3927 = vcombine.high %v3873, %v3874
      %v3928 = vcombine.high %v3875, %v3876
      %v3929 = vcombine.high %v3877, %v3878
      %v3930 = vcombine.high %v3879, %v3880
      %v3931 = vcombine.high %v3881, %v3882
      %v3932 = vcombine.high %v3883, %v3884
      %3949 = vst [vmem:[%s311] sm:$0xff] %v3917
      %3950 = vst [vmem:[%s311 + $0x8] sm:$0xff] %v3918
      %3951 = vst [vmem:[%s311 + $0x10] sm:$0xff] %v3919
      %3952 = vst [vmem:[%s311 + $0x18] sm:$0xff] %v3920
      %3953 = vst [vmem:[%s311 + $0x20] sm:$0xff] %v3921
      %3954 = vst [vmem:[%s311 + $0x28] sm:$0xff] %v3922
      %3955 = vst [vmem:[%s311 + $0x30] sm:$0xff] %v3923
      %3956 = vst [vmem:[%s311 + $0x38] sm:$0xff] %v3924
      %3957 = vst [vmem:[%s311 + $0x40] sm:$0xff] %v3925
      %3958 = vst [vmem:[%s311 + $0x48] sm:$0xff] %v3926
      %3959 = vst [vmem:[%s311 + $0x50] sm:$0xff] %v3927
      %3960 = vst [vmem:[%s311 + $0x58] sm:$0xff] %v3928
      %3961 = vst [vmem:[%s311 + $0x60] sm:$0xff] %v3929
      %3962 = vst [vmem:[%s311 + $0x68] sm:$0xff] %v3930
      %3963 = vst [vmem:[%s311 + $0x70] sm:$0xff] %v3931
      %3964 = vst [vmem:[%s311 + $0x78] sm:$0xff] %v3932
      %p3965 = scmp.lt.s32.totalorder %s19, 1
      %s3966 = scalar_select %p3965, %s19, 1
      %s3967 = smul.addr %s3966, 32
      %s3968 = smul.addr %s3967, 4
      %s3969 = scalar_lea.vmem %s6, %s3968
      %p3970 = scmp.lt.s32.totalorder %s19, 1
      %s3971 = scalar_select %p3970, %s19, 1
      %s3972 = smul.addr %s3971, 32
      %s3973 = smul.addr %s3972, 4
      %s3974 = scalar_lea.vmem %s7, %s3973
      // Predicated region
      $region45: #{resblock_ffc3d_forward.2} parent=43 // pred_check
        %p3975 = pneg %p173
      $region46: #{resblock_ffc3d_forward.2} parent=43 // pred_check_branch
        %3977 = sbr.rel (%p3975) target = $region48
      $region47: #{resblock_ffc3d_forward.2} parent=43 // pred_region
        _
      $region48: #{resblock_ffc3d_forward.2} parent=43 // pred_fallthru
        _
      // Predicated region
      $region49: #{resblock_ffc3d_forward.2} parent=43 // pred_check
        %p3978 = pneg %p199
      $region50: #{resblock_ffc3d_forward.2} parent=43 // pred_check_branch
        %3980 = sbr.rel (%p3978) target = $region52
      $region51: #{resblock_ffc3d_forward.2} parent=43 // pred_region
        _
      $region52: #{resblock_ffc3d_forward.2} parent=43 // pred_fallthru
        _
    $region44: #{resblock_ffc3d_forward.2} parent=5 // pred_fallthru
      _
    %p3981 = scmp.le.s32.totalorder 2, %s14
    // Predicated region
    $region53: #{resblock_ffc3d_forward.2} parent=5 // pred_check
      %p3982 = pneg %p3981
    $region54: #{resblock_ffc3d_forward.2} parent=5 // pred_check_branch
      %3984 = sbr.rel (%p3982) target = $region56
    $region55: #{resblock_ffc3d_forward.2} parent=5 // pred_region
      %s3985 = ssub.s32 %s14, 2
      // Predicated region
      $region57: #{resblock_ffc3d_forward.2} parent=55 // pred_check
        %p3986 = pneg %p179
      $region58: #{resblock_ffc3d_forward.2} parent=55 // pred_check_branch
        %3988 = sbr.rel (%p3986) target = $region60
      $region59: #{resblock_ffc3d_forward.2} parent=55 // pred_region
        %p3989 = scmp.lt.s32.totalorder %s20, 1
        %s3990 = scalar_select %p3989, %s20, 1
        %s3991 = smul.addr %s3990, 32
        %s3992 = smul.addr %s3991, 4
        %s3993 = scalar_lea.vmem %s6, %s3992
      $region60: #{resblock_ffc3d_forward.2} parent=55 // pred_fallthru
        _
      // Predicated region
      $region61: #{resblock_ffc3d_forward.2} parent=55 // pred_check
        %p3994 = pneg %p205
      $region62: #{resblock_ffc3d_forward.2} parent=55 // pred_check_branch
        %3996 = sbr.rel (%p3994) target = $region64
      $region63: #{resblock_ffc3d_forward.2} parent=55 // pred_region
        %p3997 = scmp.lt.s32.totalorder %s20, 1
        %s3998 = scalar_select %p3997, %s20, 1
        %s3999 = smul.addr %s3998, 32
        %s4000 = smul.addr %s3999, 4
        %s4001 = scalar_lea.vmem %s7, %s4000
      $region64: #{resblock_ffc3d_forward.2} parent=55 // pred_fallthru
        _
    $region56: #{resblock_ffc3d_forward.2} parent=5 // pred_fallthru
      _
  $region6: #{resblock_ffc3d_forward.2} parent=0 // loop_footer
    %s18 = sadd.s32 1, %s14
  $region7: #{resblock_ffc3d_forward.2} parent=0 // loop_footer_branch
    %13 = sbr.rel target = $region3
  $region8: #{resblock_ffc3d_forward.2} parent=0 // loop_exit
    _

// kernel: custom-call.2
$region0: #{custom-call.2}
  %s0 = inlined_call_operand.vmem [shape: f32[2,4,16,16,16], index: 0, kind: input, shape index: {}]
  %s1 = inlined_call_operand.vmem [shape: f32[2,4,16,16,16], index: 1, kind: input, shape index: {}]
  %s2 = inlined_call_operand.hbm [shape: c64[2,4,16,16,16], index: 2, kind: output, shape index: {}]
  %s3 = scalar_lea.hbm %s2, 32768
  $region1: #{custom-call.2} parent=0
    #allocation0 [shape = 's32[1]{0}', space=sflag, size = 0x4, scoped, tag = 'scoped memory for custom-call.2']
    %4 = vsyncpa [#allocation0], 0
    %s5 = sshll.u32 %s0, 4
    %s6 = int_to_ptr.vmem [resolvable:$true] %s5
    %8 = dma.vmem_to_hbm [thread:$0]  %s6, 32768, %s2, [#allocation0]
    %9 = dma.done [#allocation0], 32768
    %10 = vsyncpa [#allocation0], 1
  $region2: #{custom-call.2} parent=0
    #allocation1 [shape = 's32[1]{0}', space=sflag, size = 0x4, scoped, tag = 'scoped memory for custom-call.2']
    %11 = vsyncpa [#allocation1], 0
    %s12 = sshll.u32 %s1, 4
    %s13 = int_to_ptr.vmem [resolvable:$true] %s12
    %15 = dma.vmem_to_hbm [thread:$0]  %s13, 32768, %s3, [#allocation1]
    %16 = dma.done [#allocation1], 32768
    %17 = vsyncpa [#allocation1], 1

</llo_original>
